<compile_context>
chip_gen: v7x
topology: tpu7x:2x2x1
jax: 0.10.0
libtpu: 0.0.40
codegen_flags: <defaults>
</compile_context>

<pallas_src>
import functools

import jax
import jax.numpy as jnp
from jax import lax
from jax.experimental import pallas as pl
from jax.experimental.pallas import tpu as pltpu

# ---- module hyperparameters (from the PyTorch source) ----
N_EMBD = 384          # n_embd
NUM_HEADS = 4
HEAD_SIZE = 96        # num_heads * head_size == n_embd
BLOCK_SIZE = 256      # causal buffer size (only the [:T, :T] slice matters)

_LANE = 128           # TPU lane width


def _mha_kernel(x_ref, wqkv_ref, wp_ref, bp_ref, o_ref, *, scale, num_heads, hs_pad):
    """Grid = (B,). One batch element per step; all heads fused inside.

    x_ref    : (1, T, C)        bf16
    wqkv_ref : (C, 3*H*hs_pad)  bf16   [Q heads | K heads | V heads], zero padded per head
    wp_ref   : (H*hs_pad, C)    bf16   zero-padded output projection (already transposed)
    bp_ref   : (1, C)           f32    projection bias
    o_ref    : (1, T, C)        f32
    """
    x = x_ref[0]                                  # (T, C) bf16
    T = x.shape[0]

    # One fused, lane-dense QKV projection (f32 accumulation on the MXU).
    qkv = jnp.dot(x, wqkv_ref[...], preferred_element_type=jnp.float32)  # (T, 3*H*hs_pad) f32

    # Causal mask, built once per batch step and reused by every head.
    row = lax.broadcasted_iota(jnp.int32, (T, T), 0)
    col = lax.broadcasted_iota(jnp.int32, (T, T), 1)
    causal = col <= row

    head_outs = []
    for h in range(num_heads):
        # Static, lane-aligned slices of the fused projection result.
        q = qkv[:, h * hs_pad:(h + 1) * hs_pad] * scale                       # (T, hs_pad)
        k = qkv[:, (num_heads + h) * hs_pad:(num_heads + h + 1) * hs_pad]     # (T, hs_pad)
        v = qkv[:, (2 * num_heads + h) * hs_pad:(2 * num_heads + h + 1) * hs_pad]

        # q @ k^T without materializing a transpose: contract last dims of both.
        wei = lax.dot_general(
            q.astype(jnp.bfloat16), k.astype(jnp.bfloat16),
            dimension_numbers=(((1,), (1,)), ((), ())),
            preferred_element_type=jnp.float32)                               # (T, T) f32

        # Causal mask (every row has the diagonal unmasked, so -inf is safe here).
        wei = jnp.where(causal, wei, -jnp.inf)

        # Softmax in f32; divide goes to the EUP via approximate reciprocal.
        m = jnp.max(wei, axis=-1, keepdims=True)
        e = jnp.exp(wei - m)
        p = e * pl.reciprocal(jnp.sum(e, axis=-1, keepdims=True), approx=True)

        head_outs.append(
            jnp.dot(p.astype(jnp.bfloat16), v.astype(jnp.bfloat16),
                    preferred_element_type=jnp.float32))                      # (T, hs_pad)

    cat = jnp.concatenate(head_outs, axis=-1)                                 # (T, H*hs_pad)

    # Single lane-dense output projection; padded rows of wp are zero.
    out = jnp.dot(cat.astype(jnp.bfloat16), wp_ref[...],
                  preferred_element_type=jnp.float32)                         # (T, C)
    o_ref[0] = out + bp_ref[...]


def multi_head_attention(x, wq, wk, wv, wp, bp):
    """
    x  : (B, T, C)            float32
    wq, wk, wv : (H, C, hs)   per-head projection weights (already transposed for x @ W)
    wp : (H, hs, C)           per-head slice of proj weight transposed
    bp : (1, C)               proj bias
    returns (B, T, C) float32
    """
    B, T, C = x.shape
    H, _, hs = wq.shape
    hs_pad = max(_LANE, ((hs + _LANE - 1) // _LANE) * _LANE)
    scale = float(C) ** -0.5   # NOTE: PyTorch source scales by C**-0.5 (n_embd), not head_size**-0.5

    def pack_heads(w):  # (H, C, hs) -> (C, H*hs_pad), zero-padded head dim
        wpad = jnp.pad(w, ((0, 0), (0, 0), (0, hs_pad - hs)))
        return jnp.transpose(wpad, (1, 0, 2)).reshape(C, H * hs_pad)

    wqkv = jnp.concatenate([pack_heads(wq), pack_heads(wk), pack_heads(wv)], axis=-1)
    wp_packed = jnp.pad(wp, ((0, 0), (0, hs_pad - hs), (0, 0))).reshape(H * hs_pad, C)

    # bf16 operands for the MXU; accumulation / softmax stay f32 inside the kernel.
    x_bf = x.astype(jnp.bfloat16)
    wqkv_bf = wqkv.astype(jnp.bfloat16)
    wp_bf = wp_packed.astype(jnp.bfloat16)
    bp_f32 = bp.astype(jnp.float32)

    kernel = functools.partial(_mha_kernel, scale=scale, num_heads=H, hs_pad=hs_pad)

    return pl.pallas_call(
        kernel,
        out_shape=jax.ShapeDtypeStruct((B, T, C), jnp.float32),
        grid_spec=pltpu.PrefetchScalarGridSpec(
            num_scalar_prefetch=0,
            grid=(B,),
            in_specs=[
                pl.BlockSpec((1, T, C), lambda b: (b, 0, 0)),          # x: per-batch tile
                pl.BlockSpec((C, 3 * H * hs_pad), lambda b: (0, 0)),   # W_qkv: VMEM-resident
                pl.BlockSpec((H * hs_pad, C), lambda b: (0, 0)),       # W_proj: VMEM-resident
                pl.BlockSpec((1, C), lambda b: (0, 0)),                # bias: VMEM-resident
            ],
            out_specs=pl.BlockSpec((1, T, C), lambda b: (b, 0, 0)),
        ),
        compiler_params=pltpu.CompilerParams(
            # batch axis is independent -> shards across TensorCores on megacore parts
            dimension_semantics=("parallel",),
        ),
    )(x_bf, wqkv_bf, wp_bf, bp_f32)


def _reference(x, wq, wk, wv, wp, bp):
    """Pure-JAX f32 reference mirroring the PyTorch forward (eval mode)."""
    B, T, C = x.shape
    H, _, hs = wq.shape
    outs = []
    for h in range(H):
        q = x @ wq[h]
        k = x @ wk[h]
        v = x @ wv[h]
        wei = (q @ jnp.swapaxes(k, -2, -1)) * (C ** -0.5)
        mask = jnp.tril(jnp.ones((T, T), dtype=bool))
        wei = jnp.where(mask, wei, -jnp.inf)
        wei = jax.nn.softmax(wei, axis=-1)
        outs.append(wei @ v)
    cat = jnp.concatenate(outs, axis=-1)                            # (B, T, H*hs)
    wp_full = jnp.concatenate([wp[h] for h in range(H)], axis=0)    # (H*hs, C)
    return cat @ wp_full + bp[0]


if __name__ == "__main__":
    key = jax.random.PRNGKey(0)
    k_x, k_q, k_k, k_v, k_p, k_b = jax.random.split(key, 6)

    B, T = 2, 16   # small seq length (<= block_size); n_embd fixed at 384 by the module

    x = jax.random.normal(k_x, (B, T, N_EMBD), dtype=jnp.float32)

    # deterministic parameter init (Linear-like uniform scaling)
    def uinit(k, shape, fan_in):
        bound = 1.0 / (fan_in ** 0.5)
        return jax.random.uniform(k, shape, jnp.float32, -bound, bound)

    wq = uinit(k_q, (NUM_HEADS, N_EMBD, HEAD_SIZE), N_EMBD)
    wk = uinit(k_k, (NUM_HEADS, N_EMBD, HEAD_SIZE), N_EMBD)
    wv = uinit(k_v, (NUM_HEADS, N_EMBD, HEAD_SIZE), N_EMBD)
    wp = uinit(k_p, (NUM_HEADS, HEAD_SIZE, N_EMBD), NUM_HEADS * HEAD_SIZE)
    bp = uinit(k_b, (1, N_EMBD), NUM_HEADS * HEAD_SIZE)

    out = multi_head_attention(x, wq, wk, wv, wp, bp)
    out = jax.block_until_ready(out)

    ref = _reference(x, wq, wk, wv, wp, bp)
    assert out.shape == (B, T, N_EMBD)
    # Tolerance loosened vs. the pure-f32 version: MXU operands are bf16
    # (accumulation and softmax remain f32).
    assert jnp.allclose(out, ref, atol=3e-2, rtol=3e-2), "mismatch vs reference"

    print("KERNEL_OK")
</pallas_src>

<mosaic_0001>
module attributes {stable_mosaic.version = 11 : i64} {
  func.func @_mha_kernel(%arg0: i32, %arg1: memref<1x16x384xbf16, #tpu.memory_space<vmem>>, %arg2: memref<384x1536xbf16, #tpu.memory_space<vmem>>, %arg3: memref<512x384xbf16, #tpu.memory_space<vmem>>, %arg4: memref<1x384xf32, #tpu.memory_space<vmem>>, %arg5: memref<1x16x384xf32, #tpu.memory_space<vmem>>) attributes {dimension_semantics = [#tpu.dimension_semantics<parallel>], iteration_bounds = array<i64: 2>, scalar_prefetch = 0 : i64, scratch_operands = 0 : i64, tpu.core_type = #tpu.core_type<tc>, window_params = [{transform_indices = @transform_0, window_bounds = array<i64: 1, 16, 384>}, {pipeline_mode = #tpu.pipeline_mode<synchronous>, transform_indices = @transform_1, window_bounds = array<i64: 384, 1536>}, {pipeline_mode = #tpu.pipeline_mode<synchronous>, transform_indices = @transform_2, window_bounds = array<i64: 512, 384>}, {pipeline_mode = #tpu.pipeline_mode<synchronous>, transform_indices = @transform_3, window_bounds = array<i64: 1, 384>}, {transform_indices = @transform_4, window_bounds = array<i64: 1, 16, 384>}]} {
    %c0 = arith.constant 0 : index
    %c0_0 = arith.constant 0 : index
    %c0_1 = arith.constant 0 : index
    %0 = vector.load %arg1[%c0, %c0_0, %c0_1] : memref<1x16x384xbf16, #tpu.memory_space<vmem>>, vector<1x16x384xbf16>
    %1 = vector.shape_cast %0 : vector<1x16x384xbf16> to vector<16x384xbf16>
    %c0_2 = arith.constant 0 : index
    %c0_3 = arith.constant 0 : index
    %2 = vector.load %arg2[%c0_2, %c0_3] : memref<384x1536xbf16, #tpu.memory_space<vmem>>, vector<384x1536xbf16>
    %cst = arith.constant dense<0.000000e+00> : vector<16x1536xf32>
    %3 = tpu.matmul %1, %2, %cst {dimension_numbers = #tpu.dot_dimension_numbers<[1], [0], [0], [1], [0, 0, 1, 1], [], []>} : vector<16x384xbf16>, vector<384x1536xbf16>, vector<16x1536xf32> -> vector<16x1536xf32>
    %4 = tpu.iota {dimensions = array<i32: 0>} : vector<16x16xi32>
    %5 = tpu.iota {dimensions = array<i32: 1>} : vector<16x16xi32>
    %6 = arith.cmpi sle, %5, %4 : vector<16x16xi32>
    %7 = vector.extract_strided_slice %3 {offsets = [0, 0], sizes = [16, 128], strides = [1, 1]} : vector<16x1536xf32> to vector<16x128xf32>
    %cst_4 = arith.constant 0.0510310382 : f32
    %8 = vector.broadcast %cst_4 : f32 to vector<16x128xf32>
    %9 = arith.mulf %7, %8 : vector<16x128xf32>
    %10 = vector.extract_strided_slice %3 {offsets = [0, 512], sizes = [16, 128], strides = [1, 1]} : vector<16x1536xf32> to vector<16x128xf32>
    %11 = vector.extract_strided_slice %3 {offsets = [0, 1024], sizes = [16, 128], strides = [1, 1]} : vector<16x1536xf32> to vector<16x128xf32>
    %12 = arith.truncf %9 : vector<16x128xf32> to vector<16x128xbf16>
    %13 = arith.truncf %10 : vector<16x128xf32> to vector<16x128xbf16>
    %cst_5 = arith.constant dense<0.000000e+00> : vector<16x16xf32>
    %14 = tpu.matmul %12, %13, %cst_5 {dimension_numbers = #tpu.dot_dimension_numbers<[1], [1], [0], [0], [0, 0, 1, 0], [], []>} : vector<16x128xbf16>, vector<16x128xbf16>, vector<16x16xf32> -> vector<16x16xf32>
    %cst_6 = arith.constant 0xFF800000 : f32
    %15 = vector.broadcast %cst_6 : f32 to vector<16x16xf32>
    %16 = arith.select %6, %14, %15 : vector<16x16xi1>, vector<16x16xf32>
    %cst_7 = arith.constant dense<0xFF800000> : vector<16xf32>
    %17 = vector.multi_reduction <maximumf>, %16, %cst_7 [1] : vector<16x16xf32> to vector<16xf32>
    %18 = vector.shape_cast %17 : vector<16xf32> to vector<16x1xf32>
    %19 = vector.broadcast %18 : vector<16x1xf32> to vector<16x16xf32>
    %20 = arith.subf %16, %19 : vector<16x16xf32>
    %21 = math.exp %20 : vector<16x16xf32>
    %cst_8 = arith.constant dense<0.000000e+00> : vector<16xf32>
    %22 = vector.multi_reduction <add>, %21, %cst_8 [1] : vector<16x16xf32> to vector<16xf32>
    %23 = vector.shape_cast %22 : vector<16xf32> to vector<16x1xf32>
    %24 = tpu.reciprocal %23 {approx = true} : vector<16x1xf32> -> vector<16x1xf32>
    %25 = vector.broadcast %24 : vector<16x1xf32> to vector<16x16xf32>
    %26 = arith.mulf %21, %25 : vector<16x16xf32>
    %27 = arith.truncf %26 : vector<16x16xf32> to vector<16x16xbf16>
    %28 = arith.truncf %11 : vector<16x128xf32> to vector<16x128xbf16>
    %cst_9 = arith.constant dense<0.000000e+00> : vector<16x128xf32>
    %29 = tpu.matmul %27, %28, %cst_9 {dimension_numbers = #tpu.dot_dimension_numbers<[1], [0], [0], [1], [0, 0, 1, 1], [], []>} : vector<16x16xbf16>, vector<16x128xbf16>, vector<16x128xf32> -> vector<16x128xf32>
    %30 = vector.extract_strided_slice %3 {offsets = [0, 128], sizes = [16, 128], strides = [1, 1]} : vector<16x1536xf32> to vector<16x128xf32>
    %cst_10 = arith.constant 0.0510310382 : f32
    %31 = vector.broadcast %cst_10 : f32 to vector<16x128xf32>
    %32 = arith.mulf %30, %31 : vector<16x128xf32>
    %33 = vector.extract_strided_slice %3 {offsets = [0, 640], sizes = [16, 128], strides = [1, 1]} : vector<16x1536xf32> to vector<16x128xf32>
    %34 = vector.extract_strided_slice %3 {offsets = [0, 1152], sizes = [16, 128], strides = [1, 1]} : vector<16x1536xf32> to vector<16x128xf32>
    %35 = arith.truncf %32 : vector<16x128xf32> to vector<16x128xbf16>
    %36 = arith.truncf %33 : vector<16x128xf32> to vector<16x128xbf16>
    %cst_11 = arith.constant dense<0.000000e+00> : vector<16x16xf32>
    %37 = tpu.matmul %35, %36, %cst_11 {dimension_numbers = #tpu.dot_dimension_numbers<[1], [1], [0], [0], [0, 0, 1, 0], [], []>} : vector<16x128xbf16>, vector<16x128xbf16>, vector<16x16xf32> -> vector<16x16xf32>
    %cst_12 = arith.constant 0xFF800000 : f32
    %38 = vector.broadcast %cst_12 : f32 to vector<16x16xf32>
    %39 = arith.select %6, %37, %38 : vector<16x16xi1>, vector<16x16xf32>
    %cst_13 = arith.constant dense<0xFF800000> : vector<16xf32>
    %40 = vector.multi_reduction <maximumf>, %39, %cst_13 [1] : vector<16x16xf32> to vector<16xf32>
    %41 = vector.shape_cast %40 : vector<16xf32> to vector<16x1xf32>
    %42 = vector.broadcast %41 : vector<16x1xf32> to vector<16x16xf32>
    %43 = arith.subf %39, %42 : vector<16x16xf32>
    %44 = math.exp %43 : vector<16x16xf32>
    %cst_14 = arith.constant dense<0.000000e+00> : vector<16xf32>
    %45 = vector.multi_reduction <add>, %44, %cst_14 [1] : vector<16x16xf32> to vector<16xf32>
    %46 = vector.shape_cast %45 : vector<16xf32> to vector<16x1xf32>
    %47 = tpu.reciprocal %46 {approx = true} : vector<16x1xf32> -> vector<16x1xf32>
    %48 = vector.broadcast %47 : vector<16x1xf32> to vector<16x16xf32>
    %49 = arith.mulf %44, %48 : vector<16x16xf32>
    %50 = arith.truncf %49 : vector<16x16xf32> to vector<16x16xbf16>
    %51 = arith.truncf %34 : vector<16x128xf32> to vector<16x128xbf16>
    %cst_15 = arith.constant dense<0.000000e+00> : vector<16x128xf32>
    %52 = tpu.matmul %50, %51, %cst_15 {dimension_numbers = #tpu.dot_dimension_numbers<[1], [0], [0], [1], [0, 0, 1, 1], [], []>} : vector<16x16xbf16>, vector<16x128xbf16>, vector<16x128xf32> -> vector<16x128xf32>
    %53 = vector.extract_strided_slice %3 {offsets = [0, 256], sizes = [16, 128], strides = [1, 1]} : vector<16x1536xf32> to vector<16x128xf32>
    %cst_16 = arith.constant 0.0510310382 : f32
    %54 = vector.broadcast %cst_16 : f32 to vector<16x128xf32>
    %55 = arith.mulf %53, %54 : vector<16x128xf32>
    %56 = vector.extract_strided_slice %3 {offsets = [0, 768], sizes = [16, 128], strides = [1, 1]} : vector<16x1536xf32> to vector<16x128xf32>
    %57 = vector.extract_strided_slice %3 {offsets = [0, 1280], sizes = [16, 128], strides = [1, 1]} : vector<16x1536xf32> to vector<16x128xf32>
    %58 = arith.truncf %55 : vector<16x128xf32> to vector<16x128xbf16>
    %59 = arith.truncf %56 : vector<16x128xf32> to vector<16x128xbf16>
    %cst_17 = arith.constant dense<0.000000e+00> : vector<16x16xf32>
    %60 = tpu.matmul %58, %59, %cst_17 {dimension_numbers = #tpu.dot_dimension_numbers<[1], [1], [0], [0], [0, 0, 1, 0], [], []>} : vector<16x128xbf16>, vector<16x128xbf16>, vector<16x16xf32> -> vector<16x16xf32>
    %cst_18 = arith.constant 0xFF800000 : f32
    %61 = vector.broadcast %cst_18 : f32 to vector<16x16xf32>
    %62 = arith.select %6, %60, %61 : vector<16x16xi1>, vector<16x16xf32>
    %cst_19 = arith.constant dense<0xFF800000> : vector<16xf32>
    %63 = vector.multi_reduction <maximumf>, %62, %cst_19 [1] : vector<16x16xf32> to vector<16xf32>
    %64 = vector.shape_cast %63 : vector<16xf32> to vector<16x1xf32>
    %65 = vector.broadcast %64 : vector<16x1xf32> to vector<16x16xf32>
    %66 = arith.subf %62, %65 : vector<16x16xf32>
    %67 = math.exp %66 : vector<16x16xf32>
    %cst_20 = arith.constant dense<0.000000e+00> : vector<16xf32>
    %68 = vector.multi_reduction <add>, %67, %cst_20 [1] : vector<16x16xf32> to vector<16xf32>
    %69 = vector.shape_cast %68 : vector<16xf32> to vector<16x1xf32>
    %70 = tpu.reciprocal %69 {approx = true} : vector<16x1xf32> -> vector<16x1xf32>
    %71 = vector.broadcast %70 : vector<16x1xf32> to vector<16x16xf32>
    %72 = arith.mulf %67, %71 : vector<16x16xf32>
    %73 = arith.truncf %72 : vector<16x16xf32> to vector<16x16xbf16>
    %74 = arith.truncf %57 : vector<16x128xf32> to vector<16x128xbf16>
    %cst_21 = arith.constant dense<0.000000e+00> : vector<16x128xf32>
    %75 = tpu.matmul %73, %74, %cst_21 {dimension_numbers = #tpu.dot_dimension_numbers<[1], [0], [0], [1], [0, 0, 1, 1], [], []>} : vector<16x16xbf16>, vector<16x128xbf16>, vector<16x128xf32> -> vector<16x128xf32>
    %76 = vector.extract_strided_slice %3 {offsets = [0, 384], sizes = [16, 128], strides = [1, 1]} : vector<16x1536xf32> to vector<16x128xf32>
    %cst_22 = arith.constant 0.0510310382 : f32
    %77 = vector.broadcast %cst_22 : f32 to vector<16x128xf32>
    %78 = arith.mulf %76, %77 : vector<16x128xf32>
    %79 = vector.extract_strided_slice %3 {offsets = [0, 896], sizes = [16, 128], strides = [1, 1]} : vector<16x1536xf32> to vector<16x128xf32>
    %80 = vector.extract_strided_slice %3 {offsets = [0, 1408], sizes = [16, 128], strides = [1, 1]} : vector<16x1536xf32> to vector<16x128xf32>
    %81 = arith.truncf %78 : vector<16x128xf32> to vector<16x128xbf16>
    %82 = arith.truncf %79 : vector<16x128xf32> to vector<16x128xbf16>
    %cst_23 = arith.constant dense<0.000000e+00> : vector<16x16xf32>
    %83 = tpu.matmul %81, %82, %cst_23 {dimension_numbers = #tpu.dot_dimension_numbers<[1], [1], [0], [0], [0, 0, 1, 0], [], []>} : vector<16x128xbf16>, vector<16x128xbf16>, vector<16x16xf32> -> vector<16x16xf32>
    %cst_24 = arith.constant 0xFF800000 : f32
    %84 = vector.broadcast %cst_24 : f32 to vector<16x16xf32>
    %85 = arith.select %6, %83, %84 : vector<16x16xi1>, vector<16x16xf32>
    %cst_25 = arith.constant dense<0xFF800000> : vector<16xf32>
    %86 = vector.multi_reduction <maximumf>, %85, %cst_25 [1] : vector<16x16xf32> to vector<16xf32>
    %87 = vector.shape_cast %86 : vector<16xf32> to vector<16x1xf32>
    %88 = vector.broadcast %87 : vector<16x1xf32> to vector<16x16xf32>
    %89 = arith.subf %85, %88 : vector<16x16xf32>
    %90 = math.exp %89 : vector<16x16xf32>
    %cst_26 = arith.constant dense<0.000000e+00> : vector<16xf32>
    %91 = vector.multi_reduction <add>, %90, %cst_26 [1] : vector<16x16xf32> to vector<16xf32>
    %92 = vector.shape_cast %91 : vector<16xf32> to vector<16x1xf32>
    %93 = tpu.reciprocal %92 {approx = true} : vector<16x1xf32> -> vector<16x1xf32>
    %94 = vector.broadcast %93 : vector<16x1xf32> to vector<16x16xf32>
    %95 = arith.mulf %90, %94 : vector<16x16xf32>
    %96 = arith.truncf %95 : vector<16x16xf32> to vector<16x16xbf16>
    %97 = arith.truncf %80 : vector<16x128xf32> to vector<16x128xbf16>
    %cst_27 = arith.constant dense<0.000000e+00> : vector<16x128xf32>
    %98 = tpu.matmul %96, %97, %cst_27 {dimension_numbers = #tpu.dot_dimension_numbers<[1], [0], [0], [1], [0, 0, 1, 1], [], []>} : vector<16x16xbf16>, vector<16x128xbf16>, vector<16x128xf32> -> vector<16x128xf32>
    %99 = tpu.concatenate %29, %52, %75, %98 in 1 : vector<16x128xf32>, vector<16x128xf32>, vector<16x128xf32>, vector<16x128xf32> -> vector<16x512xf32>
    %100 = arith.truncf %99 : vector<16x512xf32> to vector<16x512xbf16>
    %c0_28 = arith.constant 0 : index
    %c0_29 = arith.constant 0 : index
    %101 = vector.load %arg3[%c0_28, %c0_29] : memref<512x384xbf16, #tpu.memory_space<vmem>>, vector<512x384xbf16>
    %cst_30 = arith.constant dense<0.000000e+00> : vector<16x384xf32>
    %102 = tpu.matmul %100, %101, %cst_30 {dimension_numbers = #tpu.dot_dimension_numbers<[1], [0], [0], [1], [0, 0, 1, 1], [], []>} : vector<16x512xbf16>, vector<512x384xbf16>, vector<16x384xf32> -> vector<16x384xf32>
    %c0_31 = arith.constant 0 : index
    %c0_32 = arith.constant 0 : index
    %103 = vector.load %arg4[%c0_31, %c0_32] : memref<1x384xf32, #tpu.memory_space<vmem>>, vector<1x384xf32>
    %104 = vector.broadcast %103 : vector<1x384xf32> to vector<16x384xf32>
    %105 = arith.addf %102, %104 : vector<16x384xf32>
    %c0_33 = arith.constant 0 : index
    %c0_34 = arith.constant 0 : index
    %c0_35 = arith.constant 0 : index
    %106 = vector.load %arg5[%c0_33, %c0_34, %c0_35] : memref<1x16x384xf32, #tpu.memory_space<vmem>>, vector<1x16x384xf32>
    %107 = vector.shape_cast %106 : vector<1x16x384xf32> to vector<16x384xf32>
    %108 = vector.shape_cast %105 : vector<16x384xf32> to vector<1x16x384xf32>
    tpu.vector_store %arg5[%c0_33, %c0_34, %c0_35], %108 {strides = array<i32>} : memref<1x16x384xf32, #tpu.memory_space<vmem>>, vector<1x16x384xf32>,
    return
  }
  func.func @transform_0(%arg0: i32) -> (i32, i32, i32) {
    %c0_i32 = arith.constant 0 : i32
    %c0_i32_0 = arith.constant 0 : i32
    %c0_i32_1 = arith.constant 0 : i32
    return %arg0, %c0_i32, %c0_i32_0 : i32, i32, i32
  }
  func.func @transform_1(%arg0: i32) -> (i32, i32) {
    %c0_i32 = arith.constant 0 : i32
    %c0_i32_0 = arith.constant 0 : i32
    %c0_i32_1 = arith.constant 0 : i32
    return %c0_i32, %c0_i32_0 : i32, i32
  }
  func.func @transform_2(%arg0: i32) -> (i32, i32) {
    %c0_i32 = arith.constant 0 : i32
    %c0_i32_0 = arith.constant 0 : i32
    %c0_i32_1 = arith.constant 0 : i32
    return %c0_i32, %c0_i32_0 : i32, i32
  }
  func.func @transform_3(%arg0: i32) -> (i32, i32) {
    %c0_i32 = arith.constant 0 : i32
    %c0_i32_0 = arith.constant 0 : i32
    %c0_i32_1 = arith.constant 0 : i32
    return %c0_i32, %c0_i32_0 : i32, i32
  }
  func.func @transform_4(%arg0: i32) -> (i32, i32, i32) {
    %c0_i32 = arith.constant 0 : i32
    %c0_i32_0 = arith.constant 0 : i32
    %c0_i32_1 = arith.constant 0 : i32
    return %arg0, %c0_i32, %c0_i32_0 : i32, i32, i32
  }
}

</mosaic_0001>

<llo_original>
// kernel: tpu_custom_call.1
$region0: #{tpu_custom_call.1}
  #allocation0 [shape = 'u32[]', space=smem, size = 0x4, offset = 0x4, fixed_abs, tag = 'smem constant byte address 0x4 - core index']
  #allocation1 [shape = 'u32[144,128]{1,0:T(1,128)}', space=vmem, size = 0x12000, scoped, tag = 'internal scratch']
  %s0 = inlined_call_operand.hbm [shape: bf16[2,16,384], index: 0, kind: input, shape index: {}]
  %s1 = inlined_call_operand.hbm [shape: bf16[384,1536], index: 1, kind: input, shape index: {}]
  %s2 = inlined_call_operand.hbm [shape: bf16[512,384], index: 2, kind: input, shape index: {}]
  %s3 = inlined_call_operand.hbm [shape: f32[1,384], index: 3, kind: input, shape index: {}]
  %s4 = inlined_call_operand.hbm [shape: f32[2,16,384], index: 4, kind: output, shape index: {}]
  %s5 = sld [smem:[#allocation0]]
  $region65: #{tpu_custom_call.1} parent=0
    _
  %s7 = ssub.s32 1, %s5
  %s8 = scalar_select 0, %s7, %s5
  $region1: #{tpu_custom_call.1} parent=0
    #allocation2 [shape = 'u8[24576]{0}', space=vmem, size = 0x6000, scoped, tag = 'input window, operand 0']
    #allocation3 [shape = 's32[2]{0}', space=sflag, size = 0x8, scoped, tag = 'scoped memory for tpu_custom_call.1']
    #allocation4 [shape = 's32[2]{0}', space=sflag, size = 0x8, scoped, tag = 'scoped memory for tpu_custom_call.1']
    #allocation5 [shape = 'u8[1179648]{0}', space=vmem, size = 0x120000, scoped, tag = 'input window, operand 1, single buffered']
    #allocation6 [shape = 's32[1]{0}', space=sflag, size = 0x4, scoped, tag = 'scoped memory for tpu_custom_call.1']
    #allocation7 [shape = 'u8[393216]{0}', space=vmem, size = 0x60000, scoped, tag = 'input window, operand 2, single buffered']
    #allocation8 [shape = 'u8[1536]{0}', space=vmem, size = 0x800, scoped, tag = 'input window, operand 3, single buffered']
    #allocation9 [shape = 's32[1]{0}', space=sflag, size = 0x4, scoped, tag = 'scoped memory for tpu_custom_call.1']
    #allocation10 [shape = 'u8[49152]{0}', space=vmem, size = 0xc000, scoped, tag = 'output window, operand 0']
    %9 = vsyncpa [#allocation3], 0
    %s10 = scalar_lea.sflag [#allocation3], 1
    %11 = vsyncpa %s10, 0
    %12 = vsyncpa [#allocation6], 0
    %13 = vsyncpa [#allocation9], 0
    %14 = vsyncpa [#allocation4], 0
    %s15 = scalar_lea.sflag [#allocation4], 1
    %16 = vsyncpa %s15, 0
    loop: start=0, step=1, limit=4
    $region2: #{tpu_custom_call.1} parent=1 // loop_pre_header
      _
    $region3: #{tpu_custom_call.1} parent=1 // loop_header
      %s18 = sphi 0, %s22
      %p19 = scmp.ge.s32.totalorder %s18, 4
      %s28 = sphi 0, %s30
      %s31 = sphi 0, %s28
      %s32 = sphi 0, %s31
      %s48 = sphi 0, %s32
      %s52 = sphi 0, %s52
      %s54 = sphi 0, %s52
      %s55 = sphi 0, %s54
      %s69 = sphi 0, %s55
      %s73 = sphi 0, %s73
      %s75 = sphi 0, %s73
      %s76 = sphi 0, %s75
      %s90 = sphi 0, %s76
      %s94 = sphi 0, %s94
      %s96 = sphi 0, %s94
      %s97 = sphi 0, %s96
      %s111 = sphi 0, %s97
      %s117 = sphi 0, %s119
      %s120 = sphi 0, %s117
      %s121 = sphi 0, %s120
      %s137 = sphi 0, %s121
    $region4: #{tpu_custom_call.1} parent=1 // loop_header_branch
      %21 = sbr.rel (%p19) target = $region8
    $region5: #{tpu_custom_call.1} parent=1 // loop_body
      %s23 = ssub.s32 %s18, 1
      %s24 = ssub.s32 %s18, 2
      %s25 = sadd.s32 %s18, 1
      %s26 = ssub.s32 %s18, %s25
      %p27 = scmp.eq.s32.totalorder %s26, 0
      %s29 = sadd.s32 %s28, 1
      %s30 = scalar_select %p27, %s28, %s29
      %p33 = pneg %p27
      %p34 = scmp.eq.s32.totalorder %s18, 1
      %p35 = por %p33, %p34
      %p36 = scmp.ne.s32.totalorder %s28, %s31
      %p37 = scmp.eq.s32.totalorder %s18, 0
      %p38 = por %p36, %p37
      %p39 = scmp.ne.s32.totalorder %s28, %s31
      %p40 = scmp.eq.s32.totalorder %s23, 1
      %p41 = por %p39, %p40
      %p42 = scmp.ne.s32.totalorder %s31, %s32
      %p43 = scmp.eq.s32.totalorder %s23, 0
      %p44 = por %p42, %p43
      %p45 = scmp.ne.s32.totalorder %s31, %s32
      %p46 = scmp.eq.s32.totalorder %s24, 1
      %p47 = por %p45, %p46
      %p49 = scmp.ne.s32.totalorder %s32, %s48
      %p50 = scmp.eq.s32.totalorder %s24, 0
      %p51 = por %p49, %p50
      %s53 = sadd.s32 %s52, 1
      %p56 = scmp.eq.s32.totalorder %s18, 1
      %p57 = scmp.ne.s32.totalorder %s52, %s54
      %p58 = scmp.eq.s32.totalorder %s18, 0
      %p59 = por %p57, %p58
      %p60 = scmp.ne.s32.totalorder %s52, %s54
      %p61 = scmp.eq.s32.totalorder %s23, 1
      %p62 = por %p60, %p61
      %p63 = scmp.ne.s32.totalorder %s54, %s55
      %p64 = scmp.eq.s32.totalorder %s23, 0
      %p65 = por %p63, %p64
      %p66 = scmp.ne.s32.totalorder %s54, %s55
      %p67 = scmp.eq.s32.totalorder %s24, 1
      %p68 = por %p66, %p67
      %p70 = scmp.ne.s32.totalorder %s55, %s69
      %p71 = scmp.eq.s32.totalorder %s24, 0
      %p72 = por %p70, %p71
      %s74 = sadd.s32 %s73, 1
      %p77 = scmp.eq.s32.totalorder %s18, 1
      %p78 = scmp.ne.s32.totalorder %s73, %s75
      %p79 = scmp.eq.s32.totalorder %s18, 0
      %p80 = por %p78, %p79
      %p81 = scmp.ne.s32.totalorder %s73, %s75
      %p82 = scmp.eq.s32.totalorder %s23, 1
      %p83 = por %p81, %p82
      %p84 = scmp.ne.s32.totalorder %s75, %s76
      %p85 = scmp.eq.s32.totalorder %s23, 0
      %p86 = por %p84, %p85
      %p87 = scmp.ne.s32.totalorder %s75, %s76
      %p88 = scmp.eq.s32.totalorder %s24, 1
      %p89 = por %p87, %p88
      %p91 = scmp.ne.s32.totalorder %s76, %s90
      %p92 = scmp.eq.s32.totalorder %s24, 0
      %p93 = por %p91, %p92
      %s95 = sadd.s32 %s94, 1
      %p98 = scmp.eq.s32.totalorder %s18, 1
      %p99 = scmp.ne.s32.totalorder %s94, %s96
      %p100 = scmp.eq.s32.totalorder %s18, 0
      %p101 = por %p99, %p100
      %p102 = scmp.ne.s32.totalorder %s94, %s96
      %p103 = scmp.eq.s32.totalorder %s23, 1
      %p104 = por %p102, %p103
      %p105 = scmp.ne.s32.totalorder %s96, %s97
      %p106 = scmp.eq.s32.totalorder %s23, 0
      %p107 = por %p105, %p106
      %p108 = scmp.ne.s32.totalorder %s96, %s97
      %p109 = scmp.eq.s32.totalorder %s24, 1
      %p110 = por %p108, %p109
      %p112 = scmp.ne.s32.totalorder %s97, %s111
      %p113 = scmp.eq.s32.totalorder %s24, 0
      %p114 = por %p112, %p113
      %s115 = ssub.s32 %s18, %s25
      %p116 = scmp.eq.s32.totalorder %s115, 0
      %s118 = sadd.s32 %s117, 1
      %s119 = scalar_select %p116, %s117, %s118
      %p122 = pneg %p116
      %p123 = scmp.eq.s32.totalorder %s18, 1
      %p124 = por %p122, %p123
      %p125 = scmp.ne.s32.totalorder %s117, %s120
      %p126 = scmp.eq.s32.totalorder %s18, 0
      %p127 = por %p125, %p126
      %p128 = scmp.ne.s32.totalorder %s117, %s120
      %p129 = scmp.eq.s32.totalorder %s23, 1
      %p130 = por %p128, %p129
      %p131 = scmp.ne.s32.totalorder %s120, %s121
      %p132 = scmp.eq.s32.totalorder %s23, 0
      %p133 = por %p131, %p132
      %p134 = scmp.ne.s32.totalorder %s120, %s121
      %p135 = scmp.eq.s32.totalorder %s24, 1
      %p136 = por %p134, %p135
      %p138 = scmp.ne.s32.totalorder %s121, %s137
      %p139 = scmp.eq.s32.totalorder %s24, 0
      %p140 = por %p138, %p139
      %p141 = scmp.le.s32.totalorder 1, %s18
      %p142 = scmp.lt.s32.totalorder %s18, 3
      %p143 = pnand %p141, %p142
      %p144 = pneg %p143
      // Predicated region
      $region9: #{tpu_custom_call.1} parent=5 // pred_check
        _
      $region10: #{tpu_custom_call.1} parent=5 // pred_check_branch
        %146 = sbr.rel (%p143) target = $region12
      $region11: #{tpu_custom_call.1} parent=5 // pred_region
        %s147 = ssub.s32 %s18, 1
        // Predicated region
        $region13: #{tpu_custom_call.1} parent=11 // pred_check
          %p148 = pneg %p65
        $region14: #{tpu_custom_call.1} parent=11 // pred_check_branch
          %150 = sbr.rel (%p148) target = $region16
        $region15: #{tpu_custom_call.1} parent=11 // pred_region
          %s152 = ssub.s32 36864, 36864
          %153 = vsyncadd [#allocation6], %s152
          %s154 = sshll.u32 [#allocation5], 4
          %s155 = int_to_ptr.vmem [resolvable:$true] %s154
          %160 = dma.hbm_to_vmem [thread:$0]  %s1, 36864, %s155, [#allocation6], 768, 768, 48
        $region16: #{tpu_custom_call.1} parent=11 // pred_fallthru
          _
        // Predicated region
        $region17: #{tpu_custom_call.1} parent=11 // pred_check
          %p161 = pneg %p86
        $region18: #{tpu_custom_call.1} parent=11 // pred_check_branch
          %163 = sbr.rel (%p161) target = $region20
        $region19: #{tpu_custom_call.1} parent=11 // pred_region
          %s165 = ssub.s32 12288, 12288
          %166 = vsyncadd [#allocation6], %s165
          %s167 = sshll.u32 [#allocation7], 4
          %s168 = int_to_ptr.vmem [resolvable:$true] %s167
          %173 = dma.hbm_to_vmem [thread:$0]  %s2, 12288, %s168, [#allocation6], 192, 192, 12
        $region20: #{tpu_custom_call.1} parent=11 // pred_fallthru
          _
        // Predicated region
        $region21: #{tpu_custom_call.1} parent=11 // pred_check
          %p174 = pneg %p107
        $region22: #{tpu_custom_call.1} parent=11 // pred_check_branch
          %176 = sbr.rel (%p174) target = $region24
        $region23: #{tpu_custom_call.1} parent=11 // pred_region
          %s178 = ssub.s32 48, 48
          %179 = vsyncadd [#allocation9], %s178
          %s181 = sshll.u32 [#allocation8], 4
          %s182 = int_to_ptr.vmem [resolvable:$true] %s181
          %184 = dma.hbm_to_vmem [thread:$0]  %s3, 48, %s182, [#allocation9]
        $region24: #{tpu_custom_call.1} parent=11 // pred_fallthru
          _
      $region12: #{tpu_custom_call.1} parent=5 // pred_fallthru
        _
      %p185 = scmp.lt.s32.totalorder %s18, 2
      // Predicated region
      $region25: #{tpu_custom_call.1} parent=5 // pred_check
        %p186 = pneg %p185
      $region26: #{tpu_custom_call.1} parent=5 // pred_check_branch
        %188 = sbr.rel (%p186) target = $region28
      $region27: #{tpu_custom_call.1} parent=5 // pred_region
        // Predicated region
        $region29: #{tpu_custom_call.1} parent=27 // pred_check
          %p189 = pneg %p38
        $region30: #{tpu_custom_call.1} parent=27 // pred_check_branch
          %191 = sbr.rel (%p189) target = $region32
        $region31: #{tpu_custom_call.1} parent=27 // pred_region
          %s192 = sand.u32 %s28, 1
          %s193 = scalar_lea.sflag [#allocation3], %s192
          %s194 = sand.u32 %s28, 1
          %s195 = smul.addr %s194, 24
          %s196 = scalar_lea.vmem [#allocation2], %s195
          %s198 = ssub.s32 384, 384
          %199 = vsyncadd %s193, %s198
          %s200 = smul.addr %s18, 6
          %s201 = smul.addr %s200, 64
          %s202 = scalar_lea.hbm %s0, %s201
          %s203 = sshll.u32 %s196, 4
          %s204 = int_to_ptr.vmem [resolvable:$true] %s203
          %209 = dma.hbm_to_vmem [thread:$0]  %s202, 384, %s204, %s193, 192, 192, 12
        $region32: #{tpu_custom_call.1} parent=27 // pred_fallthru
          _
      $region28: #{tpu_custom_call.1} parent=5 // pred_fallthru
        _
      %p210 = scmp.le.s32.totalorder 1, %s18
      %p211 = scmp.lt.s32.totalorder %s18, 3
      %p212 = pnand %p210, %p211
      %p213 = pneg %p212
      // Predicated region
      $region33: #{tpu_custom_call.1} parent=5 // pred_check
        _
      $region34: #{tpu_custom_call.1} parent=5 // pred_check_branch
        %215 = sbr.rel (%p212) target = $region36
      $region35: #{tpu_custom_call.1} parent=5 // pred_region
        %s216 = ssub.s32 %s18, 1
        %s217 = sand.u32 %s31, 1
        %s218 = scalar_lea.sflag [#allocation3], %s217
        %s219 = sand.u32 %s31, 1
        %s220 = smul.addr %s219, 24
        %s221 = scalar_lea.vmem [#allocation2], %s220
        // Predicated region
        $region37: #{tpu_custom_call.1} parent=35 // pred_check
          %p222 = pneg %p44
        $region38: #{tpu_custom_call.1} parent=35 // pred_check_branch
          %224 = sbr.rel (%p222) target = $region40
        $region39: #{tpu_custom_call.1} parent=35 // pred_region
          %225 = dma.done %s218, 384
        $region40: #{tpu_custom_call.1} parent=35 // pred_fallthru
          _
        // Predicated region
        $region41: #{tpu_custom_call.1} parent=35 // pred_check
          %p226 = pneg %p65
        $region42: #{tpu_custom_call.1} parent=35 // pred_check_branch
          %228 = sbr.rel (%p226) target = $region44
        $region43: #{tpu_custom_call.1} parent=35 // pred_region
          %229 = dma.done [#allocation6], 36864
        $region44: #{tpu_custom_call.1} parent=35 // pred_fallthru
          _
        // Predicated region
        $region45: #{tpu_custom_call.1} parent=35 // pred_check
          %p230 = pneg %p86
        $region46: #{tpu_custom_call.1} parent=35 // pred_check_branch
          %232 = sbr.rel (%p230) target = $region48
        $region47: #{tpu_custom_call.1} parent=35 // pred_region
          %233 = dma.done [#allocation6], 12288
        $region48: #{tpu_custom_call.1} parent=35 // pred_fallthru
          _
        // Predicated region
        $region49: #{tpu_custom_call.1} parent=35 // pred_check
          %p234 = pneg %p107
        $region50: #{tpu_custom_call.1} parent=35 // pred_check_branch
          %236 = sbr.rel (%p234) target = $region52
        $region51: #{tpu_custom_call.1} parent=35 // pred_region
          %237 = dma.done [#allocation9], 48
        $region52: #{tpu_custom_call.1} parent=35 // pred_fallthru
          _
        %s238 = sand.u32 %s31, 1
        %s239 = scalar_lea.sflag [#allocation3], %s238
        %s240 = sand.u32 %s31, 1
        %s241 = smul.addr %s240, 24
        %s242 = scalar_lea.vmem [#allocation2], %s241
        %p243 = pneg %p44
        %p244 = pneg %p41
        %p245 = pneg %p65
        %p246 = pneg %p62
        %p247 = pneg %p86
        %p248 = pneg %p83
        %p249 = pneg %p107
        %p250 = pneg %p104
        %p251 = pneg %p133
        %p252 = pneg %p130
        %s253 = sand.u32 %s120, 1
        %s254 = scalar_lea.sflag [#allocation4], %s253
        %s255 = sand.u32 %s120, 1
        %s256 = smul.addr %s255, 48
        %s257 = scalar_lea.vmem [#allocation10], %s256
        %v259 = vld [vmem:[%s221] sm:$0xff]
        %v260 = vld [vmem:[%s221 + $0x8] sm:$0xf]
        %v261 = vld [vmem:[%s221 + $0xc] sm:$0xff]
        %v262 = vld [vmem:[%s221 + $0x14] sm:$0xf]
        %v263 = vld [vmem:[#allocation5] sm:$0xff]
        %v264 = vld [vmem:[#allocation5 + $0x8] sm:$0xff]
        %v265 = vld [vmem:[#allocation5 + $0x10] sm:$0xff]
        %v266 = vld [vmem:[#allocation5 + $0x18] sm:$0xff]
        %v267 = vld [vmem:[#allocation5 + $0x20] sm:$0xff]
        %v268 = vld [vmem:[#allocation5 + $0x28] sm:$0xff]
        %v269 = vld [vmem:[#allocation5 + $0x30] sm:$0xff]
        %v270 = vld [vmem:[#allocation5 + $0x38] sm:$0xff]
        %v271 = vld [vmem:[#allocation5 + $0x40] sm:$0xff]
        %v272 = vld [vmem:[#allocation5 + $0x48] sm:$0xff]
        %v273 = vld [vmem:[#allocation5 + $0x50] sm:$0xff]
        %v274 = vld [vmem:[#allocation5 + $0x58] sm:$0xff]
        %v275 = vld [vmem:[#allocation5 + $0x60] sm:$0xff]
        %v276 = vld [vmem:[#allocation5 + $0x68] sm:$0xff]
        %v277 = vld [vmem:[#allocation5 + $0x70] sm:$0xff]
        %v278 = vld [vmem:[#allocation5 + $0x78] sm:$0xff]
        %v279 = vld [vmem:[#allocation5 + $0x80] sm:$0xff]
        %v280 = vld [vmem:[#allocation5 + $0x88] sm:$0xff]
        %v281 = vld [vmem:[#allocation5 + $0x90] sm:$0xff]
        %v282 = vld [vmem:[#allocation5 + $0x98] sm:$0xff]
        %v283 = vld [vmem:[#allocation5 + $0xa0] sm:$0xff]
        %v284 = vld [vmem:[#allocation5 + $0xa8] sm:$0xff]
        %v285 = vld [vmem:[#allocation5 + $0xb0] sm:$0xff]
        %v286 = vld [vmem:[#allocation5 + $0xb8] sm:$0xff]
        %v287 = vld [vmem:[#allocation5 + $0xc0] sm:$0xff]
        %v288 = vld [vmem:[#allocation5 + $0xc8] sm:$0xff]
        %v289 = vld [vmem:[#allocation5 + $0xd0] sm:$0xff]
        %v290 = vld [vmem:[#allocation5 + $0xd8] sm:$0xff]
        %v291 = vld [vmem:[#allocation5 + $0xe0] sm:$0xff]
        %v292 = vld [vmem:[#allocation5 + $0xe8] sm:$0xff]
        %v293 = vld [vmem:[#allocation5 + $0xf0] sm:$0xff]
        %v294 = vld [vmem:[#allocation5 + $0xf8] sm:$0xff]
        %v295 = vld [vmem:[#allocation5 + $0x100] sm:$0xff]
        %v296 = vld [vmem:[#allocation5 + $0x108] sm:$0xff]
        %v297 = vld [vmem:[#allocation5 + $0x110] sm:$0xff]
        %v298 = vld [vmem:[#allocation5 + $0x118] sm:$0xff]
        %v299 = vld [vmem:[#allocation5 + $0x120] sm:$0xff]
        %v300 = vld [vmem:[#allocation5 + $0x128] sm:$0xff]
        %v301 = vld [vmem:[#allocation5 + $0x130] sm:$0xff]
        %v302 = vld [vmem:[#allocation5 + $0x138] sm:$0xff]
        %v303 = vld [vmem:[#allocation5 + $0x140] sm:$0xff]
        %v304 = vld [vmem:[#allocation5 + $0x148] sm:$0xff]
        %v305 = vld [vmem:[#allocation5 + $0x150] sm:$0xff]
        %v306 = vld [vmem:[#allocation5 + $0x158] sm:$0xff]
        %v307 = vld [vmem:[#allocation5 + $0x160] sm:$0xff]
        %v308 = vld [vmem:[#allocation5 + $0x168] sm:$0xff]
        %v309 = vld [vmem:[#allocation5 + $0x170] sm:$0xff]
        %v310 = vld [vmem:[#allocation5 + $0x178] sm:$0xff]
        %v311 = vld [vmem:[#allocation5 + $0x180] sm:$0xff]
        %v312 = vld [vmem:[#allocation5 + $0x188] sm:$0xff]
        %v313 = vld [vmem:[#allocation5 + $0x190] sm:$0xff]
        %v314 = vld [vmem:[#allocation5 + $0x198] sm:$0xff]
        %v315 = vld [vmem:[#allocation5 + $0x1a0] sm:$0xff]
        %v316 = vld [vmem:[#allocation5 + $0x1a8] sm:$0xff]
        %v317 = vld [vmem:[#allocation5 + $0x1b0] sm:$0xff]
        %v318 = vld [vmem:[#allocation5 + $0x1b8] sm:$0xff]
        %v319 = vld [vmem:[#allocation5 + $0x1c0] sm:$0xff]
        %v320 = vld [vmem:[#allocation5 + $0x1c8] sm:$0xff]
        %v321 = vld [vmem:[#allocation5 + $0x1d0] sm:$0xff]
        %v322 = vld [vmem:[#allocation5 + $0x1d8] sm:$0xff]
        %v323 = vld [vmem:[#allocation5 + $0x1e0] sm:$0xff]
        %v324 = vld [vmem:[#allocation5 + $0x1e8] sm:$0xff]
        %v325 = vld [vmem:[#allocation5 + $0x1f0] sm:$0xff]
        %v326 = vld [vmem:[#allocation5 + $0x1f8] sm:$0xff]
        %v327 = vld [vmem:[#allocation5 + $0x200] sm:$0xff]
        %v328 = vld [vmem:[#allocation5 + $0x208] sm:$0xff]
        %v329 = vld [vmem:[#allocation5 + $0x210] sm:$0xff]
        %v330 = vld [vmem:[#allocation5 + $0x218] sm:$0xff]
        %v331 = vld [vmem:[#allocation5 + $0x220] sm:$0xff]
        %v332 = vld [vmem:[#allocation5 + $0x228] sm:$0xff]
        %v333 = vld [vmem:[#allocation5 + $0x230] sm:$0xff]
        %v334 = vld [vmem:[#allocation5 + $0x238] sm:$0xff]
        %v335 = vld [vmem:[#allocation5 + $0x240] sm:$0xff]
        %v336 = vld [vmem:[#allocation5 + $0x248] sm:$0xff]
        %v337 = vld [vmem:[#allocation5 + $0x250] sm:$0xff]
        %v338 = vld [vmem:[#allocation5 + $0x258] sm:$0xff]
        %v339 = vld [vmem:[#allocation5 + $0x260] sm:$0xff]
        %v340 = vld [vmem:[#allocation5 + $0x268] sm:$0xff]
        %v341 = vld [vmem:[#allocation5 + $0x270] sm:$0xff]
        %v342 = vld [vmem:[#allocation5 + $0x278] sm:$0xff]
        %v343 = vld [vmem:[#allocation5 + $0x280] sm:$0xff]
        %v344 = vld [vmem:[#allocation5 + $0x288] sm:$0xff]
        %v345 = vld [vmem:[#allocation5 + $0x290] sm:$0xff]
        %v346 = vld [vmem:[#allocation5 + $0x298] sm:$0xff]
        %v347 = vld [vmem:[#allocation5 + $0x2a0] sm:$0xff]
        %v348 = vld [vmem:[#allocation5 + $0x2a8] sm:$0xff]
        %v349 = vld [vmem:[#allocation5 + $0x2b0] sm:$0xff]
        %v350 = vld [vmem:[#allocation5 + $0x2b8] sm:$0xff]
        %v351 = vld [vmem:[#allocation5 + $0x2c0] sm:$0xff]
        %v352 = vld [vmem:[#allocation5 + $0x2c8] sm:$0xff]
        %v353 = vld [vmem:[#allocation5 + $0x2d0] sm:$0xff]
        %v354 = vld [vmem:[#allocation5 + $0x2d8] sm:$0xff]
        %v355 = vld [vmem:[#allocation5 + $0x2e0] sm:$0xff]
        %v356 = vld [vmem:[#allocation5 + $0x2e8] sm:$0xff]
        %v357 = vld [vmem:[#allocation5 + $0x2f0] sm:$0xff]
        %v358 = vld [vmem:[#allocation5 + $0x2f8] sm:$0xff]
        %v359 = vld [vmem:[#allocation5 + $0x300] sm:$0xff]
        %v360 = vld [vmem:[#allocation5 + $0x308] sm:$0xff]
        %v361 = vld [vmem:[#allocation5 + $0x310] sm:$0xff]
        %v362 = vld [vmem:[#allocation5 + $0x318] sm:$0xff]
        %v363 = vld [vmem:[#allocation5 + $0x320] sm:$0xff]
        %v364 = vld [vmem:[#allocation5 + $0x328] sm:$0xff]
        %v365 = vld [vmem:[#allocation5 + $0x330] sm:$0xff]
        %v366 = vld [vmem:[#allocation5 + $0x338] sm:$0xff]
        %v367 = vld [vmem:[#allocation5 + $0x340] sm:$0xff]
        %v368 = vld [vmem:[#allocation5 + $0x348] sm:$0xff]
        %v369 = vld [vmem:[#allocation5 + $0x350] sm:$0xff]
        %v370 = vld [vmem:[#allocation5 + $0x358] sm:$0xff]
        %v371 = vld [vmem:[#allocation5 + $0x360] sm:$0xff]
        %v372 = vld [vmem:[#allocation5 + $0x368] sm:$0xff]
        %v373 = vld [vmem:[#allocation5 + $0x370] sm:$0xff]
        %v374 = vld [vmem:[#allocation5 + $0x378] sm:$0xff]
        %v375 = vld [vmem:[#allocation5 + $0x380] sm:$0xff]
        %v376 = vld [vmem:[#allocation5 + $0x388] sm:$0xff]
        %v377 = vld [vmem:[#allocation5 + $0x390] sm:$0xff]
        %v378 = vld [vmem:[#allocation5 + $0x398] sm:$0xff]
        %v379 = vld [vmem:[#allocation5 + $0x3a0] sm:$0xff]
        %v380 = vld [vmem:[#allocation5 + $0x3a8] sm:$0xff]
        %v381 = vld [vmem:[#allocation5 + $0x3b0] sm:$0xff]
        %v382 = vld [vmem:[#allocation5 + $0x3b8] sm:$0xff]
        %v383 = vld [vmem:[#allocation5 + $0x3c0] sm:$0xff]
        %v384 = vld [vmem:[#allocation5 + $0x3c8] sm:$0xff]
        %v385 = vld [vmem:[#allocation5 + $0x3d0] sm:$0xff]
        %v386 = vld [vmem:[#allocation5 + $0x3d8] sm:$0xff]
        %v387 = vld [vmem:[#allocation5 + $0x3e0] sm:$0xff]
        %v388 = vld [vmem:[#allocation5 + $0x3e8] sm:$0xff]
        %v389 = vld [vmem:[#allocation5 + $0x3f0] sm:$0xff]
        %v390 = vld [vmem:[#allocation5 + $0x3f8] sm:$0xff]
        %v391 = vld [vmem:[#allocation5 + $0x400] sm:$0xff]
        %v392 = vld [vmem:[#allocation5 + $0x408] sm:$0xff]
        %v393 = vld [vmem:[#allocation5 + $0x410] sm:$0xff]
        %v394 = vld [vmem:[#allocation5 + $0x418] sm:$0xff]
        %v395 = vld [vmem:[#allocation5 + $0x420] sm:$0xff]
        %v396 = vld [vmem:[#allocation5 + $0x428] sm:$0xff]
        %v397 = vld [vmem:[#allocation5 + $0x430] sm:$0xff]
        %v398 = vld [vmem:[#allocation5 + $0x438] sm:$0xff]
        %v399 = vld [vmem:[#allocation5 + $0x440] sm:$0xff]
        %v400 = vld [vmem:[#allocation5 + $0x448] sm:$0xff]
        %v401 = vld [vmem:[#allocation5 + $0x450] sm:$0xff]
        %v402 = vld [vmem:[#allocation5 + $0x458] sm:$0xff]
        %v403 = vld [vmem:[#allocation5 + $0x460] sm:$0xff]
        %v404 = vld [vmem:[#allocation5 + $0x468] sm:$0xff]
        %v405 = vld [vmem:[#allocation5 + $0x470] sm:$0xff]
        %v406 = vld [vmem:[#allocation5 + $0x478] sm:$0xff]
        %v407 = vld [vmem:[#allocation5 + $0x480] sm:$0xff]
        %v408 = vld [vmem:[#allocation5 + $0x488] sm:$0xff]
        %v409 = vld [vmem:[#allocation5 + $0x490] sm:$0xff]
        %v410 = vld [vmem:[#allocation5 + $0x498] sm:$0xff]
        %v411 = vld [vmem:[#allocation5 + $0x4a0] sm:$0xff]
        %v412 = vld [vmem:[#allocation5 + $0x4a8] sm:$0xff]
        %v413 = vld [vmem:[#allocation5 + $0x4b0] sm:$0xff]
        %v414 = vld [vmem:[#allocation5 + $0x4b8] sm:$0xff]
        %v415 = vld [vmem:[#allocation5 + $0x4c0] sm:$0xff]
        %v416 = vld [vmem:[#allocation5 + $0x4c8] sm:$0xff]
        %v417 = vld [vmem:[#allocation5 + $0x4d0] sm:$0xff]
        %v418 = vld [vmem:[#allocation5 + $0x4d8] sm:$0xff]
        %v419 = vld [vmem:[#allocation5 + $0x4e0] sm:$0xff]
        %v420 = vld [vmem:[#allocation5 + $0x4e8] sm:$0xff]
        %v421 = vld [vmem:[#allocation5 + $0x4f0] sm:$0xff]
        %v422 = vld [vmem:[#allocation5 + $0x4f8] sm:$0xff]
        %v423 = vld [vmem:[#allocation5 + $0x500] sm:$0xff]
        %v424 = vld [vmem:[#allocation5 + $0x508] sm:$0xff]
        %v425 = vld [vmem:[#allocation5 + $0x510] sm:$0xff]
        %v426 = vld [vmem:[#allocation5 + $0x518] sm:$0xff]
        %v427 = vld [vmem:[#allocation5 + $0x520] sm:$0xff]
        %v428 = vld [vmem:[#allocation5 + $0x528] sm:$0xff]
        %v429 = vld [vmem:[#allocation5 + $0x530] sm:$0xff]
        %v430 = vld [vmem:[#allocation5 + $0x538] sm:$0xff]
        %v431 = vld [vmem:[#allocation5 + $0x540] sm:$0xff]
        %v432 = vld [vmem:[#allocation5 + $0x548] sm:$0xff]
        %v433 = vld [vmem:[#allocation5 + $0x550] sm:$0xff]
        %v434 = vld [vmem:[#allocation5 + $0x558] sm:$0xff]
        %v435 = vld [vmem:[#allocation5 + $0x560] sm:$0xff]
        %v436 = vld [vmem:[#allocation5 + $0x568] sm:$0xff]
        %v437 = vld [vmem:[#allocation5 + $0x570] sm:$0xff]
        %v438 = vld [vmem:[#allocation5 + $0x578] sm:$0xff]
        %v439 = vld [vmem:[#allocation5 + $0x580] sm:$0xff]
        %v440 = vld [vmem:[#allocation5 + $0x588] sm:$0xff]
        %v441 = vld [vmem:[#allocation5 + $0x590] sm:$0xff]
        %v442 = vld [vmem:[#allocation5 + $0x598] sm:$0xff]
        %v443 = vld [vmem:[#allocation5 + $0x5a0] sm:$0xff]
        %v444 = vld [vmem:[#allocation5 + $0x5a8] sm:$0xff]
        %v445 = vld [vmem:[#allocation5 + $0x5b0] sm:$0xff]
        %v446 = vld [vmem:[#allocation5 + $0x5b8] sm:$0xff]
        %v447 = vld [vmem:[#allocation5 + $0x5c0] sm:$0xff]
        %v448 = vld [vmem:[#allocation5 + $0x5c8] sm:$0xff]
        %v449 = vld [vmem:[#allocation5 + $0x5d0] sm:$0xff]
        %v450 = vld [vmem:[#allocation5 + $0x5d8] sm:$0xff]
        %v451 = vld [vmem:[#allocation5 + $0x5e0] sm:$0xff]
        %v452 = vld [vmem:[#allocation5 + $0x5e8] sm:$0xff]
        %v453 = vld [vmem:[#allocation5 + $0x5f0] sm:$0xff]
        %v454 = vld [vmem:[#allocation5 + $0x5f8] sm:$0xff]
        %v455 = vld [vmem:[#allocation5 + $0x600] sm:$0xff]
        %v456 = vld [vmem:[#allocation5 + $0x608] sm:$0xff]
        %v457 = vld [vmem:[#allocation5 + $0x610] sm:$0xff]
        %v458 = vld [vmem:[#allocation5 + $0x618] sm:$0xff]
        %v459 = vld [vmem:[#allocation5 + $0x620] sm:$0xff]
        %v460 = vld [vmem:[#allocation5 + $0x628] sm:$0xff]
        %v461 = vld [vmem:[#allocation5 + $0x630] sm:$0xff]
        %v462 = vld [vmem:[#allocation5 + $0x638] sm:$0xff]
        %v463 = vld [vmem:[#allocation5 + $0x640] sm:$0xff]
        %v464 = vld [vmem:[#allocation5 + $0x648] sm:$0xff]
        %v465 = vld [vmem:[#allocation5 + $0x650] sm:$0xff]
        %v466 = vld [vmem:[#allocation5 + $0x658] sm:$0xff]
        %v467 = vld [vmem:[#allocation5 + $0x660] sm:$0xff]
        %v468 = vld [vmem:[#allocation5 + $0x668] sm:$0xff]
        %v469 = vld [vmem:[#allocation5 + $0x670] sm:$0xff]
        %v470 = vld [vmem:[#allocation5 + $0x678] sm:$0xff]
        %v471 = vld [vmem:[#allocation5 + $0x680] sm:$0xff]
        %v472 = vld [vmem:[#allocation5 + $0x688] sm:$0xff]
        %v473 = vld [vmem:[#allocation5 + $0x690] sm:$0xff]
        %v474 = vld [vmem:[#allocation5 + $0x698] sm:$0xff]
        %v475 = vld [vmem:[#allocation5 + $0x6a0] sm:$0xff]
        %v476 = vld [vmem:[#allocation5 + $0x6a8] sm:$0xff]
        %v477 = vld [vmem:[#allocation5 + $0x6b0] sm:$0xff]
        %v478 = vld [vmem:[#allocation5 + $0x6b8] sm:$0xff]
        %v479 = vld [vmem:[#allocation5 + $0x6c0] sm:$0xff]
        %v480 = vld [vmem:[#allocation5 + $0x6c8] sm:$0xff]
        %v481 = vld [vmem:[#allocation5 + $0x6d0] sm:$0xff]
        %v482 = vld [vmem:[#allocation5 + $0x6d8] sm:$0xff]
        %v483 = vld [vmem:[#allocation5 + $0x6e0] sm:$0xff]
        %v484 = vld [vmem:[#allocation5 + $0x6e8] sm:$0xff]
        %v485 = vld [vmem:[#allocation5 + $0x6f0] sm:$0xff]
        %v486 = vld [vmem:[#allocation5 + $0x6f8] sm:$0xff]
        %v487 = vld [vmem:[#allocation5 + $0x700] sm:$0xff]
        %v488 = vld [vmem:[#allocation5 + $0x708] sm:$0xff]
        %v489 = vld [vmem:[#allocation5 + $0x710] sm:$0xff]
        %v490 = vld [vmem:[#allocation5 + $0x718] sm:$0xff]
        %v491 = vld [vmem:[#allocation5 + $0x720] sm:$0xff]
        %v492 = vld [vmem:[#allocation5 + $0x728] sm:$0xff]
        %v493 = vld [vmem:[#allocation5 + $0x730] sm:$0xff]
        %v494 = vld [vmem:[#allocation5 + $0x738] sm:$0xff]
        %v495 = vld [vmem:[#allocation5 + $0x740] sm:$0xff]
        %v496 = vld [vmem:[#allocation5 + $0x748] sm:$0xff]
        %v497 = vld [vmem:[#allocation5 + $0x750] sm:$0xff]
        %v498 = vld [vmem:[#allocation5 + $0x758] sm:$0xff]
        %v499 = vld [vmem:[#allocation5 + $0x760] sm:$0xff]
        %v500 = vld [vmem:[#allocation5 + $0x768] sm:$0xff]
        %v501 = vld [vmem:[#allocation5 + $0x770] sm:$0xff]
        %v502 = vld [vmem:[#allocation5 + $0x778] sm:$0xff]
        %v503 = vld [vmem:[#allocation5 + $0x780] sm:$0xff]
        %v504 = vld [vmem:[#allocation5 + $0x788] sm:$0xff]
        %v505 = vld [vmem:[#allocation5 + $0x790] sm:$0xff]
        %v506 = vld [vmem:[#allocation5 + $0x798] sm:$0xff]
        %v507 = vld [vmem:[#allocation5 + $0x7a0] sm:$0xff]
        %v508 = vld [vmem:[#allocation5 + $0x7a8] sm:$0xff]
        %v509 = vld [vmem:[#allocation5 + $0x7b0] sm:$0xff]
        %v510 = vld [vmem:[#allocation5 + $0x7b8] sm:$0xff]
        %v511 = vld [vmem:[#allocation5 + $0x7c0] sm:$0xff]
        %v512 = vld [vmem:[#allocation5 + $0x7c8] sm:$0xff]
        %v513 = vld [vmem:[#allocation5 + $0x7d0] sm:$0xff]
        %v514 = vld [vmem:[#allocation5 + $0x7d8] sm:$0xff]
        %v515 = vld [vmem:[#allocation5 + $0x7e0] sm:$0xff]
        %v516 = vld [vmem:[#allocation5 + $0x7e8] sm:$0xff]
        %v517 = vld [vmem:[#allocation5 + $0x7f0] sm:$0xff]
        %v518 = vld [vmem:[#allocation5 + $0x7f8] sm:$0xff]
        %v519 = vld [vmem:[#allocation5 + $0x800] sm:$0xff]
        %v520 = vld [vmem:[#allocation5 + $0x808] sm:$0xff]
        %v521 = vld [vmem:[#allocation5 + $0x810] sm:$0xff]
        %v522 = vld [vmem:[#allocation5 + $0x818] sm:$0xff]
        %v523 = vld [vmem:[#allocation5 + $0x820] sm:$0xff]
        %v524 = vld [vmem:[#allocation5 + $0x828] sm:$0xff]
        %v525 = vld [vmem:[#allocation5 + $0x830] sm:$0xff]
        %v526 = vld [vmem:[#allocation5 + $0x838] sm:$0xff]
        %v527 = vld [vmem:[#allocation5 + $0x840] sm:$0xff]
        %v528 = vld [vmem:[#allocation5 + $0x848] sm:$0xff]
        %v529 = vld [vmem:[#allocation5 + $0x850] sm:$0xff]
        %v530 = vld [vmem:[#allocation5 + $0x858] sm:$0xff]
        %v531 = vld [vmem:[#allocation5 + $0x860] sm:$0xff]
        %v532 = vld [vmem:[#allocation5 + $0x868] sm:$0xff]
        %v533 = vld [vmem:[#allocation5 + $0x870] sm:$0xff]
        %v534 = vld [vmem:[#allocation5 + $0x878] sm:$0xff]
        %v535 = vld [vmem:[#allocation5 + $0x880] sm:$0xff]
        %v536 = vld [vmem:[#allocation5 + $0x888] sm:$0xff]
        %v537 = vld [vmem:[#allocation5 + $0x890] sm:$0xff]
        %v538 = vld [vmem:[#allocation5 + $0x898] sm:$0xff]
        %v539 = vld [vmem:[#allocation5 + $0x8a0] sm:$0xff]
        %v540 = vld [vmem:[#allocation5 + $0x8a8] sm:$0xff]
        %v541 = vld [vmem:[#allocation5 + $0x8b0] sm:$0xff]
        %v542 = vld [vmem:[#allocation5 + $0x8b8] sm:$0xff]
        %v543 = vld [vmem:[#allocation5 + $0x8c0] sm:$0xff]
        %v544 = vld [vmem:[#allocation5 + $0x8c8] sm:$0xff]
        %v545 = vld [vmem:[#allocation5 + $0x8d0] sm:$0xff]
        %v546 = vld [vmem:[#allocation5 + $0x8d8] sm:$0xff]
        %v547 = vld [vmem:[#allocation5 + $0x8e0] sm:$0xff]
        %v548 = vld [vmem:[#allocation5 + $0x8e8] sm:$0xff]
        %v549 = vld [vmem:[#allocation5 + $0x8f0] sm:$0xff]
        %v550 = vld [vmem:[#allocation5 + $0x8f8] sm:$0xff]
        %v555 = vunpack.c.l.b16 %v259
        %v556 = vunpack.c.h.b16 %v259
        %v557 = vunpack.c.l.b16 %v260
        %v558 = vunpack.c.l.b16 %v261
        %v559 = vunpack.c.h.b16 %v261
        %v560 = vunpack.c.l.b16 %v262
        %v561 = vpack.c.b16 %v558, %v555
        %v562 = vpack.c.b16 %v559, %v556
        %v563 = vpack.c.b16 %v560, %v557
        %v855 = vunpack.c.l.b16 %v263
        %v856 = vunpack.c.h.b16 %v263
        %v857 = vunpack.c.l.b16 %v264
        %v858 = vunpack.c.h.b16 %v264
        %v859 = vunpack.c.l.b16 %v265
        %v860 = vunpack.c.h.b16 %v265
        %v861 = vunpack.c.l.b16 %v266
        %v862 = vunpack.c.h.b16 %v266
        %v863 = vunpack.c.l.b16 %v267
        %v864 = vunpack.c.h.b16 %v267
        %v865 = vunpack.c.l.b16 %v268
        %v866 = vunpack.c.h.b16 %v268
        %v867 = vunpack.c.l.b16 %v269
        %v868 = vunpack.c.h.b16 %v269
        %v869 = vunpack.c.l.b16 %v270
        %v870 = vunpack.c.h.b16 %v270
        %v871 = vunpack.c.l.b16 %v271
        %v872 = vunpack.c.h.b16 %v271
        %v873 = vunpack.c.l.b16 %v272
        %v874 = vunpack.c.h.b16 %v272
        %v875 = vunpack.c.l.b16 %v273
        %v876 = vunpack.c.h.b16 %v273
        %v877 = vunpack.c.l.b16 %v274
        %v878 = vunpack.c.h.b16 %v274
        %v879 = vunpack.c.l.b16 %v275
        %v880 = vunpack.c.h.b16 %v275
        %v881 = vunpack.c.l.b16 %v276
        %v882 = vunpack.c.h.b16 %v276
        %v883 = vunpack.c.l.b16 %v277
        %v884 = vunpack.c.h.b16 %v277
        %v885 = vunpack.c.l.b16 %v278
        %v886 = vunpack.c.h.b16 %v278
        %v887 = vunpack.c.l.b16 %v279
        %v888 = vunpack.c.h.b16 %v279
        %v889 = vunpack.c.l.b16 %v280
        %v890 = vunpack.c.h.b16 %v280
        %v891 = vunpack.c.l.b16 %v281
        %v892 = vunpack.c.h.b16 %v281
        %v893 = vunpack.c.l.b16 %v282
        %v894 = vunpack.c.h.b16 %v282
        %v895 = vunpack.c.l.b16 %v283
        %v896 = vunpack.c.h.b16 %v283
        %v897 = vunpack.c.l.b16 %v284
        %v898 = vunpack.c.h.b16 %v284
        %v899 = vunpack.c.l.b16 %v285
        %v900 = vunpack.c.h.b16 %v285
        %v901 = vunpack.c.l.b16 %v286
        %v902 = vunpack.c.h.b16 %v286
        %v903 = vunpack.c.l.b16 %v287
        %v904 = vunpack.c.h.b16 %v287
        %v905 = vunpack.c.l.b16 %v288
        %v906 = vunpack.c.h.b16 %v288
        %v907 = vunpack.c.l.b16 %v289
        %v908 = vunpack.c.h.b16 %v289
        %v909 = vunpack.c.l.b16 %v290
        %v910 = vunpack.c.h.b16 %v290
        %v911 = vunpack.c.l.b16 %v291
        %v912 = vunpack.c.h.b16 %v291
        %v913 = vunpack.c.l.b16 %v292
        %v914 = vunpack.c.h.b16 %v292
        %v915 = vunpack.c.l.b16 %v293
        %v916 = vunpack.c.h.b16 %v293
        %v917 = vunpack.c.l.b16 %v294
        %v918 = vunpack.c.h.b16 %v294
        %v919 = vunpack.c.l.b16 %v295
        %v920 = vunpack.c.h.b16 %v295
        %v921 = vunpack.c.l.b16 %v296
        %v922 = vunpack.c.h.b16 %v296
        %v923 = vunpack.c.l.b16 %v297
        %v924 = vunpack.c.h.b16 %v297
        %v925 = vunpack.c.l.b16 %v298
        %v926 = vunpack.c.h.b16 %v298
        %v927 = vunpack.c.l.b16 %v299
        %v928 = vunpack.c.h.b16 %v299
        %v929 = vunpack.c.l.b16 %v300
        %v930 = vunpack.c.h.b16 %v300
        %v931 = vunpack.c.l.b16 %v301
        %v932 = vunpack.c.h.b16 %v301
        %v933 = vunpack.c.l.b16 %v302
        %v934 = vunpack.c.h.b16 %v302
        %v935 = vunpack.c.l.b16 %v303
        %v936 = vunpack.c.h.b16 %v303
        %v937 = vunpack.c.l.b16 %v304
        %v938 = vunpack.c.h.b16 %v304
        %v939 = vunpack.c.l.b16 %v305
        %v940 = vunpack.c.h.b16 %v305
        %v941 = vunpack.c.l.b16 %v306
        %v942 = vunpack.c.h.b16 %v306
        %v943 = vunpack.c.l.b16 %v307
        %v944 = vunpack.c.h.b16 %v307
        %v945 = vunpack.c.l.b16 %v308
        %v946 = vunpack.c.h.b16 %v308
        %v947 = vunpack.c.l.b16 %v309
        %v948 = vunpack.c.h.b16 %v309
        %v949 = vunpack.c.l.b16 %v310
        %v950 = vunpack.c.h.b16 %v310
        %v951 = vunpack.c.l.b16 %v311
        %v952 = vunpack.c.h.b16 %v311
        %v953 = vunpack.c.l.b16 %v312
        %v954 = vunpack.c.h.b16 %v312
        %v955 = vunpack.c.l.b16 %v313
        %v956 = vunpack.c.h.b16 %v313
        %v957 = vunpack.c.l.b16 %v314
        %v958 = vunpack.c.h.b16 %v314
        %v959 = vunpack.c.l.b16 %v315
        %v960 = vunpack.c.h.b16 %v315
        %v961 = vunpack.c.l.b16 %v316
        %v962 = vunpack.c.h.b16 %v316
        %v963 = vunpack.c.l.b16 %v317
        %v964 = vunpack.c.h.b16 %v317
        %v965 = vunpack.c.l.b16 %v318
        %v966 = vunpack.c.h.b16 %v318
        %v967 = vunpack.c.l.b16 %v319
        %v968 = vunpack.c.h.b16 %v319
        %v969 = vunpack.c.l.b16 %v320
        %v970 = vunpack.c.h.b16 %v320
        %v971 = vunpack.c.l.b16 %v321
        %v972 = vunpack.c.h.b16 %v321
        %v973 = vunpack.c.l.b16 %v322
        %v974 = vunpack.c.h.b16 %v322
        %v975 = vunpack.c.l.b16 %v323
        %v976 = vunpack.c.h.b16 %v323
        %v977 = vunpack.c.l.b16 %v324
        %v978 = vunpack.c.h.b16 %v324
        %v979 = vunpack.c.l.b16 %v325
        %v980 = vunpack.c.h.b16 %v325
        %v981 = vunpack.c.l.b16 %v326
        %v982 = vunpack.c.h.b16 %v326
        %v983 = vunpack.c.l.b16 %v327
        %v984 = vunpack.c.h.b16 %v327
        %v985 = vunpack.c.l.b16 %v328
        %v986 = vunpack.c.h.b16 %v328
        %v987 = vunpack.c.l.b16 %v329
        %v988 = vunpack.c.h.b16 %v329
        %v989 = vunpack.c.l.b16 %v330
        %v990 = vunpack.c.h.b16 %v330
        %v991 = vunpack.c.l.b16 %v331
        %v992 = vunpack.c.h.b16 %v331
        %v993 = vunpack.c.l.b16 %v332
        %v994 = vunpack.c.h.b16 %v332
        %v995 = vunpack.c.l.b16 %v333
        %v996 = vunpack.c.h.b16 %v333
        %v997 = vunpack.c.l.b16 %v334
        %v998 = vunpack.c.h.b16 %v334
        %v999 = vunpack.c.l.b16 %v335
        %v1000 = vunpack.c.h.b16 %v335
        %v1001 = vunpack.c.l.b16 %v336
        %v1002 = vunpack.c.h.b16 %v336
        %v1003 = vunpack.c.l.b16 %v337
        %v1004 = vunpack.c.h.b16 %v337
        %v1005 = vunpack.c.l.b16 %v338
        %v1006 = vunpack.c.h.b16 %v338
        %v1007 = vunpack.c.l.b16 %v339
        %v1008 = vunpack.c.h.b16 %v339
        %v1009 = vunpack.c.l.b16 %v340
        %v1010 = vunpack.c.h.b16 %v340
        %v1011 = vunpack.c.l.b16 %v341
        %v1012 = vunpack.c.h.b16 %v341
        %v1013 = vunpack.c.l.b16 %v342
        %v1014 = vunpack.c.h.b16 %v342
        %v1015 = vunpack.c.l.b16 %v343
        %v1016 = vunpack.c.h.b16 %v343
        %v1017 = vunpack.c.l.b16 %v344
        %v1018 = vunpack.c.h.b16 %v344
        %v1019 = vunpack.c.l.b16 %v345
        %v1020 = vunpack.c.h.b16 %v345
        %v1021 = vunpack.c.l.b16 %v346
        %v1022 = vunpack.c.h.b16 %v346
        %v1023 = vunpack.c.l.b16 %v347
        %v1024 = vunpack.c.h.b16 %v347
        %v1025 = vunpack.c.l.b16 %v348
        %v1026 = vunpack.c.h.b16 %v348
        %v1027 = vunpack.c.l.b16 %v349
        %v1028 = vunpack.c.h.b16 %v349
        %v1029 = vunpack.c.l.b16 %v350
        %v1030 = vunpack.c.h.b16 %v350
        %v1031 = vunpack.c.l.b16 %v351
        %v1032 = vunpack.c.h.b16 %v351
        %v1033 = vunpack.c.l.b16 %v352
        %v1034 = vunpack.c.h.b16 %v352
        %v1035 = vunpack.c.l.b16 %v353
        %v1036 = vunpack.c.h.b16 %v353
        %v1037 = vunpack.c.l.b16 %v354
        %v1038 = vunpack.c.h.b16 %v354
        %v1039 = vunpack.c.l.b16 %v355
        %v1040 = vunpack.c.h.b16 %v355
        %v1041 = vunpack.c.l.b16 %v356
        %v1042 = vunpack.c.h.b16 %v356
        %v1043 = vunpack.c.l.b16 %v357
        %v1044 = vunpack.c.h.b16 %v357
        %v1045 = vunpack.c.l.b16 %v358
        %v1046 = vunpack.c.h.b16 %v358
        %v1047 = vunpack.c.l.b16 %v359
        %v1048 = vunpack.c.h.b16 %v359
        %v1049 = vunpack.c.l.b16 %v360
        %v1050 = vunpack.c.h.b16 %v360
        %v1051 = vunpack.c.l.b16 %v361
        %v1052 = vunpack.c.h.b16 %v361
        %v1053 = vunpack.c.l.b16 %v362
        %v1054 = vunpack.c.h.b16 %v362
        %v1055 = vunpack.c.l.b16 %v363
        %v1056 = vunpack.c.h.b16 %v363
        %v1057 = vunpack.c.l.b16 %v364
        %v1058 = vunpack.c.h.b16 %v364
        %v1059 = vunpack.c.l.b16 %v365
        %v1060 = vunpack.c.h.b16 %v365
        %v1061 = vunpack.c.l.b16 %v366
        %v1062 = vunpack.c.h.b16 %v366
        %v1063 = vunpack.c.l.b16 %v367
        %v1064 = vunpack.c.h.b16 %v367
        %v1065 = vunpack.c.l.b16 %v368
        %v1066 = vunpack.c.h.b16 %v368
        %v1067 = vunpack.c.l.b16 %v369
        %v1068 = vunpack.c.h.b16 %v369
        %v1069 = vunpack.c.l.b16 %v370
        %v1070 = vunpack.c.h.b16 %v370
        %v1071 = vunpack.c.l.b16 %v371
        %v1072 = vunpack.c.h.b16 %v371
        %v1073 = vunpack.c.l.b16 %v372
        %v1074 = vunpack.c.h.b16 %v372
        %v1075 = vunpack.c.l.b16 %v373
        %v1076 = vunpack.c.h.b16 %v373
        %v1077 = vunpack.c.l.b16 %v374
        %v1078 = vunpack.c.h.b16 %v374
        %v1079 = vunpack.c.l.b16 %v375
        %v1080 = vunpack.c.h.b16 %v375
        %v1081 = vunpack.c.l.b16 %v376
        %v1082 = vunpack.c.h.b16 %v376
        %v1083 = vunpack.c.l.b16 %v377
        %v1084 = vunpack.c.h.b16 %v377
        %v1085 = vunpack.c.l.b16 %v378
        %v1086 = vunpack.c.h.b16 %v378
        %v1087 = vunpack.c.l.b16 %v379
        %v1088 = vunpack.c.h.b16 %v379
        %v1089 = vunpack.c.l.b16 %v380
        %v1090 = vunpack.c.h.b16 %v380
        %v1091 = vunpack.c.l.b16 %v381
        %v1092 = vunpack.c.h.b16 %v381
        %v1093 = vunpack.c.l.b16 %v382
        %v1094 = vunpack.c.h.b16 %v382
        %v1095 = vunpack.c.l.b16 %v383
        %v1096 = vunpack.c.h.b16 %v383
        %v1097 = vunpack.c.l.b16 %v384
        %v1098 = vunpack.c.h.b16 %v384
        %v1099 = vunpack.c.l.b16 %v385
        %v1100 = vunpack.c.h.b16 %v385
        %v1101 = vunpack.c.l.b16 %v386
        %v1102 = vunpack.c.h.b16 %v386
        %v1103 = vunpack.c.l.b16 %v387
        %v1104 = vunpack.c.h.b16 %v387
        %v1105 = vunpack.c.l.b16 %v388
        %v1106 = vunpack.c.h.b16 %v388
        %v1107 = vunpack.c.l.b16 %v389
        %v1108 = vunpack.c.h.b16 %v389
        %v1109 = vunpack.c.l.b16 %v390
        %v1110 = vunpack.c.h.b16 %v390
        %v1111 = vunpack.c.l.b16 %v391
        %v1112 = vunpack.c.h.b16 %v391
        %v1113 = vunpack.c.l.b16 %v392
        %v1114 = vunpack.c.h.b16 %v392
        %v1115 = vunpack.c.l.b16 %v393
        %v1116 = vunpack.c.h.b16 %v393
        %v1117 = vunpack.c.l.b16 %v394
        %v1118 = vunpack.c.h.b16 %v394
        %v1119 = vunpack.c.l.b16 %v395
        %v1120 = vunpack.c.h.b16 %v395
        %v1121 = vunpack.c.l.b16 %v396
        %v1122 = vunpack.c.h.b16 %v396
        %v1123 = vunpack.c.l.b16 %v397
        %v1124 = vunpack.c.h.b16 %v397
        %v1125 = vunpack.c.l.b16 %v398
        %v1126 = vunpack.c.h.b16 %v398
        %v1127 = vunpack.c.l.b16 %v399
        %v1128 = vunpack.c.h.b16 %v399
        %v1129 = vunpack.c.l.b16 %v400
        %v1130 = vunpack.c.h.b16 %v400
        %v1131 = vunpack.c.l.b16 %v401
        %v1132 = vunpack.c.h.b16 %v401
        %v1133 = vunpack.c.l.b16 %v402
        %v1134 = vunpack.c.h.b16 %v402
        %v1135 = vunpack.c.l.b16 %v403
        %v1136 = vunpack.c.h.b16 %v403
        %v1137 = vunpack.c.l.b16 %v404
        %v1138 = vunpack.c.h.b16 %v404
        %v1139 = vunpack.c.l.b16 %v405
        %v1140 = vunpack.c.h.b16 %v405
        %v1141 = vunpack.c.l.b16 %v406
        %v1142 = vunpack.c.h.b16 %v406
        %v1143 = vunpack.c.l.b16 %v407
        %v1144 = vunpack.c.h.b16 %v407
        %v1145 = vunpack.c.l.b16 %v408
        %v1146 = vunpack.c.h.b16 %v408
        %v1147 = vunpack.c.l.b16 %v409
        %v1148 = vunpack.c.h.b16 %v409
        %v1149 = vunpack.c.l.b16 %v410
        %v1150 = vunpack.c.h.b16 %v410
        %v1151 = vunpack.c.l.b16 %v411
        %v1152 = vunpack.c.h.b16 %v411
        %v1153 = vunpack.c.l.b16 %v412
        %v1154 = vunpack.c.h.b16 %v412
        %v1155 = vunpack.c.l.b16 %v413
        %v1156 = vunpack.c.h.b16 %v413
        %v1157 = vunpack.c.l.b16 %v414
        %v1158 = vunpack.c.h.b16 %v414
        %v1159 = vunpack.c.l.b16 %v415
        %v1160 = vunpack.c.h.b16 %v415
        %v1161 = vunpack.c.l.b16 %v416
        %v1162 = vunpack.c.h.b16 %v416
        %v1163 = vunpack.c.l.b16 %v417
        %v1164 = vunpack.c.h.b16 %v417
        %v1165 = vunpack.c.l.b16 %v418
        %v1166 = vunpack.c.h.b16 %v418
        %v1167 = vunpack.c.l.b16 %v419
        %v1168 = vunpack.c.h.b16 %v419
        %v1169 = vunpack.c.l.b16 %v420
        %v1170 = vunpack.c.h.b16 %v420
        %v1171 = vunpack.c.l.b16 %v421
        %v1172 = vunpack.c.h.b16 %v421
        %v1173 = vunpack.c.l.b16 %v422
        %v1174 = vunpack.c.h.b16 %v422
        %v1175 = vunpack.c.l.b16 %v423
        %v1176 = vunpack.c.h.b16 %v423
        %v1177 = vunpack.c.l.b16 %v424
        %v1178 = vunpack.c.h.b16 %v424
        %v1179 = vunpack.c.l.b16 %v425
        %v1180 = vunpack.c.h.b16 %v425
        %v1181 = vunpack.c.l.b16 %v426
        %v1182 = vunpack.c.h.b16 %v426
        %v1183 = vunpack.c.l.b16 %v427
        %v1184 = vunpack.c.h.b16 %v427
        %v1185 = vunpack.c.l.b16 %v428
        %v1186 = vunpack.c.h.b16 %v428
        %v1187 = vunpack.c.l.b16 %v429
        %v1188 = vunpack.c.h.b16 %v429
        %v1189 = vunpack.c.l.b16 %v430
        %v1190 = vunpack.c.h.b16 %v430
        %v1191 = vunpack.c.l.b16 %v431
        %v1192 = vunpack.c.h.b16 %v431
        %v1193 = vunpack.c.l.b16 %v432
        %v1194 = vunpack.c.h.b16 %v432
        %v1195 = vunpack.c.l.b16 %v433
        %v1196 = vunpack.c.h.b16 %v433
        %v1197 = vunpack.c.l.b16 %v434
        %v1198 = vunpack.c.h.b16 %v434
        %v1199 = vunpack.c.l.b16 %v435
        %v1200 = vunpack.c.h.b16 %v435
        %v1201 = vunpack.c.l.b16 %v436
        %v1202 = vunpack.c.h.b16 %v436
        %v1203 = vunpack.c.l.b16 %v437
        %v1204 = vunpack.c.h.b16 %v437
        %v1205 = vunpack.c.l.b16 %v438
        %v1206 = vunpack.c.h.b16 %v438
        %v1207 = vunpack.c.l.b16 %v439
        %v1208 = vunpack.c.h.b16 %v439
        %v1209 = vunpack.c.l.b16 %v440
        %v1210 = vunpack.c.h.b16 %v440
        %v1211 = vunpack.c.l.b16 %v441
        %v1212 = vunpack.c.h.b16 %v441
        %v1213 = vunpack.c.l.b16 %v442
        %v1214 = vunpack.c.h.b16 %v442
        %v1215 = vunpack.c.l.b16 %v443
        %v1216 = vunpack.c.h.b16 %v443
        %v1217 = vunpack.c.l.b16 %v444
        %v1218 = vunpack.c.h.b16 %v444
        %v1219 = vunpack.c.l.b16 %v445
        %v1220 = vunpack.c.h.b16 %v445
        %v1221 = vunpack.c.l.b16 %v446
        %v1222 = vunpack.c.h.b16 %v446
        %v1223 = vunpack.c.l.b16 %v447
        %v1224 = vunpack.c.h.b16 %v447
        %v1225 = vunpack.c.l.b16 %v448
        %v1226 = vunpack.c.h.b16 %v448
        %v1227 = vunpack.c.l.b16 %v449
        %v1228 = vunpack.c.h.b16 %v449
        %v1229 = vunpack.c.l.b16 %v450
        %v1230 = vunpack.c.h.b16 %v450
        %v1231 = vunpack.c.l.b16 %v451
        %v1232 = vunpack.c.h.b16 %v451
        %v1233 = vunpack.c.l.b16 %v452
        %v1234 = vunpack.c.h.b16 %v452
        %v1235 = vunpack.c.l.b16 %v453
        %v1236 = vunpack.c.h.b16 %v453
        %v1237 = vunpack.c.l.b16 %v454
        %v1238 = vunpack.c.h.b16 %v454
        %v1239 = vunpack.c.l.b16 %v455
        %v1240 = vunpack.c.h.b16 %v455
        %v1241 = vunpack.c.l.b16 %v456
        %v1242 = vunpack.c.h.b16 %v456
        %v1243 = vunpack.c.l.b16 %v457
        %v1244 = vunpack.c.h.b16 %v457
        %v1245 = vunpack.c.l.b16 %v458
        %v1246 = vunpack.c.h.b16 %v458
        %v1247 = vunpack.c.l.b16 %v459
        %v1248 = vunpack.c.h.b16 %v459
        %v1249 = vunpack.c.l.b16 %v460
        %v1250 = vunpack.c.h.b16 %v460
        %v1251 = vunpack.c.l.b16 %v461
        %v1252 = vunpack.c.h.b16 %v461
        %v1253 = vunpack.c.l.b16 %v462
        %v1254 = vunpack.c.h.b16 %v462
        %v1255 = vunpack.c.l.b16 %v463
        %v1256 = vunpack.c.h.b16 %v463
        %v1257 = vunpack.c.l.b16 %v464
        %v1258 = vunpack.c.h.b16 %v464
        %v1259 = vunpack.c.l.b16 %v465
        %v1260 = vunpack.c.h.b16 %v465
        %v1261 = vunpack.c.l.b16 %v466
        %v1262 = vunpack.c.h.b16 %v466
        %v1263 = vunpack.c.l.b16 %v467
        %v1264 = vunpack.c.h.b16 %v467
        %v1265 = vunpack.c.l.b16 %v468
        %v1266 = vunpack.c.h.b16 %v468
        %v1267 = vunpack.c.l.b16 %v469
        %v1268 = vunpack.c.h.b16 %v469
        %v1269 = vunpack.c.l.b16 %v470
        %v1270 = vunpack.c.h.b16 %v470
        %v1271 = vunpack.c.l.b16 %v471
        %v1272 = vunpack.c.h.b16 %v471
        %v1273 = vunpack.c.l.b16 %v472
        %v1274 = vunpack.c.h.b16 %v472
        %v1275 = vunpack.c.l.b16 %v473
        %v1276 = vunpack.c.h.b16 %v473
        %v1277 = vunpack.c.l.b16 %v474
        %v1278 = vunpack.c.h.b16 %v474
        %v1279 = vunpack.c.l.b16 %v475
        %v1280 = vunpack.c.h.b16 %v475
        %v1281 = vunpack.c.l.b16 %v476
        %v1282 = vunpack.c.h.b16 %v476
        %v1283 = vunpack.c.l.b16 %v477
        %v1284 = vunpack.c.h.b16 %v477
        %v1285 = vunpack.c.l.b16 %v478
        %v1286 = vunpack.c.h.b16 %v478
        %v1287 = vunpack.c.l.b16 %v479
        %v1288 = vunpack.c.h.b16 %v479
        %v1289 = vunpack.c.l.b16 %v480
        %v1290 = vunpack.c.h.b16 %v480
        %v1291 = vunpack.c.l.b16 %v481
        %v1292 = vunpack.c.h.b16 %v481
        %v1293 = vunpack.c.l.b16 %v482
        %v1294 = vunpack.c.h.b16 %v482
        %v1295 = vunpack.c.l.b16 %v483
        %v1296 = vunpack.c.h.b16 %v483
        %v1297 = vunpack.c.l.b16 %v484
        %v1298 = vunpack.c.h.b16 %v484
        %v1299 = vunpack.c.l.b16 %v485
        %v1300 = vunpack.c.h.b16 %v485
        %v1301 = vunpack.c.l.b16 %v486
        %v1302 = vunpack.c.h.b16 %v486
        %v1303 = vunpack.c.l.b16 %v487
        %v1304 = vunpack.c.h.b16 %v487
        %v1305 = vunpack.c.l.b16 %v488
        %v1306 = vunpack.c.h.b16 %v488
        %v1307 = vunpack.c.l.b16 %v489
        %v1308 = vunpack.c.h.b16 %v489
        %v1309 = vunpack.c.l.b16 %v490
        %v1310 = vunpack.c.h.b16 %v490
        %v1311 = vunpack.c.l.b16 %v491
        %v1312 = vunpack.c.h.b16 %v491
        %v1313 = vunpack.c.l.b16 %v492
        %v1314 = vunpack.c.h.b16 %v492
        %v1315 = vunpack.c.l.b16 %v493
        %v1316 = vunpack.c.h.b16 %v493
        %v1317 = vunpack.c.l.b16 %v494
        %v1318 = vunpack.c.h.b16 %v494
        %v1319 = vunpack.c.l.b16 %v495
        %v1320 = vunpack.c.h.b16 %v495
        %v1321 = vunpack.c.l.b16 %v496
        %v1322 = vunpack.c.h.b16 %v496
        %v1323 = vunpack.c.l.b16 %v497
        %v1324 = vunpack.c.h.b16 %v497
        %v1325 = vunpack.c.l.b16 %v498
        %v1326 = vunpack.c.h.b16 %v498
        %v1327 = vunpack.c.l.b16 %v499
        %v1328 = vunpack.c.h.b16 %v499
        %v1329 = vunpack.c.l.b16 %v500
        %v1330 = vunpack.c.h.b16 %v500
        %v1331 = vunpack.c.l.b16 %v501
        %v1332 = vunpack.c.h.b16 %v501
        %v1333 = vunpack.c.l.b16 %v502
        %v1334 = vunpack.c.h.b16 %v502
        %v1335 = vunpack.c.l.b16 %v503
        %v1336 = vunpack.c.h.b16 %v503
        %v1337 = vunpack.c.l.b16 %v504
        %v1338 = vunpack.c.h.b16 %v504
        %v1339 = vunpack.c.l.b16 %v505
        %v1340 = vunpack.c.h.b16 %v505
        %v1341 = vunpack.c.l.b16 %v506
        %v1342 = vunpack.c.h.b16 %v506
        %v1343 = vunpack.c.l.b16 %v507
        %v1344 = vunpack.c.h.b16 %v507
        %v1345 = vunpack.c.l.b16 %v508
        %v1346 = vunpack.c.h.b16 %v508
        %v1347 = vunpack.c.l.b16 %v509
        %v1348 = vunpack.c.h.b16 %v509
        %v1349 = vunpack.c.l.b16 %v510
        %v1350 = vunpack.c.h.b16 %v510
        %v1351 = vunpack.c.l.b16 %v511
        %v1352 = vunpack.c.h.b16 %v511
        %v1353 = vunpack.c.l.b16 %v512
        %v1354 = vunpack.c.h.b16 %v512
        %v1355 = vunpack.c.l.b16 %v513
        %v1356 = vunpack.c.h.b16 %v513
        %v1357 = vunpack.c.l.b16 %v514
        %v1358 = vunpack.c.h.b16 %v514
        %v1359 = vunpack.c.l.b16 %v515
        %v1360 = vunpack.c.h.b16 %v515
        %v1361 = vunpack.c.l.b16 %v516
        %v1362 = vunpack.c.h.b16 %v516
        %v1363 = vunpack.c.l.b16 %v517
        %v1364 = vunpack.c.h.b16 %v517
        %v1365 = vunpack.c.l.b16 %v518
        %v1366 = vunpack.c.h.b16 %v518
        %v1367 = vunpack.c.l.b16 %v519
        %v1368 = vunpack.c.h.b16 %v519
        %v1369 = vunpack.c.l.b16 %v520
        %v1370 = vunpack.c.h.b16 %v520
        %v1371 = vunpack.c.l.b16 %v521
        %v1372 = vunpack.c.h.b16 %v521
        %v1373 = vunpack.c.l.b16 %v522
        %v1374 = vunpack.c.h.b16 %v522
        %v1375 = vunpack.c.l.b16 %v523
        %v1376 = vunpack.c.h.b16 %v523
        %v1377 = vunpack.c.l.b16 %v524
        %v1378 = vunpack.c.h.b16 %v524
        %v1379 = vunpack.c.l.b16 %v525
        %v1380 = vunpack.c.h.b16 %v525
        %v1381 = vunpack.c.l.b16 %v526
        %v1382 = vunpack.c.h.b16 %v526
        %v1383 = vunpack.c.l.b16 %v527
        %v1384 = vunpack.c.h.b16 %v527
        %v1385 = vunpack.c.l.b16 %v528
        %v1386 = vunpack.c.h.b16 %v528
        %v1387 = vunpack.c.l.b16 %v529
        %v1388 = vunpack.c.h.b16 %v529
        %v1389 = vunpack.c.l.b16 %v530
        %v1390 = vunpack.c.h.b16 %v530
        %v1391 = vunpack.c.l.b16 %v531
        %v1392 = vunpack.c.h.b16 %v531
        %v1393 = vunpack.c.l.b16 %v532
        %v1394 = vunpack.c.h.b16 %v532
        %v1395 = vunpack.c.l.b16 %v533
        %v1396 = vunpack.c.h.b16 %v533
        %v1397 = vunpack.c.l.b16 %v534
        %v1398 = vunpack.c.h.b16 %v534
        %v1399 = vunpack.c.l.b16 %v535
        %v1400 = vunpack.c.h.b16 %v535
        %v1401 = vunpack.c.l.b16 %v536
        %v1402 = vunpack.c.h.b16 %v536
        %v1403 = vunpack.c.l.b16 %v537
        %v1404 = vunpack.c.h.b16 %v537
        %v1405 = vunpack.c.l.b16 %v538
        %v1406 = vunpack.c.h.b16 %v538
        %v1407 = vunpack.c.l.b16 %v539
        %v1408 = vunpack.c.h.b16 %v539
        %v1409 = vunpack.c.l.b16 %v540
        %v1410 = vunpack.c.h.b16 %v540
        %v1411 = vunpack.c.l.b16 %v541
        %v1412 = vunpack.c.h.b16 %v541
        %v1413 = vunpack.c.l.b16 %v542
        %v1414 = vunpack.c.h.b16 %v542
        %v1415 = vunpack.c.l.b16 %v543
        %v1416 = vunpack.c.h.b16 %v543
        %v1417 = vunpack.c.l.b16 %v544
        %v1418 = vunpack.c.h.b16 %v544
        %v1419 = vunpack.c.l.b16 %v545
        %v1420 = vunpack.c.h.b16 %v545
        %v1421 = vunpack.c.l.b16 %v546
        %v1422 = vunpack.c.h.b16 %v546
        %v1423 = vunpack.c.l.b16 %v547
        %v1424 = vunpack.c.h.b16 %v547
        %v1425 = vunpack.c.l.b16 %v548
        %v1426 = vunpack.c.h.b16 %v548
        %v1427 = vunpack.c.l.b16 %v549
        %v1428 = vunpack.c.h.b16 %v549
        %v1429 = vunpack.c.l.b16 %v550
        %v1430 = vunpack.c.h.b16 %v550
        %v1431 = vpack.c.b16 %v867, %v855
        %v1432 = vpack.c.b16 %v868, %v856
        %v1433 = vpack.c.b16 %v869, %v857
        %v1434 = vpack.c.b16 %v870, %v858
        %v1435 = vpack.c.b16 %v871, %v859
        %v1436 = vpack.c.b16 %v872, %v860
        %v1437 = vpack.c.b16 %v873, %v861
        %v1438 = vpack.c.b16 %v874, %v862
        %v1439 = vpack.c.b16 %v875, %v863
        %v1440 = vpack.c.b16 %v876, %v864
        %v1441 = vpack.c.b16 %v877, %v865
        %v1442 = vpack.c.b16 %v878, %v866
        %v1443 = vpack.c.b16 %v891, %v879
        %v1444 = vpack.c.b16 %v892, %v880
        %v1445 = vpack.c.b16 %v893, %v881
        %v1446 = vpack.c.b16 %v894, %v882
        %v1447 = vpack.c.b16 %v895, %v883
        %v1448 = vpack.c.b16 %v896, %v884
        %v1449 = vpack.c.b16 %v897, %v885
        %v1450 = vpack.c.b16 %v898, %v886
        %v1451 = vpack.c.b16 %v899, %v887
        %v1452 = vpack.c.b16 %v900, %v888
        %v1453 = vpack.c.b16 %v901, %v889
        %v1454 = vpack.c.b16 %v902, %v890
        %v1455 = vpack.c.b16 %v915, %v903
        %v1456 = vpack.c.b16 %v916, %v904
        %v1457 = vpack.c.b16 %v917, %v905
        %v1458 = vpack.c.b16 %v918, %v906
        %v1459 = vpack.c.b16 %v919, %v907
        %v1460 = vpack.c.b16 %v920, %v908
        %v1461 = vpack.c.b16 %v921, %v909
        %v1462 = vpack.c.b16 %v922, %v910
        %v1463 = vpack.c.b16 %v923, %v911
        %v1464 = vpack.c.b16 %v924, %v912
        %v1465 = vpack.c.b16 %v925, %v913
        %v1466 = vpack.c.b16 %v926, %v914
        %v1467 = vpack.c.b16 %v939, %v927
        %v1468 = vpack.c.b16 %v940, %v928
        %v1469 = vpack.c.b16 %v941, %v929
        %v1470 = vpack.c.b16 %v942, %v930
        %v1471 = vpack.c.b16 %v943, %v931
        %v1472 = vpack.c.b16 %v944, %v932
        %v1473 = vpack.c.b16 %v945, %v933
        %v1474 = vpack.c.b16 %v946, %v934
        %v1475 = vpack.c.b16 %v947, %v935
        %v1476 = vpack.c.b16 %v948, %v936
        %v1477 = vpack.c.b16 %v949, %v937
        %v1478 = vpack.c.b16 %v950, %v938
        %v1479 = vpack.c.b16 %v963, %v951
        %v1480 = vpack.c.b16 %v964, %v952
        %v1481 = vpack.c.b16 %v965, %v953
        %v1482 = vpack.c.b16 %v966, %v954
        %v1483 = vpack.c.b16 %v967, %v955
        %v1484 = vpack.c.b16 %v968, %v956
        %v1485 = vpack.c.b16 %v969, %v957
        %v1486 = vpack.c.b16 %v970, %v958
        %v1487 = vpack.c.b16 %v971, %v959
        %v1488 = vpack.c.b16 %v972, %v960
        %v1489 = vpack.c.b16 %v973, %v961
        %v1490 = vpack.c.b16 %v974, %v962
        %v1491 = vpack.c.b16 %v987, %v975
        %v1492 = vpack.c.b16 %v988, %v976
        %v1493 = vpack.c.b16 %v989, %v977
        %v1494 = vpack.c.b16 %v990, %v978
        %v1495 = vpack.c.b16 %v991, %v979
        %v1496 = vpack.c.b16 %v992, %v980
        %v1497 = vpack.c.b16 %v993, %v981
        %v1498 = vpack.c.b16 %v994, %v982
        %v1499 = vpack.c.b16 %v995, %v983
        %v1500 = vpack.c.b16 %v996, %v984
        %v1501 = vpack.c.b16 %v997, %v985
        %v1502 = vpack.c.b16 %v998, %v986
        %v1503 = vpack.c.b16 %v1011, %v999
        %v1504 = vpack.c.b16 %v1012, %v1000
        %v1505 = vpack.c.b16 %v1013, %v1001
        %v1506 = vpack.c.b16 %v1014, %v1002
        %v1507 = vpack.c.b16 %v1015, %v1003
        %v1508 = vpack.c.b16 %v1016, %v1004
        %v1509 = vpack.c.b16 %v1017, %v1005
        %v1510 = vpack.c.b16 %v1018, %v1006
        %v1511 = vpack.c.b16 %v1019, %v1007
        %v1512 = vpack.c.b16 %v1020, %v1008
        %v1513 = vpack.c.b16 %v1021, %v1009
        %v1514 = vpack.c.b16 %v1022, %v1010
        %v1515 = vpack.c.b16 %v1035, %v1023
        %v1516 = vpack.c.b16 %v1036, %v1024
        %v1517 = vpack.c.b16 %v1037, %v1025
        %v1518 = vpack.c.b16 %v1038, %v1026
        %v1519 = vpack.c.b16 %v1039, %v1027
        %v1520 = vpack.c.b16 %v1040, %v1028
        %v1521 = vpack.c.b16 %v1041, %v1029
        %v1522 = vpack.c.b16 %v1042, %v1030
        %v1523 = vpack.c.b16 %v1043, %v1031
        %v1524 = vpack.c.b16 %v1044, %v1032
        %v1525 = vpack.c.b16 %v1045, %v1033
        %v1526 = vpack.c.b16 %v1046, %v1034
        %v1527 = vpack.c.b16 %v1059, %v1047
        %v1528 = vpack.c.b16 %v1060, %v1048
        %v1529 = vpack.c.b16 %v1061, %v1049
        %v1530 = vpack.c.b16 %v1062, %v1050
        %v1531 = vpack.c.b16 %v1063, %v1051
        %v1532 = vpack.c.b16 %v1064, %v1052
        %v1533 = vpack.c.b16 %v1065, %v1053
        %v1534 = vpack.c.b16 %v1066, %v1054
        %v1535 = vpack.c.b16 %v1067, %v1055
        %v1536 = vpack.c.b16 %v1068, %v1056
        %v1537 = vpack.c.b16 %v1069, %v1057
        %v1538 = vpack.c.b16 %v1070, %v1058
        %v1539 = vpack.c.b16 %v1083, %v1071
        %v1540 = vpack.c.b16 %v1084, %v1072
        %v1541 = vpack.c.b16 %v1085, %v1073
        %v1542 = vpack.c.b16 %v1086, %v1074
        %v1543 = vpack.c.b16 %v1087, %v1075
        %v1544 = vpack.c.b16 %v1088, %v1076
        %v1545 = vpack.c.b16 %v1089, %v1077
        %v1546 = vpack.c.b16 %v1090, %v1078
        %v1547 = vpack.c.b16 %v1091, %v1079
        %v1548 = vpack.c.b16 %v1092, %v1080
        %v1549 = vpack.c.b16 %v1093, %v1081
        %v1550 = vpack.c.b16 %v1094, %v1082
        %v1551 = vpack.c.b16 %v1107, %v1095
        %v1552 = vpack.c.b16 %v1108, %v1096
        %v1553 = vpack.c.b16 %v1109, %v1097
        %v1554 = vpack.c.b16 %v1110, %v1098
        %v1555 = vpack.c.b16 %v1111, %v1099
        %v1556 = vpack.c.b16 %v1112, %v1100
        %v1557 = vpack.c.b16 %v1113, %v1101
        %v1558 = vpack.c.b16 %v1114, %v1102
        %v1559 = vpack.c.b16 %v1115, %v1103
        %v1560 = vpack.c.b16 %v1116, %v1104
        %v1561 = vpack.c.b16 %v1117, %v1105
        %v1562 = vpack.c.b16 %v1118, %v1106
        %v1563 = vpack.c.b16 %v1131, %v1119
        %v1564 = vpack.c.b16 %v1132, %v1120
        %v1565 = vpack.c.b16 %v1133, %v1121
        %v1566 = vpack.c.b16 %v1134, %v1122
        %v1567 = vpack.c.b16 %v1135, %v1123
        %v1568 = vpack.c.b16 %v1136, %v1124
        %v1569 = vpack.c.b16 %v1137, %v1125
        %v1570 = vpack.c.b16 %v1138, %v1126
        %v1571 = vpack.c.b16 %v1139, %v1127
        %v1572 = vpack.c.b16 %v1140, %v1128
        %v1573 = vpack.c.b16 %v1141, %v1129
        %v1574 = vpack.c.b16 %v1142, %v1130
        %v1575 = vpack.c.b16 %v1155, %v1143
        %v1576 = vpack.c.b16 %v1156, %v1144
        %v1577 = vpack.c.b16 %v1157, %v1145
        %v1578 = vpack.c.b16 %v1158, %v1146
        %v1579 = vpack.c.b16 %v1159, %v1147
        %v1580 = vpack.c.b16 %v1160, %v1148
        %v1581 = vpack.c.b16 %v1161, %v1149
        %v1582 = vpack.c.b16 %v1162, %v1150
        %v1583 = vpack.c.b16 %v1163, %v1151
        %v1584 = vpack.c.b16 %v1164, %v1152
        %v1585 = vpack.c.b16 %v1165, %v1153
        %v1586 = vpack.c.b16 %v1166, %v1154
        %v1587 = vpack.c.b16 %v1179, %v1167
        %v1588 = vpack.c.b16 %v1180, %v1168
        %v1589 = vpack.c.b16 %v1181, %v1169
        %v1590 = vpack.c.b16 %v1182, %v1170
        %v1591 = vpack.c.b16 %v1183, %v1171
        %v1592 = vpack.c.b16 %v1184, %v1172
        %v1593 = vpack.c.b16 %v1185, %v1173
        %v1594 = vpack.c.b16 %v1186, %v1174
        %v1595 = vpack.c.b16 %v1187, %v1175
        %v1596 = vpack.c.b16 %v1188, %v1176
        %v1597 = vpack.c.b16 %v1189, %v1177
        %v1598 = vpack.c.b16 %v1190, %v1178
        %v1599 = vpack.c.b16 %v1203, %v1191
        %v1600 = vpack.c.b16 %v1204, %v1192
        %v1601 = vpack.c.b16 %v1205, %v1193
        %v1602 = vpack.c.b16 %v1206, %v1194
        %v1603 = vpack.c.b16 %v1207, %v1195
        %v1604 = vpack.c.b16 %v1208, %v1196
        %v1605 = vpack.c.b16 %v1209, %v1197
        %v1606 = vpack.c.b16 %v1210, %v1198
        %v1607 = vpack.c.b16 %v1211, %v1199
        %v1608 = vpack.c.b16 %v1212, %v1200
        %v1609 = vpack.c.b16 %v1213, %v1201
        %v1610 = vpack.c.b16 %v1214, %v1202
        %v1611 = vpack.c.b16 %v1227, %v1215
        %v1612 = vpack.c.b16 %v1228, %v1216
        %v1613 = vpack.c.b16 %v1229, %v1217
        %v1614 = vpack.c.b16 %v1230, %v1218
        %v1615 = vpack.c.b16 %v1231, %v1219
        %v1616 = vpack.c.b16 %v1232, %v1220
        %v1617 = vpack.c.b16 %v1233, %v1221
        %v1618 = vpack.c.b16 %v1234, %v1222
        %v1619 = vpack.c.b16 %v1235, %v1223
        %v1620 = vpack.c.b16 %v1236, %v1224
        %v1621 = vpack.c.b16 %v1237, %v1225
        %v1622 = vpack.c.b16 %v1238, %v1226
        %v1623 = vpack.c.b16 %v1251, %v1239
        %v1624 = vpack.c.b16 %v1252, %v1240
        %v1625 = vpack.c.b16 %v1253, %v1241
        %v1626 = vpack.c.b16 %v1254, %v1242
        %v1627 = vpack.c.b16 %v1255, %v1243
        %v1628 = vpack.c.b16 %v1256, %v1244
        %v1629 = vpack.c.b16 %v1257, %v1245
        %v1630 = vpack.c.b16 %v1258, %v1246
        %v1631 = vpack.c.b16 %v1259, %v1247
        %v1632 = vpack.c.b16 %v1260, %v1248
        %v1633 = vpack.c.b16 %v1261, %v1249
        %v1634 = vpack.c.b16 %v1262, %v1250
        %v1635 = vpack.c.b16 %v1275, %v1263
        %v1636 = vpack.c.b16 %v1276, %v1264
        %v1637 = vpack.c.b16 %v1277, %v1265
        %v1638 = vpack.c.b16 %v1278, %v1266
        %v1639 = vpack.c.b16 %v1279, %v1267
        %v1640 = vpack.c.b16 %v1280, %v1268
        %v1641 = vpack.c.b16 %v1281, %v1269
        %v1642 = vpack.c.b16 %v1282, %v1270
        %v1643 = vpack.c.b16 %v1283, %v1271
        %v1644 = vpack.c.b16 %v1284, %v1272
        %v1645 = vpack.c.b16 %v1285, %v1273
        %v1646 = vpack.c.b16 %v1286, %v1274
        %v1647 = vpack.c.b16 %v1299, %v1287
        %v1648 = vpack.c.b16 %v1300, %v1288
        %v1649 = vpack.c.b16 %v1301, %v1289
        %v1650 = vpack.c.b16 %v1302, %v1290
        %v1651 = vpack.c.b16 %v1303, %v1291
        %v1652 = vpack.c.b16 %v1304, %v1292
        %v1653 = vpack.c.b16 %v1305, %v1293
        %v1654 = vpack.c.b16 %v1306, %v1294
        %v1655 = vpack.c.b16 %v1307, %v1295
        %v1656 = vpack.c.b16 %v1308, %v1296
        %v1657 = vpack.c.b16 %v1309, %v1297
        %v1658 = vpack.c.b16 %v1310, %v1298
        %v1659 = vpack.c.b16 %v1323, %v1311
        %v1660 = vpack.c.b16 %v1324, %v1312
        %v1661 = vpack.c.b16 %v1325, %v1313
        %v1662 = vpack.c.b16 %v1326, %v1314
        %v1663 = vpack.c.b16 %v1327, %v1315
        %v1664 = vpack.c.b16 %v1328, %v1316
        %v1665 = vpack.c.b16 %v1329, %v1317
        %v1666 = vpack.c.b16 %v1330, %v1318
        %v1667 = vpack.c.b16 %v1331, %v1319
        %v1668 = vpack.c.b16 %v1332, %v1320
        %v1669 = vpack.c.b16 %v1333, %v1321
        %v1670 = vpack.c.b16 %v1334, %v1322
        %v1671 = vpack.c.b16 %v1347, %v1335
        %v1672 = vpack.c.b16 %v1348, %v1336
        %v1673 = vpack.c.b16 %v1349, %v1337
        %v1674 = vpack.c.b16 %v1350, %v1338
        %v1675 = vpack.c.b16 %v1351, %v1339
        %v1676 = vpack.c.b16 %v1352, %v1340
        %v1677 = vpack.c.b16 %v1353, %v1341
        %v1678 = vpack.c.b16 %v1354, %v1342
        %v1679 = vpack.c.b16 %v1355, %v1343
        %v1680 = vpack.c.b16 %v1356, %v1344
        %v1681 = vpack.c.b16 %v1357, %v1345
        %v1682 = vpack.c.b16 %v1358, %v1346
        %v1683 = vpack.c.b16 %v1371, %v1359
        %v1684 = vpack.c.b16 %v1372, %v1360
        %v1685 = vpack.c.b16 %v1373, %v1361
        %v1686 = vpack.c.b16 %v1374, %v1362
        %v1687 = vpack.c.b16 %v1375, %v1363
        %v1688 = vpack.c.b16 %v1376, %v1364
        %v1689 = vpack.c.b16 %v1377, %v1365
        %v1690 = vpack.c.b16 %v1378, %v1366
        %v1691 = vpack.c.b16 %v1379, %v1367
        %v1692 = vpack.c.b16 %v1380, %v1368
        %v1693 = vpack.c.b16 %v1381, %v1369
        %v1694 = vpack.c.b16 %v1382, %v1370
        %v1695 = vpack.c.b16 %v1395, %v1383
        %v1696 = vpack.c.b16 %v1396, %v1384
        %v1697 = vpack.c.b16 %v1397, %v1385
        %v1698 = vpack.c.b16 %v1398, %v1386
        %v1699 = vpack.c.b16 %v1399, %v1387
        %v1700 = vpack.c.b16 %v1400, %v1388
        %v1701 = vpack.c.b16 %v1401, %v1389
        %v1702 = vpack.c.b16 %v1402, %v1390
        %v1703 = vpack.c.b16 %v1403, %v1391
        %v1704 = vpack.c.b16 %v1404, %v1392
        %v1705 = vpack.c.b16 %v1405, %v1393
        %v1706 = vpack.c.b16 %v1406, %v1394
        %v1707 = vpack.c.b16 %v1419, %v1407
        %v1708 = vpack.c.b16 %v1420, %v1408
        %v1709 = vpack.c.b16 %v1421, %v1409
        %v1710 = vpack.c.b16 %v1422, %v1410
        %v1711 = vpack.c.b16 %v1423, %v1411
        %v1712 = vpack.c.b16 %v1424, %v1412
        %v1713 = vpack.c.b16 %v1425, %v1413
        %v1714 = vpack.c.b16 %v1426, %v1414
        %v1715 = vpack.c.b16 %v1427, %v1415
        %v1716 = vpack.c.b16 %v1428, %v1416
        %v1717 = vpack.c.b16 %v1429, %v1417
        %v1718 = vpack.c.b16 %v1430, %v1418
        %2007 = vmatprep.subr.bf16.mxu0 %v1432
        %2008 = vmatpush1.bf16.msra.mxu0 %v1431
        %2009 = vmatprep.subr.bf16.mxu0 %v1444
        %2010 = vmatpush1.bf16.msra.mxu0 %v1443
        %2011 = vmatprep.subr.bf16.mxu0 %v1456
        %2012 = vmatpush1.bf16.msra.mxu0 %v1455
        %2013 = vmatprep.subr.bf16.mxu0 %v1468
        %2014 = vmatpush1.bf16.msra.mxu0 %v1467
        %2015 = vmatprep.subr.bf16.mxu0 %v1480
        %2016 = vmatpush1.bf16.msra.mxu0 %v1479
        %2017 = vmatprep.subr.bf16.mxu0 %v1492
        %2018 = vmatpush1.bf16.msra.mxu0 %v1491
        %2019 = vmatprep.subr.bf16.mxu0 %v1504
        %2020 = vmatpush1.bf16.msra.mxu0 %v1503
        %2021 = vmatprep.subr.bf16.mxu0 %v1516
        %2022 = vmatpush1.bf16.msra.mxu0 %v1515
        %2023 = vmatprep.subr.bf16.mxu0 %v1528
        %2024 = vmatpush1.bf16.msra.mxu0 %v1527
        %2025 = vmatprep.subr.bf16.mxu0 %v1540
        %2026 = vmatpush1.bf16.msra.mxu0 %v1539
        %2027 = vmatprep.subr.bf16.mxu0 %v1552
        %2028 = vmatpush1.bf16.msra.mxu0 %v1551
        %2029 = vmatprep.subr.bf16.mxu0 %v1564
        %2030 = vmatpush1.bf16.msra.mxu0 %v1563
        %2031 = vmatprep.subr.bf16.mxu0 %v1576
        %2032 = vmatpush1.bf16.msra.mxu0 %v1575
        %2033 = vmatprep.subr.bf16.mxu0 %v1588
        %2034 = vmatpush1.bf16.msra.mxu0 %v1587
        %2035 = vmatprep.subr.bf16.mxu0 %v1600
        %2036 = vmatpush1.bf16.msra.mxu0 %v1599
        %2037 = vmatprep.subr.bf16.mxu0 %v1612
        %2038 = vmatpush1.bf16.msra.mxu0 %v1611
        %2039 = vmatprep.mubr.bf16.mxu0 %v562
        %2040 = vmatmul.mubr.bf16.gmra.mrb[0].mxu0 %v561
        %v2041 = vpop.f32.mrb[0].mxu0
        %v2042 = vadd.f32 0.0, %v2041
        %v2043 = vpop.f32.mrb[0].mxu0
        %v2044 = vadd.f32 0.0, %v2043
        %v2045 = vpop.f32.mrb[0].mxu0
        %v2046 = vadd.f32 0.0, %v2045
        %v2047 = vpop.f32.mrb[0].mxu0
        %v2048 = vadd.f32 0.0, %v2047
        %2049 = vdwg.mxu0
        %2050 = vmatprep.subr.bf16.mxu0 %v1624
        %2051 = vmatpush1.bf16.msra.mxu0 %v1623
        %2052 = vmatprep.subr.bf16.mxu0 %v1636
        %2053 = vmatpush1.bf16.msra.mxu0 %v1635
        %2054 = vmatprep.subr.bf16.mxu0 %v1648
        %2055 = vmatpush1.bf16.msra.mxu0 %v1647
        %2056 = vmatprep.subr.bf16.mxu0 %v1660
        %2057 = vmatpush1.bf16.msra.mxu0 %v1659
        %2058 = vmatprep.subr.bf16.mxu0 %v1672
        %2059 = vmatpush1.bf16.msra.mxu0 %v1671
        %2060 = vmatprep.subr.bf16.mxu0 %v1684
        %2061 = vmatpush1.bf16.msra.mxu0 %v1683
        %2062 = vmatprep.subr.bf16.mxu0 %v1696
        %2063 = vmatpush1.bf16.msra.mxu0 %v1695
        %2064 = vmatprep.subr.bf16.mxu0 %v1708
        %2065 = vmatpush1.bf16.msra.mxu0 %v1707
        %2066 = vmatprep.subr.bf16.mxu0 0
        %2067 = vmatpush1.bf16.msra.mxu0 0
        %2068 = vmatprep.subr.bf16.mxu0 0
        %2069 = vmatpush1.bf16.msra.mxu0 0
        %2070 = vmatprep.subr.bf16.mxu0 0
        %2071 = vmatpush1.bf16.msra.mxu0 0
        %2072 = vmatprep.subr.bf16.mxu0 0
        %2073 = vmatpush1.bf16.msra.mxu0 0
        %2074 = vmatprep.subr.bf16.mxu0 0
        %2075 = vmatpush1.bf16.msra.mxu0 0
        %2076 = vmatprep.subr.bf16.mxu0 0
        %2077 = vmatpush1.bf16.msra.mxu0 0
        %2078 = vmatprep.subr.bf16.mxu0 0
        %2079 = vmatpush1.bf16.msra.mxu0 0
        %2080 = vmatprep.subr.bf16.mxu0 0
        %2081 = vmatpush1.bf16.msra.mxu0 0
        %2082 = vmatprep.mubr.bf16.mxu0 0
        %2083 = vmatmul.mubr.bf16.gmra.mrb[0].mxu0 %v563
        %v2084 = vpop.f32.mrb[0].mxu0
        %v2085 = vadd.f32 %v2042, %v2084
        %v2086 = vpop.f32.mrb[0].mxu0
        %v2087 = vadd.f32 %v2044, %v2086
        %v2088 = vpop.f32.mrb[0].mxu0
        %v2089 = vadd.f32 %v2046, %v2088
        %v2090 = vpop.f32.mrb[0].mxu0
        %v2091 = vadd.f32 %v2048, %v2090
        %2092 = vdwg.mxu0
        %2093 = vmatprep.subr.bf16.mxu0 %v1434
        %2094 = vmatpush1.bf16.msra.mxu0 %v1433
        %2095 = vmatprep.subr.bf16.mxu0 %v1446
        %2096 = vmatpush1.bf16.msra.mxu0 %v1445
        %2097 = vmatprep.subr.bf16.mxu0 %v1458
        %2098 = vmatpush1.bf16.msra.mxu0 %v1457
        %2099 = vmatprep.subr.bf16.mxu0 %v1470
        %2100 = vmatpush1.bf16.msra.mxu0 %v1469
        %2101 = vmatprep.subr.bf16.mxu0 %v1482
        %2102 = vmatpush1.bf16.msra.mxu0 %v1481
        %2103 = vmatprep.subr.bf16.mxu0 %v1494
        %2104 = vmatpush1.bf16.msra.mxu0 %v1493
        %2105 = vmatprep.subr.bf16.mxu0 %v1506
        %2106 = vmatpush1.bf16.msra.mxu0 %v1505
        %2107 = vmatprep.subr.bf16.mxu0 %v1518
        %2108 = vmatpush1.bf16.msra.mxu0 %v1517
        %2109 = vmatprep.subr.bf16.mxu0 %v1530
        %2110 = vmatpush1.bf16.msra.mxu0 %v1529
        %2111 = vmatprep.subr.bf16.mxu0 %v1542
        %2112 = vmatpush1.bf16.msra.mxu0 %v1541
        %2113 = vmatprep.subr.bf16.mxu0 %v1554
        %2114 = vmatpush1.bf16.msra.mxu0 %v1553
        %2115 = vmatprep.subr.bf16.mxu0 %v1566
        %2116 = vmatpush1.bf16.msra.mxu0 %v1565
        %2117 = vmatprep.subr.bf16.mxu0 %v1578
        %2118 = vmatpush1.bf16.msra.mxu0 %v1577
        %2119 = vmatprep.subr.bf16.mxu0 %v1590
        %2120 = vmatpush1.bf16.msra.mxu0 %v1589
        %2121 = vmatprep.subr.bf16.mxu0 %v1602
        %2122 = vmatpush1.bf16.msra.mxu0 %v1601
        %2123 = vmatprep.subr.bf16.mxu0 %v1614
        %2124 = vmatpush1.bf16.msra.mxu0 %v1613
        %2125 = vmatprep.mubr.bf16.mxu0 %v562
        %2126 = vmatmul.mubr.bf16.gmra.mrb[0].mxu0 %v561
        %v2127 = vpop.f32.mrb[0].mxu0
        %v2128 = vadd.f32 0.0, %v2127
        %v2129 = vpop.f32.mrb[0].mxu0
        %v2130 = vadd.f32 0.0, %v2129
        %v2131 = vpop.f32.mrb[0].mxu0
        %v2132 = vadd.f32 0.0, %v2131
        %v2133 = vpop.f32.mrb[0].mxu0
        %v2134 = vadd.f32 0.0, %v2133
        %2135 = vdwg.mxu0
        %2136 = vmatprep.subr.bf16.mxu0 %v1626
        %2137 = vmatpush1.bf16.msra.mxu0 %v1625
        %2138 = vmatprep.subr.bf16.mxu0 %v1638
        %2139 = vmatpush1.bf16.msra.mxu0 %v1637
        %2140 = vmatprep.subr.bf16.mxu0 %v1650
        %2141 = vmatpush1.bf16.msra.mxu0 %v1649
        %2142 = vmatprep.subr.bf16.mxu0 %v1662
        %2143 = vmatpush1.bf16.msra.mxu0 %v1661
        %2144 = vmatprep.subr.bf16.mxu0 %v1674
        %2145 = vmatpush1.bf16.msra.mxu0 %v1673
        %2146 = vmatprep.subr.bf16.mxu0 %v1686
        %2147 = vmatpush1.bf16.msra.mxu0 %v1685
        %2148 = vmatprep.subr.bf16.mxu0 %v1698
        %2149 = vmatpush1.bf16.msra.mxu0 %v1697
        %2150 = vmatprep.subr.bf16.mxu0 %v1710
        %2151 = vmatpush1.bf16.msra.mxu0 %v1709
        %2152 = vmatprep.subr.bf16.mxu0 0
        %2153 = vmatpush1.bf16.msra.mxu0 0
        %2154 = vmatprep.subr.bf16.mxu0 0
        %2155 = vmatpush1.bf16.msra.mxu0 0
        %2156 = vmatprep.subr.bf16.mxu0 0
        %2157 = vmatpush1.bf16.msra.mxu0 0
        %2158 = vmatprep.subr.bf16.mxu0 0
        %2159 = vmatpush1.bf16.msra.mxu0 0
        %2160 = vmatprep.subr.bf16.mxu0 0
        %2161 = vmatpush1.bf16.msra.mxu0 0
        %2162 = vmatprep.subr.bf16.mxu0 0
        %2163 = vmatpush1.bf16.msra.mxu0 0
        %2164 = vmatprep.subr.bf16.mxu0 0
        %2165 = vmatpush1.bf16.msra.mxu0 0
        %2166 = vmatprep.subr.bf16.mxu0 0
        %2167 = vmatpush1.bf16.msra.mxu0 0
        %2168 = vmatprep.mubr.bf16.mxu0 0
        %2169 = vmatmul.mubr.bf16.gmra.mrb[0].mxu0 %v563
        %v2170 = vpop.f32.mrb[0].mxu0
        %v2171 = vadd.f32 %v2128, %v2170
        %v2172 = vpop.f32.mrb[0].mxu0
        %v2173 = vadd.f32 %v2130, %v2172
        %v2174 = vpop.f32.mrb[0].mxu0
        %v2175 = vadd.f32 %v2132, %v2174
        %v2176 = vpop.f32.mrb[0].mxu0
        %v2177 = vadd.f32 %v2134, %v2176
        %2178 = vdwg.mxu0
        %2179 = vmatprep.subr.bf16.mxu0 %v1436
        %2180 = vmatpush1.bf16.msra.mxu0 %v1435
        %2181 = vmatprep.subr.bf16.mxu0 %v1448
        %2182 = vmatpush1.bf16.msra.mxu0 %v1447
        %2183 = vmatprep.subr.bf16.mxu0 %v1460
        %2184 = vmatpush1.bf16.msra.mxu0 %v1459
        %2185 = vmatprep.subr.bf16.mxu0 %v1472
        %2186 = vmatpush1.bf16.msra.mxu0 %v1471
        %2187 = vmatprep.subr.bf16.mxu0 %v1484
        %2188 = vmatpush1.bf16.msra.mxu0 %v1483
        %2189 = vmatprep.subr.bf16.mxu0 %v1496
        %2190 = vmatpush1.bf16.msra.mxu0 %v1495
        %2191 = vmatprep.subr.bf16.mxu0 %v1508
        %2192 = vmatpush1.bf16.msra.mxu0 %v1507
        %2193 = vmatprep.subr.bf16.mxu0 %v1520
        %2194 = vmatpush1.bf16.msra.mxu0 %v1519
        %2195 = vmatprep.subr.bf16.mxu0 %v1532
        %2196 = vmatpush1.bf16.msra.mxu0 %v1531
        %2197 = vmatprep.subr.bf16.mxu0 %v1544
        %2198 = vmatpush1.bf16.msra.mxu0 %v1543
        %2199 = vmatprep.subr.bf16.mxu0 %v1556
        %2200 = vmatpush1.bf16.msra.mxu0 %v1555
        %2201 = vmatprep.subr.bf16.mxu0 %v1568
        %2202 = vmatpush1.bf16.msra.mxu0 %v1567
        %2203 = vmatprep.subr.bf16.mxu0 %v1580
        %2204 = vmatpush1.bf16.msra.mxu0 %v1579
        %2205 = vmatprep.subr.bf16.mxu0 %v1592
        %2206 = vmatpush1.bf16.msra.mxu0 %v1591
        %2207 = vmatprep.subr.bf16.mxu0 %v1604
        %2208 = vmatpush1.bf16.msra.mxu0 %v1603
        %2209 = vmatprep.subr.bf16.mxu0 %v1616
        %2210 = vmatpush1.bf16.msra.mxu0 %v1615
        %2211 = vmatprep.mubr.bf16.mxu0 %v562
        %2212 = vmatmul.mubr.bf16.gmra.mrb[0].mxu0 %v561
        %v2213 = vpop.f32.mrb[0].mxu0
        %v2214 = vadd.f32 0.0, %v2213
        %v2215 = vpop.f32.mrb[0].mxu0
        %v2216 = vadd.f32 0.0, %v2215
        %v2217 = vpop.f32.mrb[0].mxu0
        %v2218 = vadd.f32 0.0, %v2217
        %v2219 = vpop.f32.mrb[0].mxu0
        %v2220 = vadd.f32 0.0, %v2219
        %2221 = vdwg.mxu0
        %2222 = vmatprep.subr.bf16.mxu0 %v1628
        %2223 = vmatpush1.bf16.msra.mxu0 %v1627
        %2224 = vmatprep.subr.bf16.mxu0 %v1640
        %2225 = vmatpush1.bf16.msra.mxu0 %v1639
        %2226 = vmatprep.subr.bf16.mxu0 %v1652
        %2227 = vmatpush1.bf16.msra.mxu0 %v1651
        %2228 = vmatprep.subr.bf16.mxu0 %v1664
        %2229 = vmatpush1.bf16.msra.mxu0 %v1663
        %2230 = vmatprep.subr.bf16.mxu0 %v1676
        %2231 = vmatpush1.bf16.msra.mxu0 %v1675
        %2232 = vmatprep.subr.bf16.mxu0 %v1688
        %2233 = vmatpush1.bf16.msra.mxu0 %v1687
        %2234 = vmatprep.subr.bf16.mxu0 %v1700
        %2235 = vmatpush1.bf16.msra.mxu0 %v1699
        %2236 = vmatprep.subr.bf16.mxu0 %v1712
        %2237 = vmatpush1.bf16.msra.mxu0 %v1711
        %2238 = vmatprep.subr.bf16.mxu0 0
        %2239 = vmatpush1.bf16.msra.mxu0 0
        %2240 = vmatprep.subr.bf16.mxu0 0
        %2241 = vmatpush1.bf16.msra.mxu0 0
        %2242 = vmatprep.subr.bf16.mxu0 0
        %2243 = vmatpush1.bf16.msra.mxu0 0
        %2244 = vmatprep.subr.bf16.mxu0 0
        %2245 = vmatpush1.bf16.msra.mxu0 0
        %2246 = vmatprep.subr.bf16.mxu0 0
        %2247 = vmatpush1.bf16.msra.mxu0 0
        %2248 = vmatprep.subr.bf16.mxu0 0
        %2249 = vmatpush1.bf16.msra.mxu0 0
        %2250 = vmatprep.subr.bf16.mxu0 0
        %2251 = vmatpush1.bf16.msra.mxu0 0
        %2252 = vmatprep.subr.bf16.mxu0 0
        %2253 = vmatpush1.bf16.msra.mxu0 0
        %2254 = vmatprep.mubr.bf16.mxu0 0
        %2255 = vmatmul.mubr.bf16.gmra.mrb[0].mxu0 %v563
        %v2256 = vpop.f32.mrb[0].mxu0
        %v2257 = vadd.f32 %v2214, %v2256
        %v2258 = vpop.f32.mrb[0].mxu0
        %v2259 = vadd.f32 %v2216, %v2258
        %v2260 = vpop.f32.mrb[0].mxu0
        %v2261 = vadd.f32 %v2218, %v2260
        %v2262 = vpop.f32.mrb[0].mxu0
        %v2263 = vadd.f32 %v2220, %v2262
        %2264 = vdwg.mxu0
        %2265 = vmatprep.subr.bf16.mxu0 %v1438
        %2266 = vmatpush1.bf16.msra.mxu0 %v1437
        %2267 = vmatprep.subr.bf16.mxu0 %v1450
        %2268 = vmatpush1.bf16.msra.mxu0 %v1449
        %2269 = vmatprep.subr.bf16.mxu0 %v1462
        %2270 = vmatpush1.bf16.msra.mxu0 %v1461
        %2271 = vmatprep.subr.bf16.mxu0 %v1474
        %2272 = vmatpush1.bf16.msra.mxu0 %v1473
        %2273 = vmatprep.subr.bf16.mxu0 %v1486
        %2274 = vmatpush1.bf16.msra.mxu0 %v1485
        %2275 = vmatprep.subr.bf16.mxu0 %v1498
        %2276 = vmatpush1.bf16.msra.mxu0 %v1497
        %2277 = vmatprep.subr.bf16.mxu0 %v1510
        %2278 = vmatpush1.bf16.msra.mxu0 %v1509
        %2279 = vmatprep.subr.bf16.mxu0 %v1522
        %2280 = vmatpush1.bf16.msra.mxu0 %v1521
        %2281 = vmatprep.subr.bf16.mxu0 %v1534
        %2282 = vmatpush1.bf16.msra.mxu0 %v1533
        %2283 = vmatprep.subr.bf16.mxu0 %v1546
        %2284 = vmatpush1.bf16.msra.mxu0 %v1545
        %2285 = vmatprep.subr.bf16.mxu0 %v1558
        %2286 = vmatpush1.bf16.msra.mxu0 %v1557
        %2287 = vmatprep.subr.bf16.mxu0 %v1570
        %2288 = vmatpush1.bf16.msra.mxu0 %v1569
        %2289 = vmatprep.subr.bf16.mxu0 %v1582
        %2290 = vmatpush1.bf16.msra.mxu0 %v1581
        %2291 = vmatprep.subr.bf16.mxu0 %v1594
        %2292 = vmatpush1.bf16.msra.mxu0 %v1593
        %2293 = vmatprep.subr.bf16.mxu0 %v1606
        %2294 = vmatpush1.bf16.msra.mxu0 %v1605
        %2295 = vmatprep.subr.bf16.mxu0 %v1618
        %2296 = vmatpush1.bf16.msra.mxu0 %v1617
        %2297 = vmatprep.mubr.bf16.mxu0 %v562
        %2298 = vmatmul.mubr.bf16.gmra.mrb[0].mxu0 %v561
        %v2299 = vpop.f32.mrb[0].mxu0
        %v2300 = vadd.f32 0.0, %v2299
        %v2301 = vpop.f32.mrb[0].mxu0
        %v2302 = vadd.f32 0.0, %v2301
        %v2303 = vpop.f32.mrb[0].mxu0
        %v2304 = vadd.f32 0.0, %v2303
        %v2305 = vpop.f32.mrb[0].mxu0
        %v2306 = vadd.f32 0.0, %v2305
        %2307 = vdwg.mxu0
        %2308 = vmatprep.subr.bf16.mxu0 %v1630
        %2309 = vmatpush1.bf16.msra.mxu0 %v1629
        %2310 = vmatprep.subr.bf16.mxu0 %v1642
        %2311 = vmatpush1.bf16.msra.mxu0 %v1641
        %2312 = vmatprep.subr.bf16.mxu0 %v1654
        %2313 = vmatpush1.bf16.msra.mxu0 %v1653
        %2314 = vmatprep.subr.bf16.mxu0 %v1666
        %2315 = vmatpush1.bf16.msra.mxu0 %v1665
        %2316 = vmatprep.subr.bf16.mxu0 %v1678
        %2317 = vmatpush1.bf16.msra.mxu0 %v1677
        %2318 = vmatprep.subr.bf16.mxu0 %v1690
        %2319 = vmatpush1.bf16.msra.mxu0 %v1689
        %2320 = vmatprep.subr.bf16.mxu0 %v1702
        %2321 = vmatpush1.bf16.msra.mxu0 %v1701
        %2322 = vmatprep.subr.bf16.mxu0 %v1714
        %2323 = vmatpush1.bf16.msra.mxu0 %v1713
        %2324 = vmatprep.subr.bf16.mxu0 0
        %2325 = vmatpush1.bf16.msra.mxu0 0
        %2326 = vmatprep.subr.bf16.mxu0 0
        %2327 = vmatpush1.bf16.msra.mxu0 0
        %2328 = vmatprep.subr.bf16.mxu0 0
        %2329 = vmatpush1.bf16.msra.mxu0 0
        %2330 = vmatprep.subr.bf16.mxu0 0
        %2331 = vmatpush1.bf16.msra.mxu0 0
        %2332 = vmatprep.subr.bf16.mxu0 0
        %2333 = vmatpush1.bf16.msra.mxu0 0
        %2334 = vmatprep.subr.bf16.mxu0 0
        %2335 = vmatpush1.bf16.msra.mxu0 0
        %2336 = vmatprep.subr.bf16.mxu0 0
        %2337 = vmatpush1.bf16.msra.mxu0 0
        %2338 = vmatprep.subr.bf16.mxu0 0
        %2339 = vmatpush1.bf16.msra.mxu0 0
        %2340 = vmatprep.mubr.bf16.mxu0 0
        %2341 = vmatmul.mubr.bf16.gmra.mrb[0].mxu0 %v563
        %v2342 = vpop.f32.mrb[0].mxu0
        %v2343 = vadd.f32 %v2300, %v2342
        %v2344 = vpop.f32.mrb[0].mxu0
        %v2345 = vadd.f32 %v2302, %v2344
        %v2346 = vpop.f32.mrb[0].mxu0
        %v2347 = vadd.f32 %v2304, %v2346
        %v2348 = vpop.f32.mrb[0].mxu0
        %v2349 = vadd.f32 %v2306, %v2348
        %2350 = vdwg.mxu0
        %2351 = vmatprep.subr.bf16.mxu0 %v1440
        %2352 = vmatpush1.bf16.msra.mxu0 %v1439
        %2353 = vmatprep.subr.bf16.mxu0 %v1452
        %2354 = vmatpush1.bf16.msra.mxu0 %v1451
        %2355 = vmatprep.subr.bf16.mxu0 %v1464
        %2356 = vmatpush1.bf16.msra.mxu0 %v1463
        %2357 = vmatprep.subr.bf16.mxu0 %v1476
        %2358 = vmatpush1.bf16.msra.mxu0 %v1475
        %2359 = vmatprep.subr.bf16.mxu0 %v1488
        %2360 = vmatpush1.bf16.msra.mxu0 %v1487
        %2361 = vmatprep.subr.bf16.mxu0 %v1500
        %2362 = vmatpush1.bf16.msra.mxu0 %v1499
        %2363 = vmatprep.subr.bf16.mxu0 %v1512
        %2364 = vmatpush1.bf16.msra.mxu0 %v1511
        %2365 = vmatprep.subr.bf16.mxu0 %v1524
        %2366 = vmatpush1.bf16.msra.mxu0 %v1523
        %2367 = vmatprep.subr.bf16.mxu0 %v1536
        %2368 = vmatpush1.bf16.msra.mxu0 %v1535
        %2369 = vmatprep.subr.bf16.mxu0 %v1548
        %2370 = vmatpush1.bf16.msra.mxu0 %v1547
        %2371 = vmatprep.subr.bf16.mxu0 %v1560
        %2372 = vmatpush1.bf16.msra.mxu0 %v1559
        %2373 = vmatprep.subr.bf16.mxu0 %v1572
        %2374 = vmatpush1.bf16.msra.mxu0 %v1571
        %2375 = vmatprep.subr.bf16.mxu0 %v1584
        %2376 = vmatpush1.bf16.msra.mxu0 %v1583
        %2377 = vmatprep.subr.bf16.mxu0 %v1596
        %2378 = vmatpush1.bf16.msra.mxu0 %v1595
        %2379 = vmatprep.subr.bf16.mxu0 %v1608
        %2380 = vmatpush1.bf16.msra.mxu0 %v1607
        %2381 = vmatprep.subr.bf16.mxu0 %v1620
        %2382 = vmatpush1.bf16.msra.mxu0 %v1619
        %2383 = vmatprep.mubr.bf16.mxu0 %v562
        %2384 = vmatmul.mubr.bf16.gmra.mrb[0].mxu0 %v561
        %v2385 = vpop.f32.mrb[0].mxu0
        %v2386 = vadd.f32 0.0, %v2385
        %v2387 = vpop.f32.mrb[0].mxu0
        %v2388 = vadd.f32 0.0, %v2387
        %v2389 = vpop.f32.mrb[0].mxu0
        %v2390 = vadd.f32 0.0, %v2389
        %v2391 = vpop.f32.mrb[0].mxu0
        %v2392 = vadd.f32 0.0, %v2391
        %2393 = vdwg.mxu0
        %2394 = vmatprep.subr.bf16.mxu0 %v1632
        %2395 = vmatpush1.bf16.msra.mxu0 %v1631
        %2396 = vmatprep.subr.bf16.mxu0 %v1644
        %2397 = vmatpush1.bf16.msra.mxu0 %v1643
        %2398 = vmatprep.subr.bf16.mxu0 %v1656
        %2399 = vmatpush1.bf16.msra.mxu0 %v1655
        %2400 = vmatprep.subr.bf16.mxu0 %v1668
        %2401 = vmatpush1.bf16.msra.mxu0 %v1667
        %2402 = vmatprep.subr.bf16.mxu0 %v1680
        %2403 = vmatpush1.bf16.msra.mxu0 %v1679
        %2404 = vmatprep.subr.bf16.mxu0 %v1692
        %2405 = vmatpush1.bf16.msra.mxu0 %v1691
        %2406 = vmatprep.subr.bf16.mxu0 %v1704
        %2407 = vmatpush1.bf16.msra.mxu0 %v1703
        %2408 = vmatprep.subr.bf16.mxu0 %v1716
        %2409 = vmatpush1.bf16.msra.mxu0 %v1715
        %2410 = vmatprep.subr.bf16.mxu0 0
        %2411 = vmatpush1.bf16.msra.mxu0 0
        %2412 = vmatprep.subr.bf16.mxu0 0
        %2413 = vmatpush1.bf16.msra.mxu0 0
        %2414 = vmatprep.subr.bf16.mxu0 0
        %2415 = vmatpush1.bf16.msra.mxu0 0
        %2416 = vmatprep.subr.bf16.mxu0 0
        %2417 = vmatpush1.bf16.msra.mxu0 0
        %2418 = vmatprep.subr.bf16.mxu0 0
        %2419 = vmatpush1.bf16.msra.mxu0 0
        %2420 = vmatprep.subr.bf16.mxu0 0
        %2421 = vmatpush1.bf16.msra.mxu0 0
        %2422 = vmatprep.subr.bf16.mxu0 0
        %2423 = vmatpush1.bf16.msra.mxu0 0
        %2424 = vmatprep.subr.bf16.mxu0 0
        %2425 = vmatpush1.bf16.msra.mxu0 0
        %2426 = vmatprep.mubr.bf16.mxu0 0
        %2427 = vmatmul.mubr.bf16.gmra.mrb[0].mxu0 %v563
        %v2428 = vpop.f32.mrb[0].mxu0
        %v2429 = vadd.f32 %v2386, %v2428
        %v2430 = vpop.f32.mrb[0].mxu0
        %v2431 = vadd.f32 %v2388, %v2430
        %v2432 = vpop.f32.mrb[0].mxu0
        %v2433 = vadd.f32 %v2390, %v2432
        %v2434 = vpop.f32.mrb[0].mxu0
        %v2435 = vadd.f32 %v2392, %v2434
        %2436 = vdwg.mxu0
        %2437 = vmatprep.subr.bf16.mxu0 %v1442
        %2438 = vmatpush1.bf16.msra.mxu0 %v1441
        %2439 = vmatprep.subr.bf16.mxu0 %v1454
        %2440 = vmatpush1.bf16.msra.mxu0 %v1453
        %2441 = vmatprep.subr.bf16.mxu0 %v1466
        %2442 = vmatpush1.bf16.msra.mxu0 %v1465
        %2443 = vmatprep.subr.bf16.mxu0 %v1478
        %2444 = vmatpush1.bf16.msra.mxu0 %v1477
        %2445 = vmatprep.subr.bf16.mxu0 %v1490
        %2446 = vmatpush1.bf16.msra.mxu0 %v1489
        %2447 = vmatprep.subr.bf16.mxu0 %v1502
        %2448 = vmatpush1.bf16.msra.mxu0 %v1501
        %2449 = vmatprep.subr.bf16.mxu0 %v1514
        %2450 = vmatpush1.bf16.msra.mxu0 %v1513
        %2451 = vmatprep.subr.bf16.mxu0 %v1526
        %2452 = vmatpush1.bf16.msra.mxu0 %v1525
        %2453 = vmatprep.subr.bf16.mxu0 %v1538
        %2454 = vmatpush1.bf16.msra.mxu0 %v1537
        %2455 = vmatprep.subr.bf16.mxu0 %v1550
        %2456 = vmatpush1.bf16.msra.mxu0 %v1549
        %2457 = vmatprep.subr.bf16.mxu0 %v1562
        %2458 = vmatpush1.bf16.msra.mxu0 %v1561
        %2459 = vmatprep.subr.bf16.mxu0 %v1574
        %2460 = vmatpush1.bf16.msra.mxu0 %v1573
        %2461 = vmatprep.subr.bf16.mxu0 %v1586
        %2462 = vmatpush1.bf16.msra.mxu0 %v1585
        %2463 = vmatprep.subr.bf16.mxu0 %v1598
        %2464 = vmatpush1.bf16.msra.mxu0 %v1597
        %2465 = vmatprep.subr.bf16.mxu0 %v1610
        %2466 = vmatpush1.bf16.msra.mxu0 %v1609
        %2467 = vmatprep.subr.bf16.mxu0 %v1622
        %2468 = vmatpush1.bf16.msra.mxu0 %v1621
        %2469 = vmatprep.mubr.bf16.mxu0 %v562
        %2470 = vmatmul.mubr.bf16.gmra.mrb[0].mxu0 %v561
        %v2471 = vpop.f32.mrb[0].mxu0
        %v2472 = vadd.f32 0.0, %v2471
        %v2473 = vpop.f32.mrb[0].mxu0
        %v2474 = vadd.f32 0.0, %v2473
        %v2475 = vpop.f32.mrb[0].mxu0
        %v2476 = vadd.f32 0.0, %v2475
        %v2477 = vpop.f32.mrb[0].mxu0
        %v2478 = vadd.f32 0.0, %v2477
        %2479 = vdwg.mxu0
        %2480 = vmatprep.subr.bf16.mxu0 %v1634
        %2481 = vmatpush1.bf16.msra.mxu0 %v1633
        %2482 = vmatprep.subr.bf16.mxu0 %v1646
        %2483 = vmatpush1.bf16.msra.mxu0 %v1645
        %2484 = vmatprep.subr.bf16.mxu0 %v1658
        %2485 = vmatpush1.bf16.msra.mxu0 %v1657
        %2486 = vmatprep.subr.bf16.mxu0 %v1670
        %2487 = vmatpush1.bf16.msra.mxu0 %v1669
        %2488 = vmatprep.subr.bf16.mxu0 %v1682
        %2489 = vmatpush1.bf16.msra.mxu0 %v1681
        %2490 = vmatprep.subr.bf16.mxu0 %v1694
        %2491 = vmatpush1.bf16.msra.mxu0 %v1693
        %2492 = vmatprep.subr.bf16.mxu0 %v1706
        %2493 = vmatpush1.bf16.msra.mxu0 %v1705
        %2494 = vmatprep.subr.bf16.mxu0 %v1718
        %2495 = vmatpush1.bf16.msra.mxu0 %v1717
        %2496 = vmatprep.subr.bf16.mxu0 0
        %2497 = vmatpush1.bf16.msra.mxu0 0
        %2498 = vmatprep.subr.bf16.mxu0 0
        %2499 = vmatpush1.bf16.msra.mxu0 0
        %2500 = vmatprep.subr.bf16.mxu0 0
        %2501 = vmatpush1.bf16.msra.mxu0 0
        %2502 = vmatprep.subr.bf16.mxu0 0
        %2503 = vmatpush1.bf16.msra.mxu0 0
        %2504 = vmatprep.subr.bf16.mxu0 0
        %2505 = vmatpush1.bf16.msra.mxu0 0
        %2506 = vmatprep.subr.bf16.mxu0 0
        %2507 = vmatpush1.bf16.msra.mxu0 0
        %2508 = vmatprep.subr.bf16.mxu0 0
        %2509 = vmatpush1.bf16.msra.mxu0 0
        %2510 = vmatprep.subr.bf16.mxu0 0
        %2511 = vmatpush1.bf16.msra.mxu0 0
        %2512 = vmatprep.mubr.bf16.mxu0 0
        %2513 = vmatmul.mubr.bf16.gmra.mrb[0].mxu0 %v563
        %v2514 = vpop.f32.mrb[0].mxu0
        %v2515 = vadd.f32 %v2472, %v2514
        %v2516 = vpop.f32.mrb[0].mxu0
        %v2517 = vadd.f32 %v2474, %v2516
        %v2518 = vpop.f32.mrb[0].mxu0
        %v2519 = vadd.f32 %v2476, %v2518
        %v2520 = vpop.f32.mrb[0].mxu0
        %v2521 = vadd.f32 %v2478, %v2520
        %2522 = vdwg.mxu0
        %v2523 = vlaneseq
        %v2524 = vshrl.u32 %v2523, 7
        %v2525 = vadd.s32 %v2524, 8
        %v2526 = vlaneseq
        %v2527 = vand.u32 %v2526, 127
        %vm2528 = vcmp.le.s32.totalorder %v2527, %v2524
        %vm2529 = vcmp.le.s32.totalorder %v2527, %v2525
        %v2530 = vmul.f32 %v2085, 0.05103104
        %v2531 = vmul.f32 %v2089, 0.05103104
        %v2532 = vpack.c.bf16 %v2531, %v2530
        %v2533 = vpack.c.bf16 %v2261, %v2257
        %2534 = vmatprep.subr.bf16.mxu0 0
        %2535 = vmatpush1.bf16.xpose.msra.mxu0 %v2533
        %2536 = vmatprep.subr.bf16.mxu0 0
        %2537 = vmatpush1.bf16.xpose.msra.mxu0 0
        %2538 = vmatprep.subr.bf16.mxu0 0
        %2539 = vmatpush1.bf16.xpose.msra.mxu0 0
        %2540 = vmatprep.subr.bf16.mxu0 0
        %2541 = vmatpush1.bf16.xpose.msra.mxu0 0
        %2542 = vmatprep.subr.bf16.mxu0 0
        %2543 = vmatpush1.bf16.xpose.msra.mxu0 0
        %2544 = vmatprep.subr.bf16.mxu0 0
        %2545 = vmatpush1.bf16.xpose.msra.mxu0 0
        %2546 = vmatprep.subr.bf16.mxu0 0
        %2547 = vmatpush1.bf16.xpose.msra.mxu0 0
        %2548 = vmatprep.subr.bf16.mxu0 0
        %2549 = vmatpush1.bf16.xpose.msra.mxu0 0
        %2550 = vmatprep.subr.bf16.mxu0 0
        %2551 = vmatpush1.bf16.xpose.msra.mxu0 0
        %2552 = vmatprep.subr.bf16.mxu0 0
        %2553 = vmatpush1.bf16.xpose.msra.mxu0 0
        %2554 = vmatprep.subr.bf16.mxu0 0
        %2555 = vmatpush1.bf16.xpose.msra.mxu0 0
        %2556 = vmatprep.subr.bf16.mxu0 0
        %2557 = vmatpush1.bf16.xpose.msra.mxu0 0
        %2558 = vmatprep.subr.bf16.mxu0 0
        %2559 = vmatpush1.bf16.xpose.msra.mxu0 0
        %2560 = vmatprep.subr.bf16.mxu0 0
        %2561 = vmatpush1.bf16.xpose.msra.mxu0 0
        %2562 = vmatprep.subr.bf16.mxu0 0
        %2563 = vmatpush1.bf16.xpose.msra.mxu0 0
        %2564 = vmatprep.subr.bf16.mxu0 0
        %2565 = vmatpush1.bf16.xpose.msra.mxu0 0
        %2566 = vmatprep.mubr.bf16.mxu0 0
        %2567 = vmatmul.mubr.bf16.gmra.mrb[0].mxu0 %v2532
        %v2568 = vpop.f32.mrb[0].mxu0
        %v2569 = vadd.f32 0.0, %v2568
        %v2570 = vpop.f32.mrb[0].mxu0
        %v2571 = vpop.f32.mrb[0].mxu0
        %v2572 = vadd.f32 0.0, %v2571
        %v2573 = vpop.f32.mrb[0].mxu0
        %2574 = vdwg.mxu0
        %v2575 = vsel %vm2528, %v2569, -inf
        %v2576 = vsel %vm2529, %v2572, -inf
        %vm2577 = vcmask 130048
        %v2578 = vsel %vm2577, %v2575, -inf
        %2579 = vmax.xlane.f32.xlu0 %v2578
        %v2580 = vpop.xlane.xlu0 %2579
        %v2581 = vsel %vm2577, %v2576, -inf
        %2582 = vmax.xlane.f32.xlu0 %v2581
        %v2583 = vpop.xlane.xlu0 %2582
        %v2584 = vsub.f32 %v2575, %v2580
        %v2585 = vsub.f32 %v2576, %v2583
        %v2586 = vmul.f32 %v2584, 1.442695
        %v2587 = vpow.pop %v2586
        %v2588 = vmul.f32 %v2585, 1.442695
        %v2589 = vpow.pop %v2588
        %v2590 = vsel %vm2577, %v2587, 0.0
        %2591 = vadd.xlane.f32.xlu0 %v2590
        %v2592 = vpop.xlane.xlu0 %2591
        %v2593 = vsel %vm2577, %v2589, 0.0
        %2594 = vadd.xlane.f32.xlu0 %v2593
        %v2595 = vpop.xlane.xlu0 %2594
        %v2596 = vrcp.pop %v2592
        %v2597 = vrcp.pop %v2595
        %v2598 = vmul.f32 %v2587, %v2596
        %v2599 = vmul.f32 %v2589, %v2597
        %v2600 = vpack.c.bf16 %v2599, %v2598
        %v2601 = vpack.c.bf16 %v2433, %v2429
        %v2603 = vsel %vm2577, %v2600, 0
        %2605 = vmatprep.subr.bf16.mxu0 0
        %2606 = vmatpush1.bf16.msra.mxu0 %v2601
        %2607 = vmatprep.subr.bf16.mxu0 0
        %2608 = vmatpush1.bf16.msra.mxu0 0
        %2609 = vmatprep.subr.bf16.mxu0 0
        %2610 = vmatpush1.bf16.msra.mxu0 0
        %2611 = vmatprep.subr.bf16.mxu0 0
        %2612 = vmatpush1.bf16.msra.mxu0 0
        %2613 = vmatprep.subr.bf16.mxu0 0
        %2614 = vmatpush1.bf16.msra.mxu0 0
        %2615 = vmatprep.subr.bf16.mxu0 0
        %2616 = vmatpush1.bf16.msra.mxu0 0
        %2617 = vmatprep.subr.bf16.mxu0 0
        %2618 = vmatpush1.bf16.msra.mxu0 0
        %2619 = vmatprep.subr.bf16.mxu0 0
        %2620 = vmatpush1.bf16.msra.mxu0 0
        %2621 = vmatprep.subr.bf16.mxu0 0
        %2622 = vmatpush1.bf16.msra.mxu0 0
        %2623 = vmatprep.subr.bf16.mxu0 0
        %2624 = vmatpush1.bf16.msra.mxu0 0
        %2625 = vmatprep.subr.bf16.mxu0 0
        %2626 = vmatpush1.bf16.msra.mxu0 0
        %2627 = vmatprep.subr.bf16.mxu0 0
        %2628 = vmatpush1.bf16.msra.mxu0 0
        %2629 = vmatprep.subr.bf16.mxu0 0
        %2630 = vmatpush1.bf16.msra.mxu0 0
        %2631 = vmatprep.subr.bf16.mxu0 0
        %2632 = vmatpush1.bf16.msra.mxu0 0
        %2633 = vmatprep.subr.bf16.mxu0 0
        %2634 = vmatpush1.bf16.msra.mxu0 0
        %2635 = vmatprep.subr.bf16.mxu0 0
        %2636 = vmatpush1.bf16.msra.mxu0 0
        %2637 = vmatprep.mubr.bf16.mxu0 0
        %2638 = vmatmul.mubr.bf16.gmra.mrb[0].mxu0 %v2603
        %v2639 = vpop.f32.mrb[0].mxu0
        %v2640 = vadd.f32 0.0, %v2639
        %v2641 = vpop.f32.mrb[0].mxu0
        %v2642 = vpop.f32.mrb[0].mxu0
        %v2643 = vadd.f32 0.0, %v2642
        %v2644 = vpop.f32.mrb[0].mxu0
        %2645 = vdwg.mxu0
        %v2646 = vmul.f32 %v2087, 0.05103104
        %v2647 = vmul.f32 %v2091, 0.05103104
        %v2648 = vpack.c.bf16 %v2647, %v2646
        %v2649 = vpack.c.bf16 %v2263, %v2259
        %2650 = vmatprep.subr.bf16.mxu0 0
        %2651 = vmatpush1.bf16.xpose.msra.mxu0 %v2649
        %2652 = vmatprep.subr.bf16.mxu0 0
        %2653 = vmatpush1.bf16.xpose.msra.mxu0 0
        %2654 = vmatprep.subr.bf16.mxu0 0
        %2655 = vmatpush1.bf16.xpose.msra.mxu0 0
        %2656 = vmatprep.subr.bf16.mxu0 0
        %2657 = vmatpush1.bf16.xpose.msra.mxu0 0
        %2658 = vmatprep.subr.bf16.mxu0 0
        %2659 = vmatpush1.bf16.xpose.msra.mxu0 0
        %2660 = vmatprep.subr.bf16.mxu0 0
        %2661 = vmatpush1.bf16.xpose.msra.mxu0 0
        %2662 = vmatprep.subr.bf16.mxu0 0
        %2663 = vmatpush1.bf16.xpose.msra.mxu0 0
        %2664 = vmatprep.subr.bf16.mxu0 0
        %2665 = vmatpush1.bf16.xpose.msra.mxu0 0
        %2666 = vmatprep.subr.bf16.mxu0 0
        %2667 = vmatpush1.bf16.xpose.msra.mxu0 0
        %2668 = vmatprep.subr.bf16.mxu0 0
        %2669 = vmatpush1.bf16.xpose.msra.mxu0 0
        %2670 = vmatprep.subr.bf16.mxu0 0
        %2671 = vmatpush1.bf16.xpose.msra.mxu0 0
        %2672 = vmatprep.subr.bf16.mxu0 0
        %2673 = vmatpush1.bf16.xpose.msra.mxu0 0
        %2674 = vmatprep.subr.bf16.mxu0 0
        %2675 = vmatpush1.bf16.xpose.msra.mxu0 0
        %2676 = vmatprep.subr.bf16.mxu0 0
        %2677 = vmatpush1.bf16.xpose.msra.mxu0 0
        %2678 = vmatprep.subr.bf16.mxu0 0
        %2679 = vmatpush1.bf16.xpose.msra.mxu0 0
        %2680 = vmatprep.subr.bf16.mxu0 0
        %2681 = vmatpush1.bf16.xpose.msra.mxu0 0
        %2682 = vmatprep.mubr.bf16.mxu0 0
        %2683 = vmatmul.mubr.bf16.gmra.mrb[0].mxu0 %v2648
        %v2684 = vpop.f32.mrb[0].mxu0
        %v2685 = vadd.f32 0.0, %v2684
        %v2686 = vpop.f32.mrb[0].mxu0
        %v2687 = vpop.f32.mrb[0].mxu0
        %v2688 = vadd.f32 0.0, %v2687
        %v2689 = vpop.f32.mrb[0].mxu0
        %2690 = vdwg.mxu0
        %v2691 = vsel %vm2528, %v2685, -inf
        %v2692 = vsel %vm2529, %v2688, -inf
        %v2693 = vsel %vm2577, %v2691, -inf
        %2694 = vmax.xlane.f32.xlu0 %v2693
        %v2695 = vpop.xlane.xlu0 %2694
        %v2696 = vsel %vm2577, %v2692, -inf
        %2697 = vmax.xlane.f32.xlu0 %v2696
        %v2698 = vpop.xlane.xlu0 %2697
        %v2699 = vsub.f32 %v2691, %v2695
        %v2700 = vsub.f32 %v2692, %v2698
        %v2701 = vmul.f32 %v2699, 1.442695
        %v2702 = vpow.pop %v2701
        %v2703 = vmul.f32 %v2700, 1.442695
        %v2704 = vpow.pop %v2703
        %v2705 = vsel %vm2577, %v2702, 0.0
        %2706 = vadd.xlane.f32.xlu0 %v2705
        %v2707 = vpop.xlane.xlu0 %2706
        %v2708 = vsel %vm2577, %v2704, 0.0
        %2709 = vadd.xlane.f32.xlu0 %v2708
        %v2710 = vpop.xlane.xlu0 %2709
        %v2711 = vrcp.pop %v2707
        %v2712 = vrcp.pop %v2710
        %v2713 = vmul.f32 %v2702, %v2711
        %v2714 = vmul.f32 %v2704, %v2712
        %v2715 = vpack.c.bf16 %v2714, %v2713
        %v2716 = vpack.c.bf16 %v2435, %v2431
        %v2718 = vsel %vm2577, %v2715, 0
        %2720 = vmatprep.subr.bf16.mxu0 0
        %2721 = vmatpush1.bf16.msra.mxu0 %v2716
        %2722 = vmatprep.subr.bf16.mxu0 0
        %2723 = vmatpush1.bf16.msra.mxu0 0
        %2724 = vmatprep.subr.bf16.mxu0 0
        %2725 = vmatpush1.bf16.msra.mxu0 0
        %2726 = vmatprep.subr.bf16.mxu0 0
        %2727 = vmatpush1.bf16.msra.mxu0 0
        %2728 = vmatprep.subr.bf16.mxu0 0
        %2729 = vmatpush1.bf16.msra.mxu0 0
        %2730 = vmatprep.subr.bf16.mxu0 0
        %2731 = vmatpush1.bf16.msra.mxu0 0
        %2732 = vmatprep.subr.bf16.mxu0 0
        %2733 = vmatpush1.bf16.msra.mxu0 0
        %2734 = vmatprep.subr.bf16.mxu0 0
        %2735 = vmatpush1.bf16.msra.mxu0 0
        %2736 = vmatprep.subr.bf16.mxu0 0
        %2737 = vmatpush1.bf16.msra.mxu0 0
        %2738 = vmatprep.subr.bf16.mxu0 0
        %2739 = vmatpush1.bf16.msra.mxu0 0
        %2740 = vmatprep.subr.bf16.mxu0 0
        %2741 = vmatpush1.bf16.msra.mxu0 0
        %2742 = vmatprep.subr.bf16.mxu0 0
        %2743 = vmatpush1.bf16.msra.mxu0 0
        %2744 = vmatprep.subr.bf16.mxu0 0
        %2745 = vmatpush1.bf16.msra.mxu0 0
        %2746 = vmatprep.subr.bf16.mxu0 0
        %2747 = vmatpush1.bf16.msra.mxu0 0
        %2748 = vmatprep.subr.bf16.mxu0 0
        %2749 = vmatpush1.bf16.msra.mxu0 0
        %2750 = vmatprep.subr.bf16.mxu0 0
        %2751 = vmatpush1.bf16.msra.mxu0 0
        %2752 = vmatprep.mubr.bf16.mxu0 0
        %2753 = vmatmul.mubr.bf16.gmra.mrb[0].mxu0 %v2718
        %v2754 = vpop.f32.mrb[0].mxu0
        %v2755 = vadd.f32 0.0, %v2754
        %v2756 = vpop.f32.mrb[0].mxu0
        %v2757 = vpop.f32.mrb[0].mxu0
        %v2758 = vadd.f32 0.0, %v2757
        %v2759 = vpop.f32.mrb[0].mxu0
        %2760 = vdwg.mxu0
        %v2761 = vmul.f32 %v2171, 0.05103104
        %v2762 = vmul.f32 %v2175, 0.05103104
        %v2763 = vpack.c.bf16 %v2762, %v2761
        %v2764 = vpack.c.bf16 %v2347, %v2343
        %2765 = vmatprep.subr.bf16.mxu0 0
        %2766 = vmatpush1.bf16.xpose.msra.mxu0 %v2764
        %2767 = vmatprep.subr.bf16.mxu0 0
        %2768 = vmatpush1.bf16.xpose.msra.mxu0 0
        %2769 = vmatprep.subr.bf16.mxu0 0
        %2770 = vmatpush1.bf16.xpose.msra.mxu0 0
        %2771 = vmatprep.subr.bf16.mxu0 0
        %2772 = vmatpush1.bf16.xpose.msra.mxu0 0
        %2773 = vmatprep.subr.bf16.mxu0 0
        %2774 = vmatpush1.bf16.xpose.msra.mxu0 0
        %2775 = vmatprep.subr.bf16.mxu0 0
        %2776 = vmatpush1.bf16.xpose.msra.mxu0 0
        %2777 = vmatprep.subr.bf16.mxu0 0
        %2778 = vmatpush1.bf16.xpose.msra.mxu0 0
        %2779 = vmatprep.subr.bf16.mxu0 0
        %2780 = vmatpush1.bf16.xpose.msra.mxu0 0
        %2781 = vmatprep.subr.bf16.mxu0 0
        %2782 = vmatpush1.bf16.xpose.msra.mxu0 0
        %2783 = vmatprep.subr.bf16.mxu0 0
        %2784 = vmatpush1.bf16.xpose.msra.mxu0 0
        %2785 = vmatprep.subr.bf16.mxu0 0
        %2786 = vmatpush1.bf16.xpose.msra.mxu0 0
        %2787 = vmatprep.subr.bf16.mxu0 0
        %2788 = vmatpush1.bf16.xpose.msra.mxu0 0
        %2789 = vmatprep.subr.bf16.mxu0 0
        %2790 = vmatpush1.bf16.xpose.msra.mxu0 0
        %2791 = vmatprep.subr.bf16.mxu0 0
        %2792 = vmatpush1.bf16.xpose.msra.mxu0 0
        %2793 = vmatprep.subr.bf16.mxu0 0
        %2794 = vmatpush1.bf16.xpose.msra.mxu0 0
        %2795 = vmatprep.subr.bf16.mxu0 0
        %2796 = vmatpush1.bf16.xpose.msra.mxu0 0
        %2797 = vmatprep.mubr.bf16.mxu0 0
        %2798 = vmatmul.mubr.bf16.gmra.mrb[0].mxu0 %v2763
        %v2799 = vpop.f32.mrb[0].mxu0
        %v2800 = vadd.f32 0.0, %v2799
        %v2801 = vpop.f32.mrb[0].mxu0
        %v2802 = vpop.f32.mrb[0].mxu0
        %v2803 = vadd.f32 0.0, %v2802
        %v2804 = vpop.f32.mrb[0].mxu0
        %2805 = vdwg.mxu0
        %v2806 = vsel %vm2528, %v2800, -inf
        %v2807 = vsel %vm2529, %v2803, -inf
        %v2808 = vsel %vm2577, %v2806, -inf
        %2809 = vmax.xlane.f32.xlu0 %v2808
        %v2810 = vpop.xlane.xlu0 %2809
        %v2811 = vsel %vm2577, %v2807, -inf
        %2812 = vmax.xlane.f32.xlu0 %v2811
        %v2813 = vpop.xlane.xlu0 %2812
        %v2814 = vsub.f32 %v2806, %v2810
        %v2815 = vsub.f32 %v2807, %v2813
        %v2816 = vmul.f32 %v2814, 1.442695
        %v2817 = vpow.pop %v2816
        %v2818 = vmul.f32 %v2815, 1.442695
        %v2819 = vpow.pop %v2818
        %v2820 = vsel %vm2577, %v2817, 0.0
        %2821 = vadd.xlane.f32.xlu0 %v2820
        %v2822 = vpop.xlane.xlu0 %2821
        %v2823 = vsel %vm2577, %v2819, 0.0
        %2824 = vadd.xlane.f32.xlu0 %v2823
        %v2825 = vpop.xlane.xlu0 %2824
        %v2826 = vrcp.pop %v2822
        %v2827 = vrcp.pop %v2825
        %v2828 = vmul.f32 %v2817, %v2826
        %v2829 = vmul.f32 %v2819, %v2827
        %v2830 = vpack.c.bf16 %v2829, %v2828
        %v2831 = vpack.c.bf16 %v2519, %v2515
        %v2833 = vsel %vm2577, %v2830, 0
        %2835 = vmatprep.subr.bf16.mxu0 0
        %2836 = vmatpush1.bf16.msra.mxu0 %v2831
        %2837 = vmatprep.subr.bf16.mxu0 0
        %2838 = vmatpush1.bf16.msra.mxu0 0
        %2839 = vmatprep.subr.bf16.mxu0 0
        %2840 = vmatpush1.bf16.msra.mxu0 0
        %2841 = vmatprep.subr.bf16.mxu0 0
        %2842 = vmatpush1.bf16.msra.mxu0 0
        %2843 = vmatprep.subr.bf16.mxu0 0
        %2844 = vmatpush1.bf16.msra.mxu0 0
        %2845 = vmatprep.subr.bf16.mxu0 0
        %2846 = vmatpush1.bf16.msra.mxu0 0
        %2847 = vmatprep.subr.bf16.mxu0 0
        %2848 = vmatpush1.bf16.msra.mxu0 0
        %2849 = vmatprep.subr.bf16.mxu0 0
        %2850 = vmatpush1.bf16.msra.mxu0 0
        %2851 = vmatprep.subr.bf16.mxu0 0
        %2852 = vmatpush1.bf16.msra.mxu0 0
        %2853 = vmatprep.subr.bf16.mxu0 0
        %2854 = vmatpush1.bf16.msra.mxu0 0
        %2855 = vmatprep.subr.bf16.mxu0 0
        %2856 = vmatpush1.bf16.msra.mxu0 0
        %2857 = vmatprep.subr.bf16.mxu0 0
        %2858 = vmatpush1.bf16.msra.mxu0 0
        %2859 = vmatprep.subr.bf16.mxu0 0
        %2860 = vmatpush1.bf16.msra.mxu0 0
        %2861 = vmatprep.subr.bf16.mxu0 0
        %2862 = vmatpush1.bf16.msra.mxu0 0
        %2863 = vmatprep.subr.bf16.mxu0 0
        %2864 = vmatpush1.bf16.msra.mxu0 0
        %2865 = vmatprep.subr.bf16.mxu0 0
        %2866 = vmatpush1.bf16.msra.mxu0 0
        %2867 = vmatprep.mubr.bf16.mxu0 0
        %2868 = vmatmul.mubr.bf16.gmra.mrb[0].mxu0 %v2833
        %v2869 = vpop.f32.mrb[0].mxu0
        %v2870 = vadd.f32 0.0, %v2869
        %v2871 = vpop.f32.mrb[0].mxu0
        %v2872 = vpop.f32.mrb[0].mxu0
        %v2873 = vadd.f32 0.0, %v2872
        %v2874 = vpop.f32.mrb[0].mxu0
        %2875 = vdwg.mxu0
        %v2876 = vmul.f32 %v2173, 0.05103104
        %v2877 = vmul.f32 %v2177, 0.05103104
        %v2878 = vpack.c.bf16 %v2877, %v2876
        %v2879 = vpack.c.bf16 %v2349, %v2345
        %2880 = vmatprep.subr.bf16.mxu0 0
        %2881 = vmatpush1.bf16.xpose.msra.mxu0 %v2879
        %2882 = vmatprep.subr.bf16.mxu0 0
        %2883 = vmatpush1.bf16.xpose.msra.mxu0 0
        %2884 = vmatprep.subr.bf16.mxu0 0
        %2885 = vmatpush1.bf16.xpose.msra.mxu0 0
        %2886 = vmatprep.subr.bf16.mxu0 0
        %2887 = vmatpush1.bf16.xpose.msra.mxu0 0
        %2888 = vmatprep.subr.bf16.mxu0 0
        %2889 = vmatpush1.bf16.xpose.msra.mxu0 0
        %2890 = vmatprep.subr.bf16.mxu0 0
        %2891 = vmatpush1.bf16.xpose.msra.mxu0 0
        %2892 = vmatprep.subr.bf16.mxu0 0
        %2893 = vmatpush1.bf16.xpose.msra.mxu0 0
        %2894 = vmatprep.subr.bf16.mxu0 0
        %2895 = vmatpush1.bf16.xpose.msra.mxu0 0
        %2896 = vmatprep.subr.bf16.mxu0 0
        %2897 = vmatpush1.bf16.xpose.msra.mxu0 0
        %2898 = vmatprep.subr.bf16.mxu0 0
        %2899 = vmatpush1.bf16.xpose.msra.mxu0 0
        %2900 = vmatprep.subr.bf16.mxu0 0
        %2901 = vmatpush1.bf16.xpose.msra.mxu0 0
        %2902 = vmatprep.subr.bf16.mxu0 0
        %2903 = vmatpush1.bf16.xpose.msra.mxu0 0
        %2904 = vmatprep.subr.bf16.mxu0 0
        %2905 = vmatpush1.bf16.xpose.msra.mxu0 0
        %2906 = vmatprep.subr.bf16.mxu0 0
        %2907 = vmatpush1.bf16.xpose.msra.mxu0 0
        %2908 = vmatprep.subr.bf16.mxu0 0
        %2909 = vmatpush1.bf16.xpose.msra.mxu0 0
        %2910 = vmatprep.subr.bf16.mxu0 0
        %2911 = vmatpush1.bf16.xpose.msra.mxu0 0
        %2912 = vmatprep.mubr.bf16.mxu0 0
        %2913 = vmatmul.mubr.bf16.gmra.mrb[0].mxu0 %v2878
        %v2914 = vpop.f32.mrb[0].mxu0
        %v2915 = vadd.f32 0.0, %v2914
        %v2916 = vpop.f32.mrb[0].mxu0
        %v2917 = vpop.f32.mrb[0].mxu0
        %v2918 = vadd.f32 0.0, %v2917
        %v2919 = vpop.f32.mrb[0].mxu0
        %2920 = vdwg.mxu0
        %v2921 = vsel %vm2528, %v2915, -inf
        %v2922 = vsel %vm2529, %v2918, -inf
        %v2923 = vsel %vm2577, %v2921, -inf
        %2924 = vmax.xlane.f32.xlu0 %v2923
        %v2925 = vpop.xlane.xlu0 %2924
        %v2926 = vsel %vm2577, %v2922, -inf
        %2927 = vmax.xlane.f32.xlu0 %v2926
        %v2928 = vpop.xlane.xlu0 %2927
        %v2929 = vsub.f32 %v2921, %v2925
        %v2930 = vsub.f32 %v2922, %v2928
        %v2931 = vmul.f32 %v2929, 1.442695
        %v2932 = vpow.pop %v2931
        %v2933 = vmul.f32 %v2930, 1.442695
        %v2934 = vpow.pop %v2933
        %v2935 = vsel %vm2577, %v2932, 0.0
        %2936 = vadd.xlane.f32.xlu0 %v2935
        %v2937 = vpop.xlane.xlu0 %2936
        %v2938 = vsel %vm2577, %v2934, 0.0
        %2939 = vadd.xlane.f32.xlu0 %v2938
        %v2940 = vpop.xlane.xlu0 %2939
        %v2941 = vrcp.pop %v2937
        %v2942 = vrcp.pop %v2940
        %v2943 = vmul.f32 %v2932, %v2941
        %v2944 = vmul.f32 %v2934, %v2942
        %v2945 = vpack.c.bf16 %v2944, %v2943
        %v2946 = vpack.c.bf16 %v2521, %v2517
        %v2948 = vsel %vm2577, %v2945, 0
        %2950 = vmatprep.subr.bf16.mxu0 0
        %2951 = vmatpush1.bf16.msra.mxu0 %v2946
        %2952 = vmatprep.subr.bf16.mxu0 0
        %2953 = vmatpush1.bf16.msra.mxu0 0
        %2954 = vmatprep.subr.bf16.mxu0 0
        %2955 = vmatpush1.bf16.msra.mxu0 0
        %2956 = vmatprep.subr.bf16.mxu0 0
        %2957 = vmatpush1.bf16.msra.mxu0 0
        %2958 = vmatprep.subr.bf16.mxu0 0
        %2959 = vmatpush1.bf16.msra.mxu0 0
        %2960 = vmatprep.subr.bf16.mxu0 0
        %2961 = vmatpush1.bf16.msra.mxu0 0
        %2962 = vmatprep.subr.bf16.mxu0 0
        %2963 = vmatpush1.bf16.msra.mxu0 0
        %2964 = vmatprep.subr.bf16.mxu0 0
        %2965 = vmatpush1.bf16.msra.mxu0 0
        %2966 = vmatprep.subr.bf16.mxu0 0
        %2967 = vmatpush1.bf16.msra.mxu0 0
        %2968 = vmatprep.subr.bf16.mxu0 0
        %2969 = vmatpush1.bf16.msra.mxu0 0
        %2970 = vmatprep.subr.bf16.mxu0 0
        %2971 = vmatpush1.bf16.msra.mxu0 0
        %2972 = vmatprep.subr.bf16.mxu0 0
        %2973 = vmatpush1.bf16.msra.mxu0 0
        %2974 = vmatprep.subr.bf16.mxu0 0
        %2975 = vmatpush1.bf16.msra.mxu0 0
        %2976 = vmatprep.subr.bf16.mxu0 0
        %2977 = vmatpush1.bf16.msra.mxu0 0
        %2978 = vmatprep.subr.bf16.mxu0 0
        %2979 = vmatpush1.bf16.msra.mxu0 0
        %2980 = vmatprep.subr.bf16.mxu0 0
        %2981 = vmatpush1.bf16.msra.mxu0 0
        %2982 = vmatprep.mubr.bf16.mxu0 0
        %2983 = vmatmul.mubr.bf16.gmra.mrb[0].mxu0 %v2948
        %v2984 = vpop.f32.mrb[0].mxu0
        %v2985 = vadd.f32 0.0, %v2984
        %v2986 = vpop.f32.mrb[0].mxu0
        %v2987 = vpop.f32.mrb[0].mxu0
        %v2988 = vadd.f32 0.0, %v2987
        %v2989 = vpop.f32.mrb[0].mxu0
        %2990 = vdwg.mxu0
        %v2991 = vpack.c.bf16 %v2643, %v2640
        %v2992 = vpack.c.bf16 %v2758, %v2755
        %v2993 = vpack.c.bf16 %v2873, %v2870
        %v2994 = vpack.c.bf16 %v2988, %v2985
        %v2995 = vld [vmem:[#allocation7] sm:$0xff]
        %v2996 = vld [vmem:[#allocation7 + $0x8] sm:$0xf]
        %v2997 = vld [vmem:[#allocation7 + $0xc] sm:$0xff]
        %v2998 = vld [vmem:[#allocation7 + $0x14] sm:$0xf]
        %v2999 = vld [vmem:[#allocation7 + $0x18] sm:$0xff]
        %v3000 = vld [vmem:[#allocation7 + $0x20] sm:$0xf]
        %v3001 = vld [vmem:[#allocation7 + $0x24] sm:$0xff]
        %v3002 = vld [vmem:[#allocation7 + $0x2c] sm:$0xf]
        %v3003 = vld [vmem:[#allocation7 + $0x30] sm:$0xff]
        %v3004 = vld [vmem:[#allocation7 + $0x38] sm:$0xf]
        %v3005 = vld [vmem:[#allocation7 + $0x3c] sm:$0xff]
        %v3006 = vld [vmem:[#allocation7 + $0x44] sm:$0xf]
        %v3007 = vld [vmem:[#allocation7 + $0x48] sm:$0xff]
        %v3008 = vld [vmem:[#allocation7 + $0x50] sm:$0xf]
        %v3009 = vld [vmem:[#allocation7 + $0x54] sm:$0xff]
        %v3010 = vld [vmem:[#allocation7 + $0x5c] sm:$0xf]
        %v3011 = vld [vmem:[#allocation7 + $0x60] sm:$0xff]
        %v3012 = vld [vmem:[#allocation7 + $0x68] sm:$0xf]
        %v3013 = vld [vmem:[#allocation7 + $0x6c] sm:$0xff]
        %v3014 = vld [vmem:[#allocation7 + $0x74] sm:$0xf]
        %v3015 = vld [vmem:[#allocation7 + $0x78] sm:$0xff]
        %v3016 = vld [vmem:[#allocation7 + $0x80] sm:$0xf]
        %v3017 = vld [vmem:[#allocation7 + $0x84] sm:$0xff]
        %v3018 = vld [vmem:[#allocation7 + $0x8c] sm:$0xf]
        %v3019 = vld [vmem:[#allocation7 + $0x90] sm:$0xff]
        %v3020 = vld [vmem:[#allocation7 + $0x98] sm:$0xf]
        %v3021 = vld [vmem:[#allocation7 + $0x9c] sm:$0xff]
        %v3022 = vld [vmem:[#allocation7 + $0xa4] sm:$0xf]
        %v3023 = vld [vmem:[#allocation7 + $0xa8] sm:$0xff]
        %v3024 = vld [vmem:[#allocation7 + $0xb0] sm:$0xf]
        %v3025 = vld [vmem:[#allocation7 + $0xb4] sm:$0xff]
        %v3026 = vld [vmem:[#allocation7 + $0xbc] sm:$0xf]
        %v3027 = vld [vmem:[#allocation7 + $0xc0] sm:$0xff]
        %v3028 = vld [vmem:[#allocation7 + $0xc8] sm:$0xf]
        %v3029 = vld [vmem:[#allocation7 + $0xcc] sm:$0xff]
        %v3030 = vld [vmem:[#allocation7 + $0xd4] sm:$0xf]
        %v3031 = vld [vmem:[#allocation7 + $0xd8] sm:$0xff]
        %v3032 = vld [vmem:[#allocation7 + $0xe0] sm:$0xf]
        %v3033 = vld [vmem:[#allocation7 + $0xe4] sm:$0xff]
        %v3034 = vld [vmem:[#allocation7 + $0xec] sm:$0xf]
        %v3035 = vld [vmem:[#allocation7 + $0xf0] sm:$0xff]
        %v3036 = vld [vmem:[#allocation7 + $0xf8] sm:$0xf]
        %v3037 = vld [vmem:[#allocation7 + $0xfc] sm:$0xff]
        %v3038 = vld [vmem:[#allocation7 + $0x104] sm:$0xf]
        %v3039 = vld [vmem:[#allocation7 + $0x108] sm:$0xff]
        %v3040 = vld [vmem:[#allocation7 + $0x110] sm:$0xf]
        %v3041 = vld [vmem:[#allocation7 + $0x114] sm:$0xff]
        %v3042 = vld [vmem:[#allocation7 + $0x11c] sm:$0xf]
        %v3043 = vld [vmem:[#allocation7 + $0x120] sm:$0xff]
        %v3044 = vld [vmem:[#allocation7 + $0x128] sm:$0xf]
        %v3045 = vld [vmem:[#allocation7 + $0x12c] sm:$0xff]
        %v3046 = vld [vmem:[#allocation7 + $0x134] sm:$0xf]
        %v3047 = vld [vmem:[#allocation7 + $0x138] sm:$0xff]
        %v3048 = vld [vmem:[#allocation7 + $0x140] sm:$0xf]
        %v3049 = vld [vmem:[#allocation7 + $0x144] sm:$0xff]
        %v3050 = vld [vmem:[#allocation7 + $0x14c] sm:$0xf]
        %v3051 = vld [vmem:[#allocation7 + $0x150] sm:$0xff]
        %v3052 = vld [vmem:[#allocation7 + $0x158] sm:$0xf]
        %v3053 = vld [vmem:[#allocation7 + $0x15c] sm:$0xff]
        %v3054 = vld [vmem:[#allocation7 + $0x164] sm:$0xf]
        %v3055 = vld [vmem:[#allocation7 + $0x168] sm:$0xff]
        %v3056 = vld [vmem:[#allocation7 + $0x170] sm:$0xf]
        %v3057 = vld [vmem:[#allocation7 + $0x174] sm:$0xff]
        %v3058 = vld [vmem:[#allocation7 + $0x17c] sm:$0xf]
        %v3059 = vld [vmem:[#allocation7 + $0x180] sm:$0xff]
        %v3060 = vld [vmem:[#allocation7 + $0x188] sm:$0xf]
        %v3061 = vld [vmem:[#allocation7 + $0x18c] sm:$0xff]
        %v3062 = vld [vmem:[#allocation7 + $0x194] sm:$0xf]
        %v3063 = vld [vmem:[#allocation7 + $0x198] sm:$0xff]
        %v3064 = vld [vmem:[#allocation7 + $0x1a0] sm:$0xf]
        %v3065 = vld [vmem:[#allocation7 + $0x1a4] sm:$0xff]
        %v3066 = vld [vmem:[#allocation7 + $0x1ac] sm:$0xf]
        %v3067 = vld [vmem:[#allocation7 + $0x1b0] sm:$0xff]
        %v3068 = vld [vmem:[#allocation7 + $0x1b8] sm:$0xf]
        %v3069 = vld [vmem:[#allocation7 + $0x1bc] sm:$0xff]
        %v3070 = vld [vmem:[#allocation7 + $0x1c4] sm:$0xf]
        %v3071 = vld [vmem:[#allocation7 + $0x1c8] sm:$0xff]
        %v3072 = vld [vmem:[#allocation7 + $0x1d0] sm:$0xf]
        %v3073 = vld [vmem:[#allocation7 + $0x1d4] sm:$0xff]
        %v3074 = vld [vmem:[#allocation7 + $0x1dc] sm:$0xf]
        %v3075 = vld [vmem:[#allocation7 + $0x1e0] sm:$0xff]
        %v3076 = vld [vmem:[#allocation7 + $0x1e8] sm:$0xf]
        %v3077 = vld [vmem:[#allocation7 + $0x1ec] sm:$0xff]
        %v3078 = vld [vmem:[#allocation7 + $0x1f4] sm:$0xf]
        %v3079 = vld [vmem:[#allocation7 + $0x1f8] sm:$0xff]
        %v3080 = vld [vmem:[#allocation7 + $0x200] sm:$0xf]
        %v3081 = vld [vmem:[#allocation7 + $0x204] sm:$0xff]
        %v3082 = vld [vmem:[#allocation7 + $0x20c] sm:$0xf]
        %v3083 = vld [vmem:[#allocation7 + $0x210] sm:$0xff]
        %v3084 = vld [vmem:[#allocation7 + $0x218] sm:$0xf]
        %v3085 = vld [vmem:[#allocation7 + $0x21c] sm:$0xff]
        %v3086 = vld [vmem:[#allocation7 + $0x224] sm:$0xf]
        %v3087 = vld [vmem:[#allocation7 + $0x228] sm:$0xff]
        %v3088 = vld [vmem:[#allocation7 + $0x230] sm:$0xf]
        %v3089 = vld [vmem:[#allocation7 + $0x234] sm:$0xff]
        %v3090 = vld [vmem:[#allocation7 + $0x23c] sm:$0xf]
        %v3091 = vld [vmem:[#allocation7 + $0x240] sm:$0xff]
        %v3092 = vld [vmem:[#allocation7 + $0x248] sm:$0xf]
        %v3093 = vld [vmem:[#allocation7 + $0x24c] sm:$0xff]
        %v3094 = vld [vmem:[#allocation7 + $0x254] sm:$0xf]
        %v3095 = vld [vmem:[#allocation7 + $0x258] sm:$0xff]
        %v3096 = vld [vmem:[#allocation7 + $0x260] sm:$0xf]
        %v3097 = vld [vmem:[#allocation7 + $0x264] sm:$0xff]
        %v3098 = vld [vmem:[#allocation7 + $0x26c] sm:$0xf]
        %v3099 = vld [vmem:[#allocation7 + $0x270] sm:$0xff]
        %v3100 = vld [vmem:[#allocation7 + $0x278] sm:$0xf]
        %v3101 = vld [vmem:[#allocation7 + $0x27c] sm:$0xff]
        %v3102 = vld [vmem:[#allocation7 + $0x284] sm:$0xf]
        %v3103 = vld [vmem:[#allocation7 + $0x288] sm:$0xff]
        %v3104 = vld [vmem:[#allocation7 + $0x290] sm:$0xf]
        %v3105 = vld [vmem:[#allocation7 + $0x294] sm:$0xff]
        %v3106 = vld [vmem:[#allocation7 + $0x29c] sm:$0xf]
        %v3107 = vld [vmem:[#allocation7 + $0x2a0] sm:$0xff]
        %v3108 = vld [vmem:[#allocation7 + $0x2a8] sm:$0xf]
        %v3109 = vld [vmem:[#allocation7 + $0x2ac] sm:$0xff]
        %v3110 = vld [vmem:[#allocation7 + $0x2b4] sm:$0xf]
        %v3111 = vld [vmem:[#allocation7 + $0x2b8] sm:$0xff]
        %v3112 = vld [vmem:[#allocation7 + $0x2c0] sm:$0xf]
        %v3113 = vld [vmem:[#allocation7 + $0x2c4] sm:$0xff]
        %v3114 = vld [vmem:[#allocation7 + $0x2cc] sm:$0xf]
        %v3115 = vld [vmem:[#allocation7 + $0x2d0] sm:$0xff]
        %v3116 = vld [vmem:[#allocation7 + $0x2d8] sm:$0xf]
        %v3117 = vld [vmem:[#allocation7 + $0x2dc] sm:$0xff]
        %v3118 = vld [vmem:[#allocation7 + $0x2e4] sm:$0xf]
        %v3119 = vld [vmem:[#allocation7 + $0x2e8] sm:$0xff]
        %v3120 = vld [vmem:[#allocation7 + $0x2f0] sm:$0xf]
        %v3121 = vld [vmem:[#allocation7 + $0x2f4] sm:$0xff]
        %v3122 = vld [vmem:[#allocation7 + $0x2fc] sm:$0xf]
        %v3123 = vld [vmem:[#allocation8] sm:$0x7]
        %v3125 = vlaneseq
        %v3126 = vshrl.u32 %v3125, 7
        %v3127 = vsub.s32 0, %v3126
        %v3128 = vrot.slane %v3123, %v3127
        %v3129 = vlaneseq
        %v3130 = vshrl.u32 %v3129, 7
        %v3131 = vsub.s32 1, %v3130
        %v3132 = vrot.slane %v3123, %v3131
        %v3133 = vlaneseq
        %v3134 = vshrl.u32 %v3133, 7
        %v3135 = vsub.s32 2, %v3134
        %v3136 = vrot.slane %v3123, %v3135
        %v3268 = vunpack.c.l.b16 %v2995
        %v3269 = vunpack.c.h.b16 %v2995
        %v3270 = vunpack.c.l.b16 %v2996
        %v3271 = vunpack.c.l.b16 %v2997
        %v3272 = vunpack.c.h.b16 %v2997
        %v3273 = vunpack.c.l.b16 %v2998
        %v3274 = vunpack.c.l.b16 %v2999
        %v3275 = vunpack.c.h.b16 %v2999
        %v3276 = vunpack.c.l.b16 %v3000
        %v3277 = vunpack.c.l.b16 %v3001
        %v3278 = vunpack.c.h.b16 %v3001
        %v3279 = vunpack.c.l.b16 %v3002
        %v3280 = vunpack.c.l.b16 %v3003
        %v3281 = vunpack.c.h.b16 %v3003
        %v3282 = vunpack.c.l.b16 %v3004
        %v3283 = vunpack.c.l.b16 %v3005
        %v3284 = vunpack.c.h.b16 %v3005
        %v3285 = vunpack.c.l.b16 %v3006
        %v3286 = vunpack.c.l.b16 %v3007
        %v3287 = vunpack.c.h.b16 %v3007
        %v3288 = vunpack.c.l.b16 %v3008
        %v3289 = vunpack.c.l.b16 %v3009
        %v3290 = vunpack.c.h.b16 %v3009
        %v3291 = vunpack.c.l.b16 %v3010
        %v3292 = vunpack.c.l.b16 %v3011
        %v3293 = vunpack.c.h.b16 %v3011
        %v3294 = vunpack.c.l.b16 %v3012
        %v3295 = vunpack.c.l.b16 %v3013
        %v3296 = vunpack.c.h.b16 %v3013
        %v3297 = vunpack.c.l.b16 %v3014
        %v3298 = vunpack.c.l.b16 %v3015
        %v3299 = vunpack.c.h.b16 %v3015
        %v3300 = vunpack.c.l.b16 %v3016
        %v3301 = vunpack.c.l.b16 %v3017
        %v3302 = vunpack.c.h.b16 %v3017
        %v3303 = vunpack.c.l.b16 %v3018
        %v3304 = vunpack.c.l.b16 %v3019
        %v3305 = vunpack.c.h.b16 %v3019
        %v3306 = vunpack.c.l.b16 %v3020
        %v3307 = vunpack.c.l.b16 %v3021
        %v3308 = vunpack.c.h.b16 %v3021
        %v3309 = vunpack.c.l.b16 %v3022
        %v3310 = vunpack.c.l.b16 %v3023
        %v3311 = vunpack.c.h.b16 %v3023
        %v3312 = vunpack.c.l.b16 %v3024
        %v3313 = vunpack.c.l.b16 %v3025
        %v3314 = vunpack.c.h.b16 %v3025
        %v3315 = vunpack.c.l.b16 %v3026
        %v3316 = vunpack.c.l.b16 %v3027
        %v3317 = vunpack.c.h.b16 %v3027
        %v3318 = vunpack.c.l.b16 %v3028
        %v3319 = vunpack.c.l.b16 %v3029
        %v3320 = vunpack.c.h.b16 %v3029
        %v3321 = vunpack.c.l.b16 %v3030
        %v3322 = vunpack.c.l.b16 %v3031
        %v3323 = vunpack.c.h.b16 %v3031
        %v3324 = vunpack.c.l.b16 %v3032
        %v3325 = vunpack.c.l.b16 %v3033
        %v3326 = vunpack.c.h.b16 %v3033
        %v3327 = vunpack.c.l.b16 %v3034
        %v3328 = vunpack.c.l.b16 %v3035
        %v3329 = vunpack.c.h.b16 %v3035
        %v3330 = vunpack.c.l.b16 %v3036
        %v3331 = vunpack.c.l.b16 %v3037
        %v3332 = vunpack.c.h.b16 %v3037
        %v3333 = vunpack.c.l.b16 %v3038
        %v3334 = vunpack.c.l.b16 %v3039
        %v3335 = vunpack.c.h.b16 %v3039
        %v3336 = vunpack.c.l.b16 %v3040
        %v3337 = vunpack.c.l.b16 %v3041
        %v3338 = vunpack.c.h.b16 %v3041
        %v3339 = vunpack.c.l.b16 %v3042
        %v3340 = vunpack.c.l.b16 %v3043
        %v3341 = vunpack.c.h.b16 %v3043
        %v3342 = vunpack.c.l.b16 %v3044
        %v3343 = vunpack.c.l.b16 %v3045
        %v3344 = vunpack.c.h.b16 %v3045
        %v3345 = vunpack.c.l.b16 %v3046
        %v3346 = vunpack.c.l.b16 %v3047
        %v3347 = vunpack.c.h.b16 %v3047
        %v3348 = vunpack.c.l.b16 %v3048
        %v3349 = vunpack.c.l.b16 %v3049
        %v3350 = vunpack.c.h.b16 %v3049
        %v3351 = vunpack.c.l.b16 %v3050
        %v3352 = vunpack.c.l.b16 %v3051
        %v3353 = vunpack.c.h.b16 %v3051
        %v3354 = vunpack.c.l.b16 %v3052
        %v3355 = vunpack.c.l.b16 %v3053
        %v3356 = vunpack.c.h.b16 %v3053
        %v3357 = vunpack.c.l.b16 %v3054
        %v3358 = vunpack.c.l.b16 %v3055
        %v3359 = vunpack.c.h.b16 %v3055
        %v3360 = vunpack.c.l.b16 %v3056
        %v3361 = vunpack.c.l.b16 %v3057
        %v3362 = vunpack.c.h.b16 %v3057
        %v3363 = vunpack.c.l.b16 %v3058
        %v3364 = vunpack.c.l.b16 %v3059
        %v3365 = vunpack.c.h.b16 %v3059
        %v3366 = vunpack.c.l.b16 %v3060
        %v3367 = vunpack.c.l.b16 %v3061
        %v3368 = vunpack.c.h.b16 %v3061
        %v3369 = vunpack.c.l.b16 %v3062
        %v3370 = vunpack.c.l.b16 %v3063
        %v3371 = vunpack.c.h.b16 %v3063
        %v3372 = vunpack.c.l.b16 %v3064
        %v3373 = vunpack.c.l.b16 %v3065
        %v3374 = vunpack.c.h.b16 %v3065
        %v3375 = vunpack.c.l.b16 %v3066
        %v3376 = vunpack.c.l.b16 %v3067
        %v3377 = vunpack.c.h.b16 %v3067
        %v3378 = vunpack.c.l.b16 %v3068
        %v3379 = vunpack.c.l.b16 %v3069
        %v3380 = vunpack.c.h.b16 %v3069
        %v3381 = vunpack.c.l.b16 %v3070
        %v3382 = vunpack.c.l.b16 %v3071
        %v3383 = vunpack.c.h.b16 %v3071
        %v3384 = vunpack.c.l.b16 %v3072
        %v3385 = vunpack.c.l.b16 %v3073
        %v3386 = vunpack.c.h.b16 %v3073
        %v3387 = vunpack.c.l.b16 %v3074
        %v3388 = vunpack.c.l.b16 %v3075
        %v3389 = vunpack.c.h.b16 %v3075
        %v3390 = vunpack.c.l.b16 %v3076
        %v3391 = vunpack.c.l.b16 %v3077
        %v3392 = vunpack.c.h.b16 %v3077
        %v3393 = vunpack.c.l.b16 %v3078
        %v3394 = vunpack.c.l.b16 %v3079
        %v3395 = vunpack.c.h.b16 %v3079
        %v3396 = vunpack.c.l.b16 %v3080
        %v3397 = vunpack.c.l.b16 %v3081
        %v3398 = vunpack.c.h.b16 %v3081
        %v3399 = vunpack.c.l.b16 %v3082
        %v3400 = vunpack.c.l.b16 %v3083
        %v3401 = vunpack.c.h.b16 %v3083
        %v3402 = vunpack.c.l.b16 %v3084
        %v3403 = vunpack.c.l.b16 %v3085
        %v3404 = vunpack.c.h.b16 %v3085
        %v3405 = vunpack.c.l.b16 %v3086
        %v3406 = vunpack.c.l.b16 %v3087
        %v3407 = vunpack.c.h.b16 %v3087
        %v3408 = vunpack.c.l.b16 %v3088
        %v3409 = vunpack.c.l.b16 %v3089
        %v3410 = vunpack.c.h.b16 %v3089
        %v3411 = vunpack.c.l.b16 %v3090
        %v3412 = vunpack.c.l.b16 %v3091
        %v3413 = vunpack.c.h.b16 %v3091
        %v3414 = vunpack.c.l.b16 %v3092
        %v3415 = vunpack.c.l.b16 %v3093
        %v3416 = vunpack.c.h.b16 %v3093
        %v3417 = vunpack.c.l.b16 %v3094
        %v3418 = vunpack.c.l.b16 %v3095
        %v3419 = vunpack.c.h.b16 %v3095
        %v3420 = vunpack.c.l.b16 %v3096
        %v3421 = vunpack.c.l.b16 %v3097
        %v3422 = vunpack.c.h.b16 %v3097
        %v3423 = vunpack.c.l.b16 %v3098
        %v3424 = vunpack.c.l.b16 %v3099
        %v3425 = vunpack.c.h.b16 %v3099
        %v3426 = vunpack.c.l.b16 %v3100
        %v3427 = vunpack.c.l.b16 %v3101
        %v3428 = vunpack.c.h.b16 %v3101
        %v3429 = vunpack.c.l.b16 %v3102
        %v3430 = vunpack.c.l.b16 %v3103
        %v3431 = vunpack.c.h.b16 %v3103
        %v3432 = vunpack.c.l.b16 %v3104
        %v3433 = vunpack.c.l.b16 %v3105
        %v3434 = vunpack.c.h.b16 %v3105
        %v3435 = vunpack.c.l.b16 %v3106
        %v3436 = vunpack.c.l.b16 %v3107
        %v3437 = vunpack.c.h.b16 %v3107
        %v3438 = vunpack.c.l.b16 %v3108
        %v3439 = vunpack.c.l.b16 %v3109
        %v3440 = vunpack.c.h.b16 %v3109
        %v3441 = vunpack.c.l.b16 %v3110
        %v3442 = vunpack.c.l.b16 %v3111
        %v3443 = vunpack.c.h.b16 %v3111
        %v3444 = vunpack.c.l.b16 %v3112
        %v3445 = vunpack.c.l.b16 %v3113
        %v3446 = vunpack.c.h.b16 %v3113
        %v3447 = vunpack.c.l.b16 %v3114
        %v3448 = vunpack.c.l.b16 %v3115
        %v3449 = vunpack.c.h.b16 %v3115
        %v3450 = vunpack.c.l.b16 %v3116
        %v3451 = vunpack.c.l.b16 %v3117
        %v3452 = vunpack.c.h.b16 %v3117
        %v3453 = vunpack.c.l.b16 %v3118
        %v3454 = vunpack.c.l.b16 %v3119
        %v3455 = vunpack.c.h.b16 %v3119
        %v3456 = vunpack.c.l.b16 %v3120
        %v3457 = vunpack.c.l.b16 %v3121
        %v3458 = vunpack.c.h.b16 %v3121
        %v3459 = vunpack.c.l.b16 %v3122
        %v3460 = vpack.c.b16 %v3271, %v3268
        %v3461 = vpack.c.b16 %v3272, %v3269
        %v3462 = vpack.c.b16 %v3273, %v3270
        %v3463 = vpack.c.b16 %v3277, %v3274
        %v3464 = vpack.c.b16 %v3278, %v3275
        %v3465 = vpack.c.b16 %v3279, %v3276
        %v3466 = vpack.c.b16 %v3283, %v3280
        %v3467 = vpack.c.b16 %v3284, %v3281
        %v3468 = vpack.c.b16 %v3285, %v3282
        %v3469 = vpack.c.b16 %v3289, %v3286
        %v3470 = vpack.c.b16 %v3290, %v3287
        %v3471 = vpack.c.b16 %v3291, %v3288
        %v3472 = vpack.c.b16 %v3295, %v3292
        %v3473 = vpack.c.b16 %v3296, %v3293
        %v3474 = vpack.c.b16 %v3297, %v3294
        %v3475 = vpack.c.b16 %v3301, %v3298
        %v3476 = vpack.c.b16 %v3302, %v3299
        %v3477 = vpack.c.b16 %v3303, %v3300
        %v3478 = vpack.c.b16 %v3307, %v3304
        %v3479 = vpack.c.b16 %v3308, %v3305
        %v3480 = vpack.c.b16 %v3309, %v3306
        %v3481 = vpack.c.b16 %v3313, %v3310
        %v3482 = vpack.c.b16 %v3314, %v3311
        %v3483 = vpack.c.b16 %v3315, %v3312
        %v3484 = vpack.c.b16 %v3319, %v3316
        %v3485 = vpack.c.b16 %v3320, %v3317
        %v3486 = vpack.c.b16 %v3321, %v3318
        %v3487 = vpack.c.b16 %v3325, %v3322
        %v3488 = vpack.c.b16 %v3326, %v3323
        %v3489 = vpack.c.b16 %v3327, %v3324
        %v3490 = vpack.c.b16 %v3331, %v3328
        %v3491 = vpack.c.b16 %v3332, %v3329
        %v3492 = vpack.c.b16 %v3333, %v3330
        %v3493 = vpack.c.b16 %v3337, %v3334
        %v3494 = vpack.c.b16 %v3338, %v3335
        %v3495 = vpack.c.b16 %v3339, %v3336
        %v3496 = vpack.c.b16 %v3343, %v3340
        %v3497 = vpack.c.b16 %v3344, %v3341
        %v3498 = vpack.c.b16 %v3345, %v3342
        %v3499 = vpack.c.b16 %v3349, %v3346
        %v3500 = vpack.c.b16 %v3350, %v3347
        %v3501 = vpack.c.b16 %v3351, %v3348
        %v3502 = vpack.c.b16 %v3355, %v3352
        %v3503 = vpack.c.b16 %v3356, %v3353
        %v3504 = vpack.c.b16 %v3357, %v3354
        %v3505 = vpack.c.b16 %v3361, %v3358
        %v3506 = vpack.c.b16 %v3362, %v3359
        %v3507 = vpack.c.b16 %v3363, %v3360
        %v3508 = vpack.c.b16 %v3367, %v3364
        %v3509 = vpack.c.b16 %v3368, %v3365
        %v3510 = vpack.c.b16 %v3369, %v3366
        %v3511 = vpack.c.b16 %v3373, %v3370
        %v3512 = vpack.c.b16 %v3374, %v3371
        %v3513 = vpack.c.b16 %v3375, %v3372
        %v3514 = vpack.c.b16 %v3379, %v3376
        %v3515 = vpack.c.b16 %v3380, %v3377
        %v3516 = vpack.c.b16 %v3381, %v3378
        %v3517 = vpack.c.b16 %v3385, %v3382
        %v3518 = vpack.c.b16 %v3386, %v3383
        %v3519 = vpack.c.b16 %v3387, %v3384
        %v3520 = vpack.c.b16 %v3391, %v3388
        %v3521 = vpack.c.b16 %v3392, %v3389
        %v3522 = vpack.c.b16 %v3393, %v3390
        %v3523 = vpack.c.b16 %v3397, %v3394
        %v3524 = vpack.c.b16 %v3398, %v3395
        %v3525 = vpack.c.b16 %v3399, %v3396
        %v3526 = vpack.c.b16 %v3403, %v3400
        %v3527 = vpack.c.b16 %v3404, %v3401
        %v3528 = vpack.c.b16 %v3405, %v3402
        %v3529 = vpack.c.b16 %v3409, %v3406
        %v3530 = vpack.c.b16 %v3410, %v3407
        %v3531 = vpack.c.b16 %v3411, %v3408
        %v3532 = vpack.c.b16 %v3415, %v3412
        %v3533 = vpack.c.b16 %v3416, %v3413
        %v3534 = vpack.c.b16 %v3417, %v3414
        %v3535 = vpack.c.b16 %v3421, %v3418
        %v3536 = vpack.c.b16 %v3422, %v3419
        %v3537 = vpack.c.b16 %v3423, %v3420
        %v3538 = vpack.c.b16 %v3427, %v3424
        %v3539 = vpack.c.b16 %v3428, %v3425
        %v3540 = vpack.c.b16 %v3429, %v3426
        %v3541 = vpack.c.b16 %v3433, %v3430
        %v3542 = vpack.c.b16 %v3434, %v3431
        %v3543 = vpack.c.b16 %v3435, %v3432
        %v3544 = vpack.c.b16 %v3439, %v3436
        %v3545 = vpack.c.b16 %v3440, %v3437
        %v3546 = vpack.c.b16 %v3441, %v3438
        %v3547 = vpack.c.b16 %v3445, %v3442
        %v3548 = vpack.c.b16 %v3446, %v3443
        %v3549 = vpack.c.b16 %v3447, %v3444
        %v3550 = vpack.c.b16 %v3451, %v3448
        %v3551 = vpack.c.b16 %v3452, %v3449
        %v3552 = vpack.c.b16 %v3453, %v3450
        %v3553 = vpack.c.b16 %v3457, %v3454
        %v3554 = vpack.c.b16 %v3458, %v3455
        %v3555 = vpack.c.b16 %v3459, %v3456
        %3652 = vmatprep.subr.bf16.mxu0 %v3461
        %3653 = vmatpush1.bf16.msra.mxu0 %v3460
        %3654 = vmatprep.subr.bf16.mxu0 %v3464
        %3655 = vmatpush1.bf16.msra.mxu0 %v3463
        %3656 = vmatprep.subr.bf16.mxu0 %v3467
        %3657 = vmatpush1.bf16.msra.mxu0 %v3466
        %3658 = vmatprep.subr.bf16.mxu0 %v3470
        %3659 = vmatpush1.bf16.msra.mxu0 %v3469
        %3660 = vmatprep.subr.bf16.mxu0 %v3473
        %3661 = vmatpush1.bf16.msra.mxu0 %v3472
        %3662 = vmatprep.subr.bf16.mxu0 %v3476
        %3663 = vmatpush1.bf16.msra.mxu0 %v3475
        %3664 = vmatprep.subr.bf16.mxu0 %v3479
        %3665 = vmatpush1.bf16.msra.mxu0 %v3478
        %3666 = vmatprep.subr.bf16.mxu0 %v3482
        %3667 = vmatpush1.bf16.msra.mxu0 %v3481
        %3668 = vmatprep.subr.bf16.mxu0 %v3485
        %3669 = vmatpush1.bf16.msra.mxu0 %v3484
        %3670 = vmatprep.subr.bf16.mxu0 %v3488
        %3671 = vmatpush1.bf16.msra.mxu0 %v3487
        %3672 = vmatprep.subr.bf16.mxu0 %v3491
        %3673 = vmatpush1.bf16.msra.mxu0 %v3490
        %3674 = vmatprep.subr.bf16.mxu0 %v3494
        %3675 = vmatpush1.bf16.msra.mxu0 %v3493
        %3676 = vmatprep.subr.bf16.mxu0 %v3497
        %3677 = vmatpush1.bf16.msra.mxu0 %v3496
        %3678 = vmatprep.subr.bf16.mxu0 %v3500
        %3679 = vmatpush1.bf16.msra.mxu0 %v3499
        %3680 = vmatprep.subr.bf16.mxu0 %v3503
        %3681 = vmatpush1.bf16.msra.mxu0 %v3502
        %3682 = vmatprep.subr.bf16.mxu0 %v3506
        %3683 = vmatpush1.bf16.msra.mxu0 %v3505
        %3684 = vmatprep.mubr.bf16.mxu0 %v2992
        %3685 = vmatmul.mubr.bf16.gmra.mrb[0].mxu0 %v2991
        %v3686 = vpop.f32.mrb[0].mxu0
        %v3687 = vadd.f32 %v3128, %v3686
        %v3688 = vpop.f32.mrb[0].mxu0
        %v3689 = vadd.f32 %v3132, %v3688
        %v3690 = vpop.f32.mrb[0].mxu0
        %v3691 = vadd.f32 %v3128, %v3690
        %v3692 = vpop.f32.mrb[0].mxu0
        %v3693 = vadd.f32 %v3132, %v3692
        %3694 = vdwg.mxu0
        %3695 = vmatprep.subr.bf16.mxu0 %v3509
        %3696 = vmatpush1.bf16.msra.mxu0 %v3508
        %3697 = vmatprep.subr.bf16.mxu0 %v3512
        %3698 = vmatpush1.bf16.msra.mxu0 %v3511
        %3699 = vmatprep.subr.bf16.mxu0 %v3515
        %3700 = vmatpush1.bf16.msra.mxu0 %v3514
        %3701 = vmatprep.subr.bf16.mxu0 %v3518
        %3702 = vmatpush1.bf16.msra.mxu0 %v3517
        %3703 = vmatprep.subr.bf16.mxu0 %v3521
        %3704 = vmatpush1.bf16.msra.mxu0 %v3520
        %3705 = vmatprep.subr.bf16.mxu0 %v3524
        %3706 = vmatpush1.bf16.msra.mxu0 %v3523
        %3707 = vmatprep.subr.bf16.mxu0 %v3527
        %3708 = vmatpush1.bf16.msra.mxu0 %v3526
        %3709 = vmatprep.subr.bf16.mxu0 %v3530
        %3710 = vmatpush1.bf16.msra.mxu0 %v3529
        %3711 = vmatprep.subr.bf16.mxu0 %v3533
        %3712 = vmatpush1.bf16.msra.mxu0 %v3532
        %3713 = vmatprep.subr.bf16.mxu0 %v3536
        %3714 = vmatpush1.bf16.msra.mxu0 %v3535
        %3715 = vmatprep.subr.bf16.mxu0 %v3539
        %3716 = vmatpush1.bf16.msra.mxu0 %v3538
        %3717 = vmatprep.subr.bf16.mxu0 %v3542
        %3718 = vmatpush1.bf16.msra.mxu0 %v3541
        %3719 = vmatprep.subr.bf16.mxu0 %v3545
        %3720 = vmatpush1.bf16.msra.mxu0 %v3544
        %3721 = vmatprep.subr.bf16.mxu0 %v3548
        %3722 = vmatpush1.bf16.msra.mxu0 %v3547
        %3723 = vmatprep.subr.bf16.mxu0 %v3551
        %3724 = vmatpush1.bf16.msra.mxu0 %v3550
        %3725 = vmatprep.subr.bf16.mxu0 %v3554
        %3726 = vmatpush1.bf16.msra.mxu0 %v3553
        %3727 = vmatprep.mubr.bf16.mxu0 %v2994
        %3728 = vmatmul.mubr.bf16.gmra.mrb[0].mxu0 %v2993
        %v3729 = vpop.f32.mrb[0].mxu0
        %v3730 = vadd.f32 %v3687, %v3729
        %v3731 = vpop.f32.mrb[0].mxu0
        %v3732 = vadd.f32 %v3689, %v3731
        %v3733 = vpop.f32.mrb[0].mxu0
        %v3734 = vadd.f32 %v3691, %v3733
        %v3735 = vpop.f32.mrb[0].mxu0
        %v3736 = vadd.f32 %v3693, %v3735
        %3737 = vdwg.mxu0
        %3738 = vmatprep.subr.bf16.mxu0 0
        %3739 = vmatpush1.bf16.msra.mxu0 %v3462
        %3740 = vmatprep.subr.bf16.mxu0 0
        %3741 = vmatpush1.bf16.msra.mxu0 %v3465
        %3742 = vmatprep.subr.bf16.mxu0 0
        %3743 = vmatpush1.bf16.msra.mxu0 %v3468
        %3744 = vmatprep.subr.bf16.mxu0 0
        %3745 = vmatpush1.bf16.msra.mxu0 %v3471
        %3746 = vmatprep.subr.bf16.mxu0 0
        %3747 = vmatpush1.bf16.msra.mxu0 %v3474
        %3748 = vmatprep.subr.bf16.mxu0 0
        %3749 = vmatpush1.bf16.msra.mxu0 %v3477
        %3750 = vmatprep.subr.bf16.mxu0 0
        %3751 = vmatpush1.bf16.msra.mxu0 %v3480
        %3752 = vmatprep.subr.bf16.mxu0 0
        %3753 = vmatpush1.bf16.msra.mxu0 %v3483
        %3754 = vmatprep.subr.bf16.mxu0 0
        %3755 = vmatpush1.bf16.msra.mxu0 %v3486
        %3756 = vmatprep.subr.bf16.mxu0 0
        %3757 = vmatpush1.bf16.msra.mxu0 %v3489
        %3758 = vmatprep.subr.bf16.mxu0 0
        %3759 = vmatpush1.bf16.msra.mxu0 %v3492
        %3760 = vmatprep.subr.bf16.mxu0 0
        %3761 = vmatpush1.bf16.msra.mxu0 %v3495
        %3762 = vmatprep.subr.bf16.mxu0 0
        %3763 = vmatpush1.bf16.msra.mxu0 %v3498
        %3764 = vmatprep.subr.bf16.mxu0 0
        %3765 = vmatpush1.bf16.msra.mxu0 %v3501
        %3766 = vmatprep.subr.bf16.mxu0 0
        %3767 = vmatpush1.bf16.msra.mxu0 %v3504
        %3768 = vmatprep.subr.bf16.mxu0 0
        %3769 = vmatpush1.bf16.msra.mxu0 %v3507
        %3770 = vmatprep.mubr.bf16.mxu0 %v2992
        %3771 = vmatmul.mubr.bf16.gmra.mrb[0].mxu0 %v2991
        %v3772 = vpop.f32.mrb[0].mxu0
        %v3773 = vadd.f32 %v3136, %v3772
        %v3774 = vpop.f32.mrb[0].mxu0
        %v3775 = vpop.f32.mrb[0].mxu0
        %v3776 = vadd.f32 %v3136, %v3775
        %v3777 = vpop.f32.mrb[0].mxu0
        %3778 = vdwg.mxu0
        %3779 = vmatprep.subr.bf16.mxu0 0
        %3780 = vmatpush1.bf16.msra.mxu0 %v3510
        %3781 = vmatprep.subr.bf16.mxu0 0
        %3782 = vmatpush1.bf16.msra.mxu0 %v3513
        %3783 = vmatprep.subr.bf16.mxu0 0
        %3784 = vmatpush1.bf16.msra.mxu0 %v3516
        %3785 = vmatprep.subr.bf16.mxu0 0
        %3786 = vmatpush1.bf16.msra.mxu0 %v3519
        %3787 = vmatprep.subr.bf16.mxu0 0
        %3788 = vmatpush1.bf16.msra.mxu0 %v3522
        %3789 = vmatprep.subr.bf16.mxu0 0
        %3790 = vmatpush1.bf16.msra.mxu0 %v3525
        %3791 = vmatprep.subr.bf16.mxu0 0
        %3792 = vmatpush1.bf16.msra.mxu0 %v3528
        %3793 = vmatprep.subr.bf16.mxu0 0
        %3794 = vmatpush1.bf16.msra.mxu0 %v3531
        %3795 = vmatprep.subr.bf16.mxu0 0
        %3796 = vmatpush1.bf16.msra.mxu0 %v3534
        %3797 = vmatprep.subr.bf16.mxu0 0
        %3798 = vmatpush1.bf16.msra.mxu0 %v3537
        %3799 = vmatprep.subr.bf16.mxu0 0
        %3800 = vmatpush1.bf16.msra.mxu0 %v3540
        %3801 = vmatprep.subr.bf16.mxu0 0
        %3802 = vmatpush1.bf16.msra.mxu0 %v3543
        %3803 = vmatprep.subr.bf16.mxu0 0
        %3804 = vmatpush1.bf16.msra.mxu0 %v3546
        %3805 = vmatprep.subr.bf16.mxu0 0
        %3806 = vmatpush1.bf16.msra.mxu0 %v3549
        %3807 = vmatprep.subr.bf16.mxu0 0
        %3808 = vmatpush1.bf16.msra.mxu0 %v3552
        %3809 = vmatprep.subr.bf16.mxu0 0
        %3810 = vmatpush1.bf16.msra.mxu0 %v3555
        %3811 = vmatprep.mubr.bf16.mxu0 %v2994
        %3812 = vmatmul.mubr.bf16.gmra.mrb[0].mxu0 %v2993
        %v3813 = vpop.f32.mrb[0].mxu0
        %v3814 = vadd.f32 %v3773, %v3813
        %v3815 = vpop.f32.mrb[0].mxu0
        %v3816 = vpop.f32.mrb[0].mxu0
        %v3817 = vadd.f32 %v3776, %v3816
        %v3818 = vpop.f32.mrb[0].mxu0
        %3819 = vdwg.mxu0
        %3820 = vst [vmem:[%s257] sm:$0xff] %v3730
        %3821 = vst [vmem:[%s257 + $0x8] sm:$0xff] %v3732
        %3822 = vst [vmem:[%s257 + $0x10] sm:$0xff] %v3814
        %3823 = vst [vmem:[%s257 + $0x18] sm:$0xff] %v3734
        %3824 = vst [vmem:[%s257 + $0x20] sm:$0xff] %v3736
        %3825 = vst [vmem:[%s257 + $0x28] sm:$0xff] %v3817
        %s3826 = sand.u32 %s120, 1
        %s3827 = scalar_lea.sflag [#allocation4], %s3826
        %s3828 = sand.u32 %s120, 1
        %s3829 = smul.addr %s3828, 48
        %s3830 = scalar_lea.vmem [#allocation10], %s3829
        // Predicated region
        $region53: #{tpu_custom_call.1} parent=35 // pred_check
          %p3831 = pneg %p130
        $region54: #{tpu_custom_call.1} parent=35 // pred_check_branch
          %3833 = sbr.rel (%p3831) target = $region56
        $region55: #{tpu_custom_call.1} parent=35 // pred_region
          %s3835 = ssub.s32 768, 768
          %3836 = vsyncadd %s3827, %s3835
          %s3837 = smul.addr %s23, 6
          %s3838 = smul.addr %s3837, 128
          %s3839 = scalar_lea.hbm %s4, %s3838
          %s3840 = sshll.u32 %s3830, 4
          %s3841 = int_to_ptr.vmem [resolvable:$true] %s3840
          %3846 = dma.vmem_to_hbm [thread:$0]  %s3841, 768, %s3839, %s3827, 384, 384, 24
        $region56: #{tpu_custom_call.1} parent=35 // pred_fallthru
          _
      $region36: #{tpu_custom_call.1} parent=5 // pred_fallthru
        _
      %p3847 = scmp.le.s32.totalorder 2, %s18
      // Predicated region
      $region57: #{tpu_custom_call.1} parent=5 // pred_check
        %p3848 = pneg %p3847
      $region58: #{tpu_custom_call.1} parent=5 // pred_check_branch
        %3850 = sbr.rel (%p3848) target = $region60
      $region59: #{tpu_custom_call.1} parent=5 // pred_region
        %s3851 = ssub.s32 %s18, 2
        // Predicated region
        $region61: #{tpu_custom_call.1} parent=59 // pred_check
          %p3852 = pneg %p136
        $region62: #{tpu_custom_call.1} parent=59 // pred_check_branch
          %3854 = sbr.rel (%p3852) target = $region64
        $region63: #{tpu_custom_call.1} parent=59 // pred_region
          %s3855 = sand.u32 %s121, 1
          %s3856 = scalar_lea.sflag [#allocation4], %s3855
          %s3857 = sand.u32 %s121, 1
          %s3858 = smul.addr %s3857, 48
          %s3859 = scalar_lea.vmem [#allocation10], %s3858
          %3860 = dma.done %s3856, 768
        $region64: #{tpu_custom_call.1} parent=59 // pred_fallthru
          _
      $region60: #{tpu_custom_call.1} parent=5 // pred_fallthru
        _
    $region6: #{tpu_custom_call.1} parent=1 // loop_footer
      %s22 = sadd.s32 1, %s18
    $region7: #{tpu_custom_call.1} parent=1 // loop_footer_branch
      %17 = sbr.rel target = $region3
    $region8: #{tpu_custom_call.1} parent=1 // loop_exit
      _
    %3861 = vsyncpa [#allocation3], 1
    %s3862 = scalar_lea.sflag [#allocation3], 1
    %3863 = vsyncpa %s3862, 1
    %3864 = vsyncpa [#allocation6], 1
    %3865 = vsyncpa [#allocation9], 1
    %3866 = vsyncpa [#allocation4], 1
    %s3867 = scalar_lea.sflag [#allocation4], 1
    %3868 = vsyncpa %s3867, 1

</llo_original>
